<compile_context>
chip_gen: v5e
topology: v5e:2x2
jax: 0.10.0
libtpu: 0.0.40
codegen_flags: <defaults>
</compile_context>

<pallas_src>
import functools

import jax
import jax.numpy as jnp
from jax import lax
from jax.experimental import pallas as pl
from jax.experimental.pallas import tpu as pltpu


_TP_TARGET = 4096                 # target lanes per spatial tile (large images)
_MIN_PALLAS_LANES = 128           # below this the Pallas tile is mostly padding
_VMEM_LIMIT = 48 * 1024 * 1024    # safe on v5e/v6e (128 MiB) and v7x (64 MiB)


def _round_up(x, m):
    return (x + m - 1) // m * m


# ----------------------------- Pallas kernel ------------------------------ #

def _stereo_conv3x3_kernel(x_ref, w_ref, s_ref, b_ref, o_ref, *, wp, relu):
    """Fused stereo group conv (3x3, both group elements) + BN affine + ReLU.

    One MXU matmul per grid step: the 9 conv taps are lane-shifted slices of a
    flattened, zero-padded activation slab, concatenated along the channel
    (sublane) axis into a (9*Cin, Tp) patch matrix; the weight slab stacks both
    group elements row-wise, so a single (2*Cout, 9*Cin) x (9*Cin, Tp) product
    yields both group outputs.  No scratch accumulator: BN affine + ReLU run on
    the f32 matmul value and one lane-dense store writes the output block.

    x_ref: (1, Cin, wtile)   bf16  flattened padded activation tile (+halo)
    w_ref: (2*Cout, 9*Cin)   bf16  [group0 rows; group1 rows], col = tap*Cin + c
    s_ref: (2*Cout, 1)       f32   fused BN scale
    b_ref: (2*Cout, 1)       f32   fused BN shift (absorbs conv bias)
    o_ref: (1, 2*Cout, Tp)         output block, group-major channel order
    """
    tp = o_ref.shape[-1]
    offs = [dy * wp + dx for dy in range(3) for dx in range(3)]
    patches = jnp.concatenate([x_ref[0, :, o:o + tp] for o in offs], axis=0)
    y = jnp.dot(w_ref[...], patches, preferred_element_type=jnp.float32)
    y = y * s_ref[...] + b_ref[...]
    if relu:
        y = jnp.maximum(y, 0.0)
    o_ref[0] = y.astype(o_ref.dtype)


def _stereo_conv3x3(xcat, w_group, scale, shift, *, relu=True,
                    out_dtype=jnp.bfloat16):
    """Stereo group conv block on a shared, group-concatenated input.

    xcat:    (B, Cin, H, W)        shared input [view0 channels | view1 channels]
    w_group: (2, Cout, Cin, 3, 3)  per-group-element conv weights
    scale, shift: (Cout,)          fused BN affine
    returns  (2, B, Cout, H, W)
    """
    B, Cin, H, W = xcat.shape
    Cout = w_group.shape[1]
    Hp, Wp = H + 2, W + 2
    l_out = H * Wp                     # "wide" output length (junk cols cropped)
    cin_p = _round_up(Cin, 8)          # sublane-aligned tap concat in-kernel

    if l_out <= _TP_TARGET:            # single spatial tile per image
        tp, T = _round_up(l_out, 128), 1
    else:
        tp, T = _TP_TARGET, -(-l_out // _TP_TARGET)
    halo = 2 * Wp + 2                  # largest tap offset
    wtile = _round_up(tp + halo, 128)  # lane-aligned input block
    l_in = (T - 1) * tp + wtile

    # Zero-pad spatially (+channel pad), flatten H,W into one lane axis,
    # pad the tail so every tile has its halo.
    # TODO(synk): this pad/flatten/crop glue re-touches activations in XLA
    # outside the kernel; emitting outputs directly in the padded "wide"
    # layout the next conv consumes would remove it.
    xp = jnp.pad(xcat.astype(jnp.bfloat16),
                 ((0, 0), (0, cin_p - Cin), (1, 1), (1, 1)))
    flat = xp.reshape(B, cin_p, Hp * Wp)
    flat = jnp.pad(flat, ((0, 0), (0, 0), (0, l_in - Hp * Wp)))
    if T == 1:
        tiles = flat.reshape(B, 1, cin_p, wtile)
    else:
        # TODO(synk): overlapping halo tiles are materialized in HBM here;
        # a manual-DMA halo fetch (memory_space=pl.ANY) would avoid it.
        tiles = jnp.stack(
            [flat[:, :, t * tp:t * tp + wtile] for t in range(T)], axis=1)
    tiles = tiles.reshape(B * T, cin_p, wtile)

    # Weight slab: (2, Cout, Cin, 3, 3) -> (2*Cout, 9*cin_p),
    # row = g*Cout + o, col = (dy*3 + dx)*cin_p + c (matches the patch concat).
    wg = jnp.pad(w_group, ((0, 0), (0, 0), (0, cin_p - Cin), (0, 0), (0, 0)))
    w2 = wg.transpose(0, 1, 3, 4, 2).reshape(2 * Cout, 9 * cin_p)
    w2 = w2.astype(jnp.bfloat16)
    s2 = jnp.concatenate([scale, scale]).reshape(2 * Cout, 1).astype(jnp.float32)
    b2 = jnp.concatenate([shift, shift]).reshape(2 * Cout, 1).astype(jnp.float32)

    kernel = functools.partial(_stereo_conv3x3_kernel, wp=Wp, relu=relu)
    out = pl.pallas_call(
        kernel,
        out_shape=jax.ShapeDtypeStruct((B, 2 * Cout, T * tp), out_dtype),
        grid_spec=pltpu.PrefetchScalarGridSpec(
            num_scalar_prefetch=0,
            grid=(B, T),
            in_specs=[
                pl.BlockSpec((1, cin_p, wtile), lambda b, t: (b * T + t, 0, 0)),
                pl.BlockSpec((2 * Cout, 9 * cin_p), lambda b, t: (0, 0)),
                pl.BlockSpec((2 * Cout, 1), lambda b, t: (0, 0)),
                pl.BlockSpec((2 * Cout, 1), lambda b, t: (0, 0)),
            ],
            out_specs=pl.BlockSpec((1, 2 * Cout, tp), lambda b, t: (b, 0, t)),
        ),
        compiler_params=pltpu.CompilerParams(
            dimension_semantics=("parallel", "parallel"),
            vmem_limit_bytes=_VMEM_LIMIT),
    )(tiles, w2, s2, b2)

    # Crop the wide/junk columns and tail padding; split group-major channels.
    out = out[..., :l_out].reshape(B, 2, Cout, H, Wp)[..., :W]
    return jnp.transpose(out, (1, 0, 2, 3, 4))


def _stereo_conv_ref(xcat, w_group, scale, shift, relu):
    """jnp fallback for coarse U-Net levels (Pallas tile would be >90% padding)."""
    x32 = xcat.astype(jnp.float32)
    s = scale.reshape(1, -1, 1, 1).astype(jnp.float32)
    b = shift.reshape(1, -1, 1, 1).astype(jnp.float32)
    outs = []
    for g in range(2):
        y = lax.conv_general_dilated(
            x32, w_group[g].astype(jnp.float32), window_strides=(1, 1),
            padding="SAME", dimension_numbers=("NCHW", "OIHW", "NCHW"))
        y = y * s + b
        if relu:
            y = jnp.maximum(y, 0.0)
        outs.append(y.astype(jnp.bfloat16))
    return jnp.stack(outs, axis=0)


def _stereo_gconv(xcat, w_group, scale, shift, *, relu=True):
    H, W = xcat.shape[-2:]
    if H * (W + 2) < _MIN_PALLAS_LANES:
        return _stereo_conv_ref(xcat, w_group, scale, shift, relu)
    return _stereo_conv3x3(xcat, w_group, scale, shift, relu=relu)


# ------------------------------- JAX glue ---------------------------------- #

def _bn_affine(gamma, beta, conv_bias, eps=1e-5):
    # Eval-mode BN (running_mean=0, running_var=1) with the conv bias folded in.
    s = gamma / jnp.sqrt(1.0 + eps)
    return s, beta + s * conv_bias


def lifting_block(a, params):
    """StereoZ2ConvG(3x3, pad 1) + StereoGBatchNorm2d + ReLU.

    View g uses only its own channels; view 1 sees the horizontally mirrored
    filter.  Expressed as a shared-input group conv with zero weight blocks so
    the same fused kernel is reused (zero-column MXU waste at C0=3 is noise;
    both input halves of the slab are genuinely consumed, one per group).
    """
    w, bias, gamma, beta = params                 # w: (C0, C0, 3, 3)
    z = jnp.zeros_like(w)
    w0 = jnp.concatenate([w, z], axis=1)                      # acts on view 0
    w1 = jnp.concatenate([z, w[:, :, :, ::-1]], axis=1)       # mirrored, view 1
    w_group = jnp.stack([w0, w1], axis=0)
    scale, shift = _bn_affine(gamma, beta, bias)
    xcat = jnp.concatenate([a[0], a[1]], axis=1)
    return _stereo_gconv(xcat, w_group, scale, shift, relu=True)


def gconv_block(a, params, *, relu=True):
    """Stereo group conv (regular rep, |G|=2, 3x3) + GBatchNorm + ReLU."""
    wA, wB, bias, gamma, beta = params            # wA/wB: (Cout, Cin, 3, 3)
    w0 = jnp.concatenate([wA, wB], axis=1)
    w1 = jnp.concatenate([wB, wA], axis=1)[:, :, :, ::-1]     # swap blocks + mirror
    w_group = jnp.stack([w0, w1], axis=0)
    scale, shift = _bn_affine(gamma, beta, bias)
    xcat = jnp.concatenate([a[0], a[1]], axis=1)
    return _stereo_gconv(xcat, w_group, scale, shift, relu=relu)


def stereo_maxpool(a):
    """StereoGMaxPool2d: 2x2 max pool per view (cheap VPU op, kept in JAX)."""
    G, B, C, H, W = a.shape
    return a.reshape(G, B, C, H // 2, 2, W // 2, 2).max(axis=(4, 6))


def stereo_upsample(a):
    """StereoGUpsample2d: 2x nearest-neighbor upsample per view."""
    return jnp.repeat(jnp.repeat(a, 2, axis=3), 2, axis=4)


def final_head(a, params):
    """StereoGConvBlock(c1 -> 1, 1x1) + BN + ReLU + StereoGAveragePool(mean).

    With Cout=1 the MXU/store path would be ~1/128 utilized, so this is a plain
    VPU einsum + mean in JAX rather than a Pallas matmul.
    """
    wA, wB, bias, gamma, beta = params            # wA/wB: (1, C1, 1, 1)
    a32 = a.astype(jnp.float32)
    w0 = jnp.concatenate([wA, wB], axis=1)[:, :, 0, 0]        # (1, 2*C1)
    w1 = jnp.concatenate([wB, wA], axis=1)[:, :, 0, 0]        # 1x1 mirror == id
    xcat = jnp.concatenate([a32[0], a32[1]], axis=1)          # (B, 2*C1, H, W)
    y0 = jnp.einsum('oc,bchw->bohw', w0, xcat)
    y1 = jnp.einsum('oc,bchw->bohw', w1, xcat)
    scale, shift = _bn_affine(gamma, beta, bias)
    y = jnp.stack([y0, y1], axis=0)
    y = y * scale.reshape(1, 1, -1, 1, 1) + shift.reshape(1, 1, -1, 1, 1)
    y = jnp.maximum(y, 0.0)
    return jnp.mean(y, axis=0)                                # (B, 1, H, W)


# ------------------------------ parameters --------------------------------- #

def _init_lifting(key, k, cin, cout):
    k1, k2 = jax.random.split(key)
    std = 1.0 / float(k * k * cin) ** 0.5
    w = jax.random.normal(k1, (cout, cin, k, k), jnp.float32) * std
    bias = jax.random.normal(k2, (cout,), jnp.float32) * 0.01
    return w, bias, jnp.ones((cout,), jnp.float32), jnp.zeros((cout,), jnp.float32)


def _init_gconv(key, kh, kw, cin, cout):
    k1, k2, k3 = jax.random.split(key, 3)
    std = 1.0 / float(kh * kw * 2 * cin) ** 0.5
    wA = jax.random.normal(k1, (cout, cin, kh, kw), jnp.float32) * std
    wB = jax.random.normal(k2, (cout, cin, kh, kw), jnp.float32) * std
    bias = jax.random.normal(k3, (cout,), jnp.float32) * 0.01
    return (wA, wB, bias,
            jnp.ones((cout,), jnp.float32), jnp.zeros((cout,), jnp.float32))


def init_params(key, num_features=(3, 4, 8, 16, 32, 64)):
    c0, c1, c2, c3, c4, c5 = num_features
    keys = jax.random.split(key, 11)
    return {
        "lift": _init_lifting(keys[0], 3, c0, c0),
        "c11":  _init_gconv(keys[1], 3, 3, c0, c1),
        "c12":  _init_gconv(keys[2], 3, 3, c1, c2),
        "c13":  _init_gconv(keys[3], 3, 3, c2, c3),
        "c14":  _init_gconv(keys[4], 3, 3, c3, c4),
        "c15":  _init_gconv(keys[5], 3, 3, c4, c5),
        "c21":  _init_gconv(keys[6], 3, 3, c4 + c5, c4),
        "c22":  _init_gconv(keys[7], 3, 3, c3 + c4, c3),
        "c23":  _init_gconv(keys[8], 3, 3, c2 + c3, c2),
        "c24a": _init_gconv(keys[9], 3, 3, c1 + c2, c1),
        "c24b": _init_gconv(keys[10], 1, 1, c1, 1),
    }


# -------------------------------- forward ----------------------------------- #

def gunet_forward(x, params):
    """x: (B, 2, C0, H, W) stereo pair (PyTorch layout).  Returns (B, 1, H, W)."""
    a = jnp.transpose(x, (1, 0, 2, 3, 4)).astype(jnp.bfloat16)   # (G, B, C, H, W)
    a = lifting_block(a, params["lift"])
    out1 = gconv_block(a, params["c11"])
    out2 = gconv_block(stereo_maxpool(out1), params["c12"])
    out3 = gconv_block(stereo_maxpool(out2), params["c13"])
    out4 = gconv_block(stereo_maxpool(out3), params["c14"])
    out5 = gconv_block(stereo_maxpool(out4), params["c15"])
    out6 = gconv_block(jnp.concatenate([out4, stereo_upsample(out5)], axis=2),
                       params["c21"])
    out7 = gconv_block(jnp.concatenate([out3, stereo_upsample(out6)], axis=2),
                       params["c22"])
    out8 = gconv_block(jnp.concatenate([out2, stereo_upsample(out7)], axis=2),
                       params["c23"])
    t = gconv_block(jnp.concatenate([out1, stereo_upsample(out8)], axis=2),
                    params["c24a"])
    return final_head(t, params["c24b"])


if __name__ == "__main__":
    key = jax.random.PRNGKey(0)
    kx, kp = jax.random.split(key)
    B, H, W = 2, 32, 32
    x = jax.random.normal(kx, (B, 2, 3, H, W), jnp.float32)
    params = init_params(kp)

    fwd = jax.jit(gunet_forward)
    out = jax.block_until_ready(fwd(x, params))
    assert out.shape == (B, 1, H, W), out.shape
    assert bool(jnp.all(jnp.isfinite(out)))
    print("KERNEL_OK")
</pallas_src>

<mosaic_0001>
module attributes {stable_mosaic.version = 11 : i64} {
  func.func @_stereo_conv3x3_kernel(%arg0: i32, %arg1: i32, %arg2: memref<1x8x1280xbf16, #tpu.memory_space<vmem>>, %arg3: memref<6x72xbf16, #tpu.memory_space<vmem>>, %arg4: memref<6x1xf32, #tpu.memory_space<vmem>>, %arg5: memref<6x1xf32, #tpu.memory_space<vmem>>, %arg6: memref<1x6x1152xbf16, #tpu.memory_space<vmem>>) attributes {dimension_semantics = [#tpu.dimension_semantics<parallel>, #tpu.dimension_semantics<parallel>], iteration_bounds = array<i64: 2, 1>, scalar_prefetch = 0 : i64, scratch_operands = 0 : i64, tpu.core_type = #tpu.core_type<tc>, window_params = [{transform_indices = @transform_0, window_bounds = array<i64: 1, 8, 1280>}, {pipeline_mode = #tpu.pipeline_mode<synchronous>, transform_indices = @transform_1, window_bounds = array<i64: 6, 72>}, {pipeline_mode = #tpu.pipeline_mode<synchronous>, transform_indices = @transform_2, window_bounds = array<i64: 6, 1>}, {pipeline_mode = #tpu.pipeline_mode<synchronous>, transform_indices = @transform_3, window_bounds = array<i64: 6, 1>}, {transform_indices = @transform_4, window_bounds = array<i64: 1, 6, 1152>}]} {
    %c0 = arith.constant 0 : index
    %c0_0 = arith.constant 0 : index
    %c0_1 = arith.constant 0 : index
    %0 = vector.load %arg2[%c0, %c0_0, %c0_1] : memref<1x8x1280xbf16, #tpu.memory_space<vmem>>, vector<1x8x1152xbf16>
    %1 = vector.shape_cast %0 : vector<1x8x1152xbf16> to vector<8x1152xbf16>
    %c0_2 = arith.constant 0 : index
    %c0_3 = arith.constant 0 : index
    %c1 = arith.constant 1 : index
    %2 = vector.load %arg2[%c0_2, %c0_3, %c1] : memref<1x8x1280xbf16, #tpu.memory_space<vmem>>, vector<1x8x1152xbf16>
    %3 = vector.shape_cast %2 : vector<1x8x1152xbf16> to vector<8x1152xbf16>
    %c0_4 = arith.constant 0 : index
    %c0_5 = arith.constant 0 : index
    %c2 = arith.constant 2 : index
    %4 = vector.load %arg2[%c0_4, %c0_5, %c2] : memref<1x8x1280xbf16, #tpu.memory_space<vmem>>, vector<1x8x1152xbf16>
    %5 = vector.shape_cast %4 : vector<1x8x1152xbf16> to vector<8x1152xbf16>
    %c0_6 = arith.constant 0 : index
    %c0_7 = arith.constant 0 : index
    %c34 = arith.constant 34 : index
    %6 = vector.load %arg2[%c0_6, %c0_7, %c34] : memref<1x8x1280xbf16, #tpu.memory_space<vmem>>, vector<1x8x1152xbf16>
    %7 = vector.shape_cast %6 : vector<1x8x1152xbf16> to vector<8x1152xbf16>
    %c0_8 = arith.constant 0 : index
    %c0_9 = arith.constant 0 : index
    %c35 = arith.constant 35 : index
    %8 = vector.load %arg2[%c0_8, %c0_9, %c35] : memref<1x8x1280xbf16, #tpu.memory_space<vmem>>, vector<1x8x1152xbf16>
    %9 = vector.shape_cast %8 : vector<1x8x1152xbf16> to vector<8x1152xbf16>
    %c0_10 = arith.constant 0 : index
    %c0_11 = arith.constant 0 : index
    %c36 = arith.constant 36 : index
    %10 = vector.load %arg2[%c0_10, %c0_11, %c36] : memref<1x8x1280xbf16, #tpu.memory_space<vmem>>, vector<1x8x1152xbf16>
    %11 = vector.shape_cast %10 : vector<1x8x1152xbf16> to vector<8x1152xbf16>
    %c0_12 = arith.constant 0 : index
    %c0_13 = arith.constant 0 : index
    %c68 = arith.constant 68 : index
    %12 = vector.load %arg2[%c0_12, %c0_13, %c68] : memref<1x8x1280xbf16, #tpu.memory_space<vmem>>, vector<1x8x1152xbf16>
    %13 = vector.shape_cast %12 : vector<1x8x1152xbf16> to vector<8x1152xbf16>
    %c0_14 = arith.constant 0 : index
    %c0_15 = arith.constant 0 : index
    %c69 = arith.constant 69 : index
    %14 = vector.load %arg2[%c0_14, %c0_15, %c69] : memref<1x8x1280xbf16, #tpu.memory_space<vmem>>, vector<1x8x1152xbf16>
    %15 = vector.shape_cast %14 : vector<1x8x1152xbf16> to vector<8x1152xbf16>
    %c0_16 = arith.constant 0 : index
    %c0_17 = arith.constant 0 : index
    %c70 = arith.constant 70 : index
    %16 = vector.load %arg2[%c0_16, %c0_17, %c70] : memref<1x8x1280xbf16, #tpu.memory_space<vmem>>, vector<1x8x1152xbf16>
    %17 = vector.shape_cast %16 : vector<1x8x1152xbf16> to vector<8x1152xbf16>
    %18 = tpu.concatenate %1, %3, %5, %7, %9, %11, %13, %15, %17 in 0 : vector<8x1152xbf16>, vector<8x1152xbf16>, vector<8x1152xbf16>, vector<8x1152xbf16>, vector<8x1152xbf16>, vector<8x1152xbf16>, vector<8x1152xbf16>, vector<8x1152xbf16>, vector<8x1152xbf16> -> vector<72x1152xbf16>
    %c0_18 = arith.constant 0 : index
    %c0_19 = arith.constant 0 : index
    %19 = vector.load %arg3[%c0_18, %c0_19] : memref<6x72xbf16, #tpu.memory_space<vmem>>, vector<6x72xbf16>
    %cst = arith.constant dense<0.000000e+00> : vector<6x1152xf32>
    %20 = tpu.matmul %19, %18, %cst {dimension_numbers = #tpu.dot_dimension_numbers<[1], [0], [0], [1], [0, 0, 1, 1], [], []>} : vector<6x72xbf16>, vector<72x1152xbf16>, vector<6x1152xf32> -> vector<6x1152xf32>
    %c0_20 = arith.constant 0 : index
    %c0_21 = arith.constant 0 : index
    %21 = vector.load %arg4[%c0_20, %c0_21] : memref<6x1xf32, #tpu.memory_space<vmem>>, vector<6x1xf32>
    %22 = vector.broadcast %21 : vector<6x1xf32> to vector<6x1152xf32>
    %23 = arith.mulf %20, %22 : vector<6x1152xf32>
    %c0_22 = arith.constant 0 : index
    %c0_23 = arith.constant 0 : index
    %24 = vector.load %arg5[%c0_22, %c0_23] : memref<6x1xf32, #tpu.memory_space<vmem>>, vector<6x1xf32>
    %25 = vector.broadcast %24 : vector<6x1xf32> to vector<6x1152xf32>
    %26 = arith.addf %23, %25 : vector<6x1152xf32>
    %cst_24 = arith.constant 0.000000e+00 : f32
    %27 = vector.broadcast %cst_24 : f32 to vector<6x1152xf32>
    %28 = arith.maximumf %26, %27 : vector<6x1152xf32>
    %29 = arith.truncf %28 : vector<6x1152xf32> to vector<6x1152xbf16>
    %c0_25 = arith.constant 0 : index
    %c0_26 = arith.constant 0 : index
    %c0_27 = arith.constant 0 : index
    %30 = vector.load %arg6[%c0_25, %c0_26, %c0_27] : memref<1x6x1152xbf16, #tpu.memory_space<vmem>>, vector<1x6x1152xbf16>
    %31 = vector.shape_cast %30 : vector<1x6x1152xbf16> to vector<6x1152xbf16>
    %32 = vector.shape_cast %29 : vector<6x1152xbf16> to vector<1x6x1152xbf16>
    tpu.vector_store %arg6[%c0_25, %c0_26, %c0_27], %32 {strides = array<i32>} : memref<1x6x1152xbf16, #tpu.memory_space<vmem>>, vector<1x6x1152xbf16>,
    return
  }
  func.func @transform_0(%arg0: i32, %arg1: i32) -> (i32, i32, i32) {
    %c1_i32 = arith.constant 1 : i32
    %0 = arith.muli %arg0, %c1_i32 : i32
    %1 = arith.addi %0, %arg1 : i32
    %c0_i32 = arith.constant 0 : i32
    %c0_i32_0 = arith.constant 0 : i32
    %c0_i32_1 = arith.constant 0 : i32
    return %1, %c0_i32, %c0_i32_0 : i32, i32, i32
  }
  func.func @transform_1(%arg0: i32, %arg1: i32) -> (i32, i32) {
    %c0_i32 = arith.constant 0 : i32
    %c0_i32_0 = arith.constant 0 : i32
    %c0_i32_1 = arith.constant 0 : i32
    return %c0_i32, %c0_i32_0 : i32, i32
  }
  func.func @transform_2(%arg0: i32, %arg1: i32) -> (i32, i32) {
    %c0_i32 = arith.constant 0 : i32
    %c0_i32_0 = arith.constant 0 : i32
    %c0_i32_1 = arith.constant 0 : i32
    return %c0_i32, %c0_i32_0 : i32, i32
  }
  func.func @transform_3(%arg0: i32, %arg1: i32) -> (i32, i32) {
    %c0_i32 = arith.constant 0 : i32
    %c0_i32_0 = arith.constant 0 : i32
    %c0_i32_1 = arith.constant 0 : i32
    return %c0_i32, %c0_i32_0 : i32, i32
  }
  func.func @transform_4(%arg0: i32, %arg1: i32) -> (i32, i32, i32) {
    %c0_i32 = arith.constant 0 : i32
    %c0_i32_0 = arith.constant 0 : i32
    return %arg0, %c0_i32, %arg1 : i32, i32, i32
  }
}

module attributes {stable_mosaic.version = 11 : i64} {
  func.func @_stereo_conv3x3_kernel(%arg0: i32, %arg1: i32, %arg2: memref<1x8x1280xbf16, #tpu.memory_space<vmem>>, %arg3: memref<8x72xbf16, #tpu.memory_space<vmem>>, %arg4: memref<8x1xf32, #tpu.memory_space<vmem>>, %arg5: memref<8x1xf32, #tpu.memory_space<vmem>>, %arg6: memref<1x8x1152xbf16, #tpu.memory_space<vmem>>) attributes {dimension_semantics = [#tpu.dimension_semantics<parallel>, #tpu.dimension_semantics<parallel>], iteration_bounds = array<i64: 2, 1>, scalar_prefetch = 0 : i64, scratch_operands = 0 : i64, tpu.core_type = #tpu.core_type<tc>, window_params = [{transform_indices = @transform_0, window_bounds = array<i64: 1, 8, 1280>}, {pipeline_mode = #tpu.pipeline_mode<synchronous>, transform_indices = @transform_1, window_bounds = array<i64: 8, 72>}, {pipeline_mode = #tpu.pipeline_mode<synchronous>, transform_indices = @transform_2, window_bounds = array<i64: 8, 1>}, {pipeline_mode = #tpu.pipeline_mode<synchronous>, transform_indices = @transform_3, window_bounds = array<i64: 8, 1>}, {transform_indices = @transform_4, window_bounds = array<i64: 1, 8, 1152>}]} {
    %c0 = arith.constant 0 : index
    %c0_0 = arith.constant 0 : index
    %c0_1 = arith.constant 0 : index
    %0 = vector.load %arg2[%c0, %c0_0, %c0_1] : memref<1x8x1280xbf16, #tpu.memory_space<vmem>>, vector<1x8x1152xbf16>
    %1 = vector.shape_cast %0 : vector<1x8x1152xbf16> to vector<8x1152xbf16>
    %c0_2 = arith.constant 0 : index
    %c0_3 = arith.constant 0 : index
    %c1 = arith.constant 1 : index
    %2 = vector.load %arg2[%c0_2, %c0_3, %c1] : memref<1x8x1280xbf16, #tpu.memory_space<vmem>>, vector<1x8x1152xbf16>
    %3 = vector.shape_cast %2 : vector<1x8x1152xbf16> to vector<8x1152xbf16>
    %c0_4 = arith.constant 0 : index
    %c0_5 = arith.constant 0 : index
    %c2 = arith.constant 2 : index
    %4 = vector.load %arg2[%c0_4, %c0_5, %c2] : memref<1x8x1280xbf16, #tpu.memory_space<vmem>>, vector<1x8x1152xbf16>
    %5 = vector.shape_cast %4 : vector<1x8x1152xbf16> to vector<8x1152xbf16>
    %c0_6 = arith.constant 0 : index
    %c0_7 = arith.constant 0 : index
    %c34 = arith.constant 34 : index
    %6 = vector.load %arg2[%c0_6, %c0_7, %c34] : memref<1x8x1280xbf16, #tpu.memory_space<vmem>>, vector<1x8x1152xbf16>
    %7 = vector.shape_cast %6 : vector<1x8x1152xbf16> to vector<8x1152xbf16>
    %c0_8 = arith.constant 0 : index
    %c0_9 = arith.constant 0 : index
    %c35 = arith.constant 35 : index
    %8 = vector.load %arg2[%c0_8, %c0_9, %c35] : memref<1x8x1280xbf16, #tpu.memory_space<vmem>>, vector<1x8x1152xbf16>
    %9 = vector.shape_cast %8 : vector<1x8x1152xbf16> to vector<8x1152xbf16>
    %c0_10 = arith.constant 0 : index
    %c0_11 = arith.constant 0 : index
    %c36 = arith.constant 36 : index
    %10 = vector.load %arg2[%c0_10, %c0_11, %c36] : memref<1x8x1280xbf16, #tpu.memory_space<vmem>>, vector<1x8x1152xbf16>
    %11 = vector.shape_cast %10 : vector<1x8x1152xbf16> to vector<8x1152xbf16>
    %c0_12 = arith.constant 0 : index
    %c0_13 = arith.constant 0 : index
    %c68 = arith.constant 68 : index
    %12 = vector.load %arg2[%c0_12, %c0_13, %c68] : memref<1x8x1280xbf16, #tpu.memory_space<vmem>>, vector<1x8x1152xbf16>
    %13 = vector.shape_cast %12 : vector<1x8x1152xbf16> to vector<8x1152xbf16>
    %c0_14 = arith.constant 0 : index
    %c0_15 = arith.constant 0 : index
    %c69 = arith.constant 69 : index
    %14 = vector.load %arg2[%c0_14, %c0_15, %c69] : memref<1x8x1280xbf16, #tpu.memory_space<vmem>>, vector<1x8x1152xbf16>
    %15 = vector.shape_cast %14 : vector<1x8x1152xbf16> to vector<8x1152xbf16>
    %c0_16 = arith.constant 0 : index
    %c0_17 = arith.constant 0 : index
    %c70 = arith.constant 70 : index
    %16 = vector.load %arg2[%c0_16, %c0_17, %c70] : memref<1x8x1280xbf16, #tpu.memory_space<vmem>>, vector<1x8x1152xbf16>
    %17 = vector.shape_cast %16 : vector<1x8x1152xbf16> to vector<8x1152xbf16>
    %18 = tpu.concatenate %1, %3, %5, %7, %9, %11, %13, %15, %17 in 0 : vector<8x1152xbf16>, vector<8x1152xbf16>, vector<8x1152xbf16>, vector<8x1152xbf16>, vector<8x1152xbf16>, vector<8x1152xbf16>, vector<8x1152xbf16>, vector<8x1152xbf16>, vector<8x1152xbf16> -> vector<72x1152xbf16>
    %c0_18 = arith.constant 0 : index
    %c0_19 = arith.constant 0 : index
    %19 = vector.load %arg3[%c0_18, %c0_19] : memref<8x72xbf16, #tpu.memory_space<vmem>>, vector<8x72xbf16>
    %cst = arith.constant dense<0.000000e+00> : vector<8x1152xf32>
    %20 = tpu.matmul %19, %18, %cst {dimension_numbers = #tpu.dot_dimension_numbers<[1], [0], [0], [1], [0, 0, 1, 1], [], []>} : vector<8x72xbf16>, vector<72x1152xbf16>, vector<8x1152xf32> -> vector<8x1152xf32>
    %c0_20 = arith.constant 0 : index
    %c0_21 = arith.constant 0 : index
    %21 = vector.load %arg4[%c0_20, %c0_21] : memref<8x1xf32, #tpu.memory_space<vmem>>, vector<8x1xf32>
    %22 = vector.broadcast %21 : vector<8x1xf32> to vector<8x1152xf32>
    %23 = arith.mulf %20, %22 : vector<8x1152xf32>
    %c0_22 = arith.constant 0 : index
    %c0_23 = arith.constant 0 : index
    %24 = vector.load %arg5[%c0_22, %c0_23] : memref<8x1xf32, #tpu.memory_space<vmem>>, vector<8x1xf32>
    %25 = vector.broadcast %24 : vector<8x1xf32> to vector<8x1152xf32>
    %26 = arith.addf %23, %25 : vector<8x1152xf32>
    %cst_24 = arith.constant 0.000000e+00 : f32
    %27 = vector.broadcast %cst_24 : f32 to vector<8x1152xf32>
    %28 = arith.maximumf %26, %27 : vector<8x1152xf32>
    %29 = arith.truncf %28 : vector<8x1152xf32> to vector<8x1152xbf16>
    %c0_25 = arith.constant 0 : index
    %c0_26 = arith.constant 0 : index
    %c0_27 = arith.constant 0 : index
    %30 = vector.load %arg6[%c0_25, %c0_26, %c0_27] : memref<1x8x1152xbf16, #tpu.memory_space<vmem>>, vector<1x8x1152xbf16>
    %31 = vector.shape_cast %30 : vector<1x8x1152xbf16> to vector<8x1152xbf16>
    %32 = vector.shape_cast %29 : vector<8x1152xbf16> to vector<1x8x1152xbf16>
    tpu.vector_store %arg6[%c0_25, %c0_26, %c0_27], %32 {strides = array<i32>} : memref<1x8x1152xbf16, #tpu.memory_space<vmem>>, vector<1x8x1152xbf16>,
    return
  }
  func.func @transform_0(%arg0: i32, %arg1: i32) -> (i32, i32, i32) {
    %c1_i32 = arith.constant 1 : i32
    %0 = arith.muli %arg0, %c1_i32 : i32
    %1 = arith.addi %0, %arg1 : i32
    %c0_i32 = arith.constant 0 : i32
    %c0_i32_0 = arith.constant 0 : i32
    %c0_i32_1 = arith.constant 0 : i32
    return %1, %c0_i32, %c0_i32_0 : i32, i32, i32
  }
  func.func @transform_1(%arg0: i32, %arg1: i32) -> (i32, i32) {
    %c0_i32 = arith.constant 0 : i32
    %c0_i32_0 = arith.constant 0 : i32
    %c0_i32_1 = arith.constant 0 : i32
    return %c0_i32, %c0_i32_0 : i32, i32
  }
  func.func @transform_2(%arg0: i32, %arg1: i32) -> (i32, i32) {
    %c0_i32 = arith.constant 0 : i32
    %c0_i32_0 = arith.constant 0 : i32
    %c0_i32_1 = arith.constant 0 : i32
    return %c0_i32, %c0_i32_0 : i32, i32
  }
  func.func @transform_3(%arg0: i32, %arg1: i32) -> (i32, i32) {
    %c0_i32 = arith.constant 0 : i32
    %c0_i32_0 = arith.constant 0 : i32
    %c0_i32_1 = arith.constant 0 : i32
    return %c0_i32, %c0_i32_0 : i32, i32
  }
  func.func @transform_4(%arg0: i32, %arg1: i32) -> (i32, i32, i32) {
    %c0_i32 = arith.constant 0 : i32
    %c0_i32_0 = arith.constant 0 : i32
    return %arg0, %c0_i32, %arg1 : i32, i32, i32
  }
}

module attributes {stable_mosaic.version = 11 : i64} {
  func.func @_stereo_conv3x3_kernel(%arg0: i32, %arg1: i32, %arg2: memref<1x8x512xbf16, #tpu.memory_space<vmem>>, %arg3: memref<16x72xbf16, #tpu.memory_space<vmem>>, %arg4: memref<16x1xf32, #tpu.memory_space<vmem>>, %arg5: memref<16x1xf32, #tpu.memory_space<vmem>>, %arg6: memref<1x16x384xbf16, #tpu.memory_space<vmem>>) attributes {dimension_semantics = [#tpu.dimension_semantics<parallel>, #tpu.dimension_semantics<parallel>], iteration_bounds = array<i64: 2, 1>, scalar_prefetch = 0 : i64, scratch_operands = 0 : i64, tpu.core_type = #tpu.core_type<tc>, window_params = [{transform_indices = @transform_0, window_bounds = array<i64: 1, 8, 512>}, {pipeline_mode = #tpu.pipeline_mode<synchronous>, transform_indices = @transform_1, window_bounds = array<i64: 16, 72>}, {pipeline_mode = #tpu.pipeline_mode<synchronous>, transform_indices = @transform_2, window_bounds = array<i64: 16, 1>}, {pipeline_mode = #tpu.pipeline_mode<synchronous>, transform_indices = @transform_3, window_bounds = array<i64: 16, 1>}, {transform_indices = @transform_4, window_bounds = array<i64: 1, 16, 384>}]} {
    %c0 = arith.constant 0 : index
    %c0_0 = arith.constant 0 : index
    %c0_1 = arith.constant 0 : index
    %0 = vector.load %arg2[%c0, %c0_0, %c0_1] : memref<1x8x512xbf16, #tpu.memory_space<vmem>>, vector<1x8x384xbf16>
    %1 = vector.shape_cast %0 : vector<1x8x384xbf16> to vector<8x384xbf16>
    %c0_2 = arith.constant 0 : index
    %c0_3 = arith.constant 0 : index
    %c1 = arith.constant 1 : index
    %2 = vector.load %arg2[%c0_2, %c0_3, %c1] : memref<1x8x512xbf16, #tpu.memory_space<vmem>>, vector<1x8x384xbf16>
    %3 = vector.shape_cast %2 : vector<1x8x384xbf16> to vector<8x384xbf16>
    %c0_4 = arith.constant 0 : index
    %c0_5 = arith.constant 0 : index
    %c2 = arith.constant 2 : index
    %4 = vector.load %arg2[%c0_4, %c0_5, %c2] : memref<1x8x512xbf16, #tpu.memory_space<vmem>>, vector<1x8x384xbf16>
    %5 = vector.shape_cast %4 : vector<1x8x384xbf16> to vector<8x384xbf16>
    %c0_6 = arith.constant 0 : index
    %c0_7 = arith.constant 0 : index
    %c18 = arith.constant 18 : index
    %6 = vector.load %arg2[%c0_6, %c0_7, %c18] : memref<1x8x512xbf16, #tpu.memory_space<vmem>>, vector<1x8x384xbf16>
    %7 = vector.shape_cast %6 : vector<1x8x384xbf16> to vector<8x384xbf16>
    %c0_8 = arith.constant 0 : index
    %c0_9 = arith.constant 0 : index
    %c19 = arith.constant 19 : index
    %8 = vector.load %arg2[%c0_8, %c0_9, %c19] : memref<1x8x512xbf16, #tpu.memory_space<vmem>>, vector<1x8x384xbf16>
    %9 = vector.shape_cast %8 : vector<1x8x384xbf16> to vector<8x384xbf16>
    %c0_10 = arith.constant 0 : index
    %c0_11 = arith.constant 0 : index
    %c20 = arith.constant 20 : index
    %10 = vector.load %arg2[%c0_10, %c0_11, %c20] : memref<1x8x512xbf16, #tpu.memory_space<vmem>>, vector<1x8x384xbf16>
    %11 = vector.shape_cast %10 : vector<1x8x384xbf16> to vector<8x384xbf16>
    %c0_12 = arith.constant 0 : index
    %c0_13 = arith.constant 0 : index
    %c36 = arith.constant 36 : index
    %12 = vector.load %arg2[%c0_12, %c0_13, %c36] : memref<1x8x512xbf16, #tpu.memory_space<vmem>>, vector<1x8x384xbf16>
    %13 = vector.shape_cast %12 : vector<1x8x384xbf16> to vector<8x384xbf16>
    %c0_14 = arith.constant 0 : index
    %c0_15 = arith.constant 0 : index
    %c37 = arith.constant 37 : index
    %14 = vector.load %arg2[%c0_14, %c0_15, %c37] : memref<1x8x512xbf16, #tpu.memory_space<vmem>>, vector<1x8x384xbf16>
    %15 = vector.shape_cast %14 : vector<1x8x384xbf16> to vector<8x384xbf16>
    %c0_16 = arith.constant 0 : index
    %c0_17 = arith.constant 0 : index
    %c38 = arith.constant 38 : index
    %16 = vector.load %arg2[%c0_16, %c0_17, %c38] : memref<1x8x512xbf16, #tpu.memory_space<vmem>>, vector<1x8x384xbf16>
    %17 = vector.shape_cast %16 : vector<1x8x384xbf16> to vector<8x384xbf16>
    %18 = tpu.concatenate %1, %3, %5, %7, %9, %11, %13, %15, %17 in 0 : vector<8x384xbf16>, vector<8x384xbf16>, vector<8x384xbf16>, vector<8x384xbf16>, vector<8x384xbf16>, vector<8x384xbf16>, vector<8x384xbf16>, vector<8x384xbf16>, vector<8x384xbf16> -> vector<72x384xbf16>
    %c0_18 = arith.constant 0 : index
    %c0_19 = arith.constant 0 : index
    %19 = vector.load %arg3[%c0_18, %c0_19] : memref<16x72xbf16, #tpu.memory_space<vmem>>, vector<16x72xbf16>
    %cst = arith.constant dense<0.000000e+00> : vector<16x384xf32>
    %20 = tpu.matmul %19, %18, %cst {dimension_numbers = #tpu.dot_dimension_numbers<[1], [0], [0], [1], [0, 0, 1, 1], [], []>} : vector<16x72xbf16>, vector<72x384xbf16>, vector<16x384xf32> -> vector<16x384xf32>
    %c0_20 = arith.constant 0 : index
    %c0_21 = arith.constant 0 : index
    %21 = vector.load %arg4[%c0_20, %c0_21] : memref<16x1xf32, #tpu.memory_space<vmem>>, vector<16x1xf32>
    %22 = vector.broadcast %21 : vector<16x1xf32> to vector<16x384xf32>
    %23 = arith.mulf %20, %22 : vector<16x384xf32>
    %c0_22 = arith.constant 0 : index
    %c0_23 = arith.constant 0 : index
    %24 = vector.load %arg5[%c0_22, %c0_23] : memref<16x1xf32, #tpu.memory_space<vmem>>, vector<16x1xf32>
    %25 = vector.broadcast %24 : vector<16x1xf32> to vector<16x384xf32>
    %26 = arith.addf %23, %25 : vector<16x384xf32>
    %cst_24 = arith.constant 0.000000e+00 : f32
    %27 = vector.broadcast %cst_24 : f32 to vector<16x384xf32>
    %28 = arith.maximumf %26, %27 : vector<16x384xf32>
    %29 = arith.truncf %28 : vector<16x384xf32> to vector<16x384xbf16>
    %c0_25 = arith.constant 0 : index
    %c0_26 = arith.constant 0 : index
    %c0_27 = arith.constant 0 : index
    %30 = vector.load %arg6[%c0_25, %c0_26, %c0_27] : memref<1x16x384xbf16, #tpu.memory_space<vmem>>, vector<1x16x384xbf16>
    %31 = vector.shape_cast %30 : vector<1x16x384xbf16> to vector<16x384xbf16>
    %32 = vector.shape_cast %29 : vector<16x384xbf16> to vector<1x16x384xbf16>
    tpu.vector_store %arg6[%c0_25, %c0_26, %c0_27], %32 {strides = array<i32>} : memref<1x16x384xbf16, #tpu.memory_space<vmem>>, vector<1x16x384xbf16>,
    return
  }
  func.func @transform_0(%arg0: i32, %arg1: i32) -> (i32, i32, i32) {
    %c1_i32 = arith.constant 1 : i32
    %0 = arith.muli %arg0, %c1_i32 : i32
    %1 = arith.addi %0, %arg1 : i32
    %c0_i32 = arith.constant 0 : i32
    %c0_i32_0 = arith.constant 0 : i32
    %c0_i32_1 = arith.constant 0 : i32
    return %1, %c0_i32, %c0_i32_0 : i32, i32, i32
  }
  func.func @transform_1(%arg0: i32, %arg1: i32) -> (i32, i32) {
    %c0_i32 = arith.constant 0 : i32
    %c0_i32_0 = arith.constant 0 : i32
    %c0_i32_1 = arith.constant 0 : i32
    return %c0_i32, %c0_i32_0 : i32, i32
  }
  func.func @transform_2(%arg0: i32, %arg1: i32) -> (i32, i32) {
    %c0_i32 = arith.constant 0 : i32
    %c0_i32_0 = arith.constant 0 : i32
    %c0_i32_1 = arith.constant 0 : i32
    return %c0_i32, %c0_i32_0 : i32, i32
  }
  func.func @transform_3(%arg0: i32, %arg1: i32) -> (i32, i32) {
    %c0_i32 = arith.constant 0 : i32
    %c0_i32_0 = arith.constant 0 : i32
    %c0_i32_1 = arith.constant 0 : i32
    return %c0_i32, %c0_i32_0 : i32, i32
  }
  func.func @transform_4(%arg0: i32, %arg1: i32) -> (i32, i32, i32) {
    %c0_i32 = arith.constant 0 : i32
    %c0_i32_0 = arith.constant 0 : i32
    return %arg0, %c0_i32, %arg1 : i32, i32, i32
  }
}

module attributes {stable_mosaic.version = 11 : i64} {
  func.func @_stereo_conv3x3_kernel(%arg0: i32, %arg1: i32, %arg2: memref<1x48x512xbf16, #tpu.memory_space<vmem>>, %arg3: memref<16x432xbf16, #tpu.memory_space<vmem>>, %arg4: memref<16x1xf32, #tpu.memory_space<vmem>>, %arg5: memref<16x1xf32, #tpu.memory_space<vmem>>, %arg6: memref<1x16x384xbf16, #tpu.memory_space<vmem>>) attributes {dimension_semantics = [#tpu.dimension_semantics<parallel>, #tpu.dimension_semantics<parallel>], iteration_bounds = array<i64: 2, 1>, scalar_prefetch = 0 : i64, scratch_operands = 0 : i64, tpu.core_type = #tpu.core_type<tc>, window_params = [{transform_indices = @transform_0, window_bounds = array<i64: 1, 48, 512>}, {pipeline_mode = #tpu.pipeline_mode<synchronous>, transform_indices = @transform_1, window_bounds = array<i64: 16, 432>}, {pipeline_mode = #tpu.pipeline_mode<synchronous>, transform_indices = @transform_2, window_bounds = array<i64: 16, 1>}, {pipeline_mode = #tpu.pipeline_mode<synchronous>, transform_indices = @transform_3, window_bounds = array<i64: 16, 1>}, {transform_indices = @transform_4, window_bounds = array<i64: 1, 16, 384>}]} {
    %c0 = arith.constant 0 : index
    %c0_0 = arith.constant 0 : index
    %c0_1 = arith.constant 0 : index
    %0 = vector.load %arg2[%c0, %c0_0, %c0_1] : memref<1x48x512xbf16, #tpu.memory_space<vmem>>, vector<1x48x384xbf16>
    %1 = vector.shape_cast %0 : vector<1x48x384xbf16> to vector<48x384xbf16>
    %c0_2 = arith.constant 0 : index
    %c0_3 = arith.constant 0 : index
    %c1 = arith.constant 1 : index
    %2 = vector.load %arg2[%c0_2, %c0_3, %c1] : memref<1x48x512xbf16, #tpu.memory_space<vmem>>, vector<1x48x384xbf16>
    %3 = vector.shape_cast %2 : vector<1x48x384xbf16> to vector<48x384xbf16>
    %c0_4 = arith.constant 0 : index
    %c0_5 = arith.constant 0 : index
    %c2 = arith.constant 2 : index
    %4 = vector.load %arg2[%c0_4, %c0_5, %c2] : memref<1x48x512xbf16, #tpu.memory_space<vmem>>, vector<1x48x384xbf16>
    %5 = vector.shape_cast %4 : vector<1x48x384xbf16> to vector<48x384xbf16>
    %c0_6 = arith.constant 0 : index
    %c0_7 = arith.constant 0 : index
    %c18 = arith.constant 18 : index
    %6 = vector.load %arg2[%c0_6, %c0_7, %c18] : memref<1x48x512xbf16, #tpu.memory_space<vmem>>, vector<1x48x384xbf16>
    %7 = vector.shape_cast %6 : vector<1x48x384xbf16> to vector<48x384xbf16>
    %c0_8 = arith.constant 0 : index
    %c0_9 = arith.constant 0 : index
    %c19 = arith.constant 19 : index
    %8 = vector.load %arg2[%c0_8, %c0_9, %c19] : memref<1x48x512xbf16, #tpu.memory_space<vmem>>, vector<1x48x384xbf16>
    %9 = vector.shape_cast %8 : vector<1x48x384xbf16> to vector<48x384xbf16>
    %c0_10 = arith.constant 0 : index
    %c0_11 = arith.constant 0 : index
    %c20 = arith.constant 20 : index
    %10 = vector.load %arg2[%c0_10, %c0_11, %c20] : memref<1x48x512xbf16, #tpu.memory_space<vmem>>, vector<1x48x384xbf16>
    %11 = vector.shape_cast %10 : vector<1x48x384xbf16> to vector<48x384xbf16>
    %c0_12 = arith.constant 0 : index
    %c0_13 = arith.constant 0 : index
    %c36 = arith.constant 36 : index
    %12 = vector.load %arg2[%c0_12, %c0_13, %c36] : memref<1x48x512xbf16, #tpu.memory_space<vmem>>, vector<1x48x384xbf16>
    %13 = vector.shape_cast %12 : vector<1x48x384xbf16> to vector<48x384xbf16>
    %c0_14 = arith.constant 0 : index
    %c0_15 = arith.constant 0 : index
    %c37 = arith.constant 37 : index
    %14 = vector.load %arg2[%c0_14, %c0_15, %c37] : memref<1x48x512xbf16, #tpu.memory_space<vmem>>, vector<1x48x384xbf16>
    %15 = vector.shape_cast %14 : vector<1x48x384xbf16> to vector<48x384xbf16>
    %c0_16 = arith.constant 0 : index
    %c0_17 = arith.constant 0 : index
    %c38 = arith.constant 38 : index
    %16 = vector.load %arg2[%c0_16, %c0_17, %c38] : memref<1x48x512xbf16, #tpu.memory_space<vmem>>, vector<1x48x384xbf16>
    %17 = vector.shape_cast %16 : vector<1x48x384xbf16> to vector<48x384xbf16>
    %18 = tpu.concatenate %1, %3, %5, %7, %9, %11, %13, %15, %17 in 0 : vector<48x384xbf16>, vector<48x384xbf16>, vector<48x384xbf16>, vector<48x384xbf16>, vector<48x384xbf16>, vector<48x384xbf16>, vector<48x384xbf16>, vector<48x384xbf16>, vector<48x384xbf16> -> vector<432x384xbf16>
    %c0_18 = arith.constant 0 : index
    %c0_19 = arith.constant 0 : index
    %19 = vector.load %arg3[%c0_18, %c0_19] : memref<16x432xbf16, #tpu.memory_space<vmem>>, vector<16x432xbf16>
    %cst = arith.constant dense<0.000000e+00> : vector<16x384xf32>
    %20 = tpu.matmul %19, %18, %cst {dimension_numbers = #tpu.dot_dimension_numbers<[1], [0], [0], [1], [0, 0, 1, 1], [], []>} : vector<16x432xbf16>, vector<432x384xbf16>, vector<16x384xf32> -> vector<16x384xf32>
    %c0_20 = arith.constant 0 : index
    %c0_21 = arith.constant 0 : index
    %21 = vector.load %arg4[%c0_20, %c0_21] : memref<16x1xf32, #tpu.memory_space<vmem>>, vector<16x1xf32>
    %22 = vector.broadcast %21 : vector<16x1xf32> to vector<16x384xf32>
    %23 = arith.mulf %20, %22 : vector<16x384xf32>
    %c0_22 = arith.constant 0 : index
    %c0_23 = arith.constant 0 : index
    %24 = vector.load %arg5[%c0_22, %c0_23] : memref<16x1xf32, #tpu.memory_space<vmem>>, vector<16x1xf32>
    %25 = vector.broadcast %24 : vector<16x1xf32> to vector<16x384xf32>
    %26 = arith.addf %23, %25 : vector<16x384xf32>
    %cst_24 = arith.constant 0.000000e+00 : f32
    %27 = vector.broadcast %cst_24 : f32 to vector<16x384xf32>
    %28 = arith.maximumf %26, %27 : vector<16x384xf32>
    %29 = arith.truncf %28 : vector<16x384xf32> to vector<16x384xbf16>
    %c0_25 = arith.constant 0 : index
    %c0_26 = arith.constant 0 : index
    %c0_27 = arith.constant 0 : index
    %30 = vector.load %arg6[%c0_25, %c0_26, %c0_27] : memref<1x16x384xbf16, #tpu.memory_space<vmem>>, vector<1x16x384xbf16>
    %31 = vector.shape_cast %30 : vector<1x16x384xbf16> to vector<16x384xbf16>
    %32 = vector.shape_cast %29 : vector<16x384xbf16> to vector<1x16x384xbf16>
    tpu.vector_store %arg6[%c0_25, %c0_26, %c0_27], %32 {strides = array<i32>} : memref<1x16x384xbf16, #tpu.memory_space<vmem>>, vector<1x16x384xbf16>,
    return
  }
  func.func @transform_0(%arg0: i32, %arg1: i32) -> (i32, i32, i32) {
    %c1_i32 = arith.constant 1 : i32
    %0 = arith.muli %arg0, %c1_i32 : i32
    %1 = arith.addi %0, %arg1 : i32
    %c0_i32 = arith.constant 0 : i32
    %c0_i32_0 = arith.constant 0 : i32
    %c0_i32_1 = arith.constant 0 : i32
    return %1, %c0_i32, %c0_i32_0 : i32, i32, i32
  }
  func.func @transform_1(%arg0: i32, %arg1: i32) -> (i32, i32) {
    %c0_i32 = arith.constant 0 : i32
    %c0_i32_0 = arith.constant 0 : i32
    %c0_i32_1 = arith.constant 0 : i32
    return %c0_i32, %c0_i32_0 : i32, i32
  }
  func.func @transform_2(%arg0: i32, %arg1: i32) -> (i32, i32) {
    %c0_i32 = arith.constant 0 : i32
    %c0_i32_0 = arith.constant 0 : i32
    %c0_i32_1 = arith.constant 0 : i32
    return %c0_i32, %c0_i32_0 : i32, i32
  }
  func.func @transform_3(%arg0: i32, %arg1: i32) -> (i32, i32) {
    %c0_i32 = arith.constant 0 : i32
    %c0_i32_0 = arith.constant 0 : i32
    %c0_i32_1 = arith.constant 0 : i32
    return %c0_i32, %c0_i32_0 : i32, i32
  }
  func.func @transform_4(%arg0: i32, %arg1: i32) -> (i32, i32, i32) {
    %c0_i32 = arith.constant 0 : i32
    %c0_i32_0 = arith.constant 0 : i32
    return %arg0, %c0_i32, %arg1 : i32, i32, i32
  }
}

module attributes {stable_mosaic.version = 11 : i64} {
  func.func @_stereo_conv3x3_kernel(%arg0: i32, %arg1: i32, %arg2: memref<1x24x1280xbf16, #tpu.memory_space<vmem>>, %arg3: memref<8x216xbf16, #tpu.memory_space<vmem>>, %arg4: memref<8x1xf32, #tpu.memory_space<vmem>>, %arg5: memref<8x1xf32, #tpu.memory_space<vmem>>, %arg6: memref<1x8x1152xbf16, #tpu.memory_space<vmem>>) attributes {dimension_semantics = [#tpu.dimension_semantics<parallel>, #tpu.dimension_semantics<parallel>], iteration_bounds = array<i64: 2, 1>, scalar_prefetch = 0 : i64, scratch_operands = 0 : i64, tpu.core_type = #tpu.core_type<tc>, window_params = [{transform_indices = @transform_0, window_bounds = array<i64: 1, 24, 1280>}, {pipeline_mode = #tpu.pipeline_mode<synchronous>, transform_indices = @transform_1, window_bounds = array<i64: 8, 216>}, {pipeline_mode = #tpu.pipeline_mode<synchronous>, transform_indices = @transform_2, window_bounds = array<i64: 8, 1>}, {pipeline_mode = #tpu.pipeline_mode<synchronous>, transform_indices = @transform_3, window_bounds = array<i64: 8, 1>}, {transform_indices = @transform_4, window_bounds = array<i64: 1, 8, 1152>}]} {
    %c0 = arith.constant 0 : index
    %c0_0 = arith.constant 0 : index
    %c0_1 = arith.constant 0 : index
    %0 = vector.load %arg2[%c0, %c0_0, %c0_1] : memref<1x24x1280xbf16, #tpu.memory_space<vmem>>, vector<1x24x1152xbf16>
    %1 = vector.shape_cast %0 : vector<1x24x1152xbf16> to vector<24x1152xbf16>
    %c0_2 = arith.constant 0 : index
    %c0_3 = arith.constant 0 : index
    %c1 = arith.constant 1 : index
    %2 = vector.load %arg2[%c0_2, %c0_3, %c1] : memref<1x24x1280xbf16, #tpu.memory_space<vmem>>, vector<1x24x1152xbf16>
    %3 = vector.shape_cast %2 : vector<1x24x1152xbf16> to vector<24x1152xbf16>
    %c0_4 = arith.constant 0 : index
    %c0_5 = arith.constant 0 : index
    %c2 = arith.constant 2 : index
    %4 = vector.load %arg2[%c0_4, %c0_5, %c2] : memref<1x24x1280xbf16, #tpu.memory_space<vmem>>, vector<1x24x1152xbf16>
    %5 = vector.shape_cast %4 : vector<1x24x1152xbf16> to vector<24x1152xbf16>
    %c0_6 = arith.constant 0 : index
    %c0_7 = arith.constant 0 : index
    %c34 = arith.constant 34 : index
    %6 = vector.load %arg2[%c0_6, %c0_7, %c34] : memref<1x24x1280xbf16, #tpu.memory_space<vmem>>, vector<1x24x1152xbf16>
    %7 = vector.shape_cast %6 : vector<1x24x1152xbf16> to vector<24x1152xbf16>
    %c0_8 = arith.constant 0 : index
    %c0_9 = arith.constant 0 : index
    %c35 = arith.constant 35 : index
    %8 = vector.load %arg2[%c0_8, %c0_9, %c35] : memref<1x24x1280xbf16, #tpu.memory_space<vmem>>, vector<1x24x1152xbf16>
    %9 = vector.shape_cast %8 : vector<1x24x1152xbf16> to vector<24x1152xbf16>
    %c0_10 = arith.constant 0 : index
    %c0_11 = arith.constant 0 : index
    %c36 = arith.constant 36 : index
    %10 = vector.load %arg2[%c0_10, %c0_11, %c36] : memref<1x24x1280xbf16, #tpu.memory_space<vmem>>, vector<1x24x1152xbf16>
    %11 = vector.shape_cast %10 : vector<1x24x1152xbf16> to vector<24x1152xbf16>
    %c0_12 = arith.constant 0 : index
    %c0_13 = arith.constant 0 : index
    %c68 = arith.constant 68 : index
    %12 = vector.load %arg2[%c0_12, %c0_13, %c68] : memref<1x24x1280xbf16, #tpu.memory_space<vmem>>, vector<1x24x1152xbf16>
    %13 = vector.shape_cast %12 : vector<1x24x1152xbf16> to vector<24x1152xbf16>
    %c0_14 = arith.constant 0 : index
    %c0_15 = arith.constant 0 : index
    %c69 = arith.constant 69 : index
    %14 = vector.load %arg2[%c0_14, %c0_15, %c69] : memref<1x24x1280xbf16, #tpu.memory_space<vmem>>, vector<1x24x1152xbf16>
    %15 = vector.shape_cast %14 : vector<1x24x1152xbf16> to vector<24x1152xbf16>
    %c0_16 = arith.constant 0 : index
    %c0_17 = arith.constant 0 : index
    %c70 = arith.constant 70 : index
    %16 = vector.load %arg2[%c0_16, %c0_17, %c70] : memref<1x24x1280xbf16, #tpu.memory_space<vmem>>, vector<1x24x1152xbf16>
    %17 = vector.shape_cast %16 : vector<1x24x1152xbf16> to vector<24x1152xbf16>
    %18 = tpu.concatenate %1, %3, %5, %7, %9, %11, %13, %15, %17 in 0 : vector<24x1152xbf16>, vector<24x1152xbf16>, vector<24x1152xbf16>, vector<24x1152xbf16>, vector<24x1152xbf16>, vector<24x1152xbf16>, vector<24x1152xbf16>, vector<24x1152xbf16>, vector<24x1152xbf16> -> vector<216x1152xbf16>
    %c0_18 = arith.constant 0 : index
    %c0_19 = arith.constant 0 : index
    %19 = vector.load %arg3[%c0_18, %c0_19] : memref<8x216xbf16, #tpu.memory_space<vmem>>, vector<8x216xbf16>
    %cst = arith.constant dense<0.000000e+00> : vector<8x1152xf32>
    %20 = tpu.matmul %19, %18, %cst {dimension_numbers = #tpu.dot_dimension_numbers<[1], [0], [0], [1], [0, 0, 1, 1], [], []>} : vector<8x216xbf16>, vector<216x1152xbf16>, vector<8x1152xf32> -> vector<8x1152xf32>
    %c0_20 = arith.constant 0 : index
    %c0_21 = arith.constant 0 : index
    %21 = vector.load %arg4[%c0_20, %c0_21] : memref<8x1xf32, #tpu.memory_space<vmem>>, vector<8x1xf32>
    %22 = vector.broadcast %21 : vector<8x1xf32> to vector<8x1152xf32>
    %23 = arith.mulf %20, %22 : vector<8x1152xf32>
    %c0_22 = arith.constant 0 : index
    %c0_23 = arith.constant 0 : index
    %24 = vector.load %arg5[%c0_22, %c0_23] : memref<8x1xf32, #tpu.memory_space<vmem>>, vector<8x1xf32>
    %25 = vector.broadcast %24 : vector<8x1xf32> to vector<8x1152xf32>
    %26 = arith.addf %23, %25 : vector<8x1152xf32>
    %cst_24 = arith.constant 0.000000e+00 : f32
    %27 = vector.broadcast %cst_24 : f32 to vector<8x1152xf32>
    %28 = arith.maximumf %26, %27 : vector<8x1152xf32>
    %29 = arith.truncf %28 : vector<8x1152xf32> to vector<8x1152xbf16>
    %c0_25 = arith.constant 0 : index
    %c0_26 = arith.constant 0 : index
    %c0_27 = arith.constant 0 : index
    %30 = vector.load %arg6[%c0_25, %c0_26, %c0_27] : memref<1x8x1152xbf16, #tpu.memory_space<vmem>>, vector<1x8x1152xbf16>
    %31 = vector.shape_cast %30 : vector<1x8x1152xbf16> to vector<8x1152xbf16>
    %32 = vector.shape_cast %29 : vector<8x1152xbf16> to vector<1x8x1152xbf16>
    tpu.vector_store %arg6[%c0_25, %c0_26, %c0_27], %32 {strides = array<i32>} : memref<1x8x1152xbf16, #tpu.memory_space<vmem>>, vector<1x8x1152xbf16>,
    return
  }
  func.func @transform_0(%arg0: i32, %arg1: i32) -> (i32, i32, i32) {
    %c1_i32 = arith.constant 1 : i32
    %0 = arith.muli %arg0, %c1_i32 : i32
    %1 = arith.addi %0, %arg1 : i32
    %c0_i32 = arith.constant 0 : i32
    %c0_i32_0 = arith.constant 0 : i32
    %c0_i32_1 = arith.constant 0 : i32
    return %1, %c0_i32, %c0_i32_0 : i32, i32, i32
  }
  func.func @transform_1(%arg0: i32, %arg1: i32) -> (i32, i32) {
    %c0_i32 = arith.constant 0 : i32
    %c0_i32_0 = arith.constant 0 : i32
    %c0_i32_1 = arith.constant 0 : i32
    return %c0_i32, %c0_i32_0 : i32, i32
  }
  func.func @transform_2(%arg0: i32, %arg1: i32) -> (i32, i32) {
    %c0_i32 = arith.constant 0 : i32
    %c0_i32_0 = arith.constant 0 : i32
    %c0_i32_1 = arith.constant 0 : i32
    return %c0_i32, %c0_i32_0 : i32, i32
  }
  func.func @transform_3(%arg0: i32, %arg1: i32) -> (i32, i32) {
    %c0_i32 = arith.constant 0 : i32
    %c0_i32_0 = arith.constant 0 : i32
    %c0_i32_1 = arith.constant 0 : i32
    return %c0_i32, %c0_i32_0 : i32, i32
  }
  func.func @transform_4(%arg0: i32, %arg1: i32) -> (i32, i32, i32) {
    %c0_i32 = arith.constant 0 : i32
    %c0_i32_0 = arith.constant 0 : i32
    return %arg0, %c0_i32, %arg1 : i32, i32, i32
  }
}

</mosaic_0001>

<llo_original>
// kernel: gunet_forward.5
$region0: #{gunet_forward.5}
  #allocation0 [shape = 'u32[]', space=smem, size = 0x4, offset = 0x4, fixed_abs, tag = 'smem constant byte address 0x4 - core index']
  #allocation1 [shape = 'u32[72,128]{1,0:T(1,128)}', space=vmem, size = 0x9000, scoped, tag = 'internal scratch']
  %s0 = inlined_call_operand.vmem [shape: bf16[2,8,1280], index: 0, kind: input, shape index: {}]
  %s1 = inlined_call_operand.vmem [shape: bf16[6,72], index: 1, kind: input, shape index: {}]
  %s2 = inlined_call_operand.vmem [shape: f32[6,1], index: 2, kind: input, shape index: {}]
  %s3 = inlined_call_operand.vmem [shape: f32[6,1], index: 3, kind: input, shape index: {}]
  %s4 = inlined_call_operand.vmem [shape: bf16[2,6,1152], index: 4, kind: output, shape index: {}]
  %s5 = sld [smem:[#allocation0]]
  $region49: #{gunet_forward.5} parent=0
    _
  %s7 = ssub.s32 1, %s5
  %s8 = scalar_select 0, %s7, %s5
  loop: start=0, step=1, limit=4
  $region2: #{gunet_forward.5} parent=0 // loop_pre_header
    _
  $region3: #{gunet_forward.5} parent=0 // loop_header
    %s10 = sphi 0, %s14
    %p11 = scmp.ge.s32.totalorder %s10, 4
    %s17 = sphi 0, %s29
    %s18 = sphi 0, %s25
    %s19 = sphi 0, %s17
    %s20 = sphi 0, %s18
    %s21 = sphi 0, %s19
    %s22 = sphi 0, %s20
    %s34 = sphi 0, %s36
    %s37 = sphi 0, %s34
    %s38 = sphi 0, %s37
    %s54 = sphi 0, %s38
    %s58 = sphi 0, %s58
    %s60 = sphi 0, %s58
    %s61 = sphi 0, %s60
    %s75 = sphi 0, %s61
    %s79 = sphi 0, %s79
    %s81 = sphi 0, %s79
    %s82 = sphi 0, %s81
    %s96 = sphi 0, %s82
    %s100 = sphi 0, %s100
    %s102 = sphi 0, %s100
    %s103 = sphi 0, %s102
    %s117 = sphi 0, %s103
    %s125 = sphi 0, %s127
    %s128 = sphi 0, %s125
    %s129 = sphi 0, %s128
    %s145 = sphi 0, %s129
  $region4: #{gunet_forward.5} parent=0 // loop_header_branch
    %13 = sbr.rel (%p11) target = $region8
  $region5: #{gunet_forward.5} parent=0 // loop_body
    %s15 = ssub.s32 %s10, 1
    %s16 = ssub.s32 %s10, 2
    %s23 = sadd.s32 1, %s18
    %p24 = scmp.ge.s32.totalorder %s23, 1
    %s25 = scalar_select %p24, 0, %s23
    %s26 = sadd.s32 1, %s17
    %s27 = scalar_select %p24, %s26, %s17
    %p28 = scmp.ge.s32.totalorder %s27, 2
    %s29 = scalar_select %p28, 0, %s27
    %s30 = sadd.s32 %s17, %s18
    %s31 = sadd.s32 %s29, %s25
    %s32 = ssub.s32 %s30, %s31
    %p33 = scmp.eq.s32.totalorder %s32, 0
    %s35 = sadd.s32 %s34, 1
    %s36 = scalar_select %p33, %s34, %s35
    %p39 = pneg %p33
    %p40 = scmp.eq.s32.totalorder %s10, 1
    %p41 = por %p39, %p40
    %p42 = scmp.ne.s32.totalorder %s34, %s37
    %p43 = scmp.eq.s32.totalorder %s10, 0
    %p44 = por %p42, %p43
    %p45 = scmp.ne.s32.totalorder %s34, %s37
    %p46 = scmp.eq.s32.totalorder %s15, 1
    %p47 = por %p45, %p46
    %p48 = scmp.ne.s32.totalorder %s37, %s38
    %p49 = scmp.eq.s32.totalorder %s15, 0
    %p50 = por %p48, %p49
    %p51 = scmp.ne.s32.totalorder %s37, %s38
    %p52 = scmp.eq.s32.totalorder %s16, 1
    %p53 = por %p51, %p52
    %p55 = scmp.ne.s32.totalorder %s38, %s54
    %p56 = scmp.eq.s32.totalorder %s16, 0
    %p57 = por %p55, %p56
    %s59 = sadd.s32 %s58, 1
    %p62 = scmp.eq.s32.totalorder %s10, 1
    %p63 = scmp.ne.s32.totalorder %s58, %s60
    %p64 = scmp.eq.s32.totalorder %s10, 0
    %p65 = por %p63, %p64
    %p66 = scmp.ne.s32.totalorder %s58, %s60
    %p67 = scmp.eq.s32.totalorder %s15, 1
    %p68 = por %p66, %p67
    %p69 = scmp.ne.s32.totalorder %s60, %s61
    %p70 = scmp.eq.s32.totalorder %s15, 0
    %p71 = por %p69, %p70
    %p72 = scmp.ne.s32.totalorder %s60, %s61
    %p73 = scmp.eq.s32.totalorder %s16, 1
    %p74 = por %p72, %p73
    %p76 = scmp.ne.s32.totalorder %s61, %s75
    %p77 = scmp.eq.s32.totalorder %s16, 0
    %p78 = por %p76, %p77
    %s80 = sadd.s32 %s79, 1
    %p83 = scmp.eq.s32.totalorder %s10, 1
    %p84 = scmp.ne.s32.totalorder %s79, %s81
    %p85 = scmp.eq.s32.totalorder %s10, 0
    %p86 = por %p84, %p85
    %p87 = scmp.ne.s32.totalorder %s79, %s81
    %p88 = scmp.eq.s32.totalorder %s15, 1
    %p89 = por %p87, %p88
    %p90 = scmp.ne.s32.totalorder %s81, %s82
    %p91 = scmp.eq.s32.totalorder %s15, 0
    %p92 = por %p90, %p91
    %p93 = scmp.ne.s32.totalorder %s81, %s82
    %p94 = scmp.eq.s32.totalorder %s16, 1
    %p95 = por %p93, %p94
    %p97 = scmp.ne.s32.totalorder %s82, %s96
    %p98 = scmp.eq.s32.totalorder %s16, 0
    %p99 = por %p97, %p98
    %s101 = sadd.s32 %s100, 1
    %p104 = scmp.eq.s32.totalorder %s10, 1
    %p105 = scmp.ne.s32.totalorder %s100, %s102
    %p106 = scmp.eq.s32.totalorder %s10, 0
    %p107 = por %p105, %p106
    %p108 = scmp.ne.s32.totalorder %s100, %s102
    %p109 = scmp.eq.s32.totalorder %s15, 1
    %p110 = por %p108, %p109
    %p111 = scmp.ne.s32.totalorder %s102, %s103
    %p112 = scmp.eq.s32.totalorder %s15, 0
    %p113 = por %p111, %p112
    %p114 = scmp.ne.s32.totalorder %s102, %s103
    %p115 = scmp.eq.s32.totalorder %s16, 1
    %p116 = por %p114, %p115
    %p118 = scmp.ne.s32.totalorder %s103, %s117
    %p119 = scmp.eq.s32.totalorder %s16, 0
    %p120 = por %p118, %p119
    %s121 = ssub.s32 %s17, %s29
    %s122 = ssub.s32 %s18, %s25
    %s123 = sor.u32 %s121, %s122
    %p124 = scmp.eq.s32.totalorder %s123, 0
    %s126 = sadd.s32 %s125, 1
    %s127 = scalar_select %p124, %s125, %s126
    %p130 = pneg %p124
    %p131 = scmp.eq.s32.totalorder %s10, 1
    %p132 = por %p130, %p131
    %p133 = scmp.ne.s32.totalorder %s125, %s128
    %p134 = scmp.eq.s32.totalorder %s10, 0
    %p135 = por %p133, %p134
    %p136 = scmp.ne.s32.totalorder %s125, %s128
    %p137 = scmp.eq.s32.totalorder %s15, 1
    %p138 = por %p136, %p137
    %p139 = scmp.ne.s32.totalorder %s128, %s129
    %p140 = scmp.eq.s32.totalorder %s15, 0
    %p141 = por %p139, %p140
    %p142 = scmp.ne.s32.totalorder %s128, %s129
    %p143 = scmp.eq.s32.totalorder %s16, 1
    %p144 = por %p142, %p143
    %p146 = scmp.ne.s32.totalorder %s129, %s145
    %p147 = scmp.eq.s32.totalorder %s16, 0
    %p148 = por %p146, %p147
    %p149 = scmp.le.s32.totalorder 1, %s10
    %p150 = scmp.lt.s32.totalorder %s10, 3
    %p151 = pnand %p149, %p150
    %p152 = pneg %p151
    // Predicated region
    $region9: #{gunet_forward.5} parent=5 // pred_check
      _
    $region10: #{gunet_forward.5} parent=5 // pred_check_branch
      %154 = sbr.rel (%p151) target = $region12
    $region11: #{gunet_forward.5} parent=5 // pred_region
      %s155 = ssub.s32 %s10, 1
      // Predicated region
      $region13: #{gunet_forward.5} parent=11 // pred_check
        %p156 = pneg %p71
      $region14: #{gunet_forward.5} parent=11 // pred_check_branch
        %158 = sbr.rel (%p156) target = $region16
      $region15: #{gunet_forward.5} parent=11 // pred_region
        _
      $region16: #{gunet_forward.5} parent=11 // pred_fallthru
        _
      // Predicated region
      $region17: #{gunet_forward.5} parent=11 // pred_check
        %p159 = pneg %p92
      $region18: #{gunet_forward.5} parent=11 // pred_check_branch
        %161 = sbr.rel (%p159) target = $region20
      $region19: #{gunet_forward.5} parent=11 // pred_region
        _
      $region20: #{gunet_forward.5} parent=11 // pred_fallthru
        _
      // Predicated region
      $region21: #{gunet_forward.5} parent=11 // pred_check
        %p162 = pneg %p113
      $region22: #{gunet_forward.5} parent=11 // pred_check_branch
        %164 = sbr.rel (%p162) target = $region24
      $region23: #{gunet_forward.5} parent=11 // pred_region
        _
      $region24: #{gunet_forward.5} parent=11 // pred_fallthru
        _
    $region12: #{gunet_forward.5} parent=5 // pred_fallthru
      _
    %p165 = scmp.lt.s32.totalorder %s10, 2
    // Predicated region
    $region25: #{gunet_forward.5} parent=5 // pred_check
      %p166 = pneg %p165
    $region26: #{gunet_forward.5} parent=5 // pred_check_branch
      %168 = sbr.rel (%p166) target = $region28
    $region27: #{gunet_forward.5} parent=5 // pred_region
      // Predicated region
      $region29: #{gunet_forward.5} parent=27 // pred_check
        %p169 = pneg %p44
      $region30: #{gunet_forward.5} parent=27 // pred_check_branch
        %171 = sbr.rel (%p169) target = $region32
      $region31: #{gunet_forward.5} parent=27 // pred_region
        %s172 = sadd.s32 %s17, %s18
        %p173 = scmp.lt.s32.totalorder %s172, 1
        %s174 = scalar_select %p173, %s172, 1
        %s175 = smul.addr %s174, 10
        %s176 = smul.addr %s175, 4
        %s177 = scalar_lea.vmem %s0, %s176
        %s178 = sadd.s32 %s17, %s18
      $region32: #{gunet_forward.5} parent=27 // pred_fallthru
        _
    $region28: #{gunet_forward.5} parent=5 // pred_fallthru
      _
    %p179 = scmp.le.s32.totalorder 1, %s10
    %p180 = scmp.lt.s32.totalorder %s10, 3
    %p181 = pnand %p179, %p180
    %p182 = pneg %p181
    // Predicated region
    $region33: #{gunet_forward.5} parent=5 // pred_check
      _
    $region34: #{gunet_forward.5} parent=5 // pred_check_branch
      %184 = sbr.rel (%p181) target = $region36
    $region35: #{gunet_forward.5} parent=5 // pred_region
      %s185 = ssub.s32 %s10, 1
      %s186 = sadd.s32 %s19, %s20
      %p187 = scmp.lt.s32.totalorder %s186, 1
      %s188 = scalar_select %p187, %s186, 1
      %s189 = smul.addr %s188, 10
      %s190 = smul.addr %s189, 4
      %s191 = scalar_lea.vmem %s0, %s190
      %p192 = pneg %p50
      %p193 = pneg %p47
      %p194 = pneg %p71
      %p195 = pneg %p68
      %p196 = pneg %p92
      %p197 = pneg %p89
      %p198 = pneg %p113
      %p199 = pneg %p110
      %p200 = pneg %p141
      %p201 = pneg %p138
      %s202 = smul.u32 9, %s20
      %p203 = scmp.lt.s32.totalorder %s19, 1
      %s204 = scalar_select %p203, %s19, 1
      %p205 = scmp.lt.s32.totalorder %s202, 8
      %s206 = scalar_select %p205, %s202, 8
      %s207 = smul.addr %s204, 9
      %s208 = sadd.s32 %s206, %s207
      %s209 = smul.addr %s208, 4
      %s210 = scalar_lea.vmem %s4, %s209
      %s211 = sadd.s32 %s19, %s20
      %p212 = scmp.lt.s32.totalorder %s211, 1
      %s213 = scalar_select %p212, %s211, 1
      %s214 = smul.addr %s213, 10
      %s215 = smul.addr %s214, 4
      %s216 = scalar_lea.vmem %s0, %s215
      %s217 = sadd.s32 %s19, %s20
      %s218 = smul.u32 9, %s20
      %p219 = scmp.lt.s32.totalorder %s19, 1
      %s220 = scalar_select %p219, %s19, 1
      %p221 = scmp.lt.s32.totalorder %s218, 8
      %s222 = scalar_select %p221, %s218, 8
      %s223 = smul.addr %s220, 9
      %s224 = sadd.s32 %s222, %s223
      %s225 = smul.addr %s224, 4
      %s226 = scalar_lea.vmem %s4, %s225
      %s227 = smul.u32 9, %s20
      %v229 = vld [vmem:[%s216] sm:$0xff]
      %v230 = vld [vmem:[%s216 + $0x8] sm:$0xff]
      %v231 = vld [vmem:[%s216 + $0x10] sm:$0xff]
      %v232 = vld [vmem:[%s216 + $0x18] sm:$0xff]
      %v233 = vld [vmem:[%s216 + $0x20] sm:$0xf]
      %v234 = vld [vmem:[%s216] sm:$0xff]
      %v235 = vld [vmem:[%s216 + $0x8] sm:$0xff]
      %v236 = vld [vmem:[%s216 + $0x10] sm:$0xff]
      %v237 = vld [vmem:[%s216 + $0x18] sm:$0xff]
      %v238 = vld [vmem:[%s216 + $0x20] sm:$0xff]
      %v244 = vunpack.c.l.b16 %v229
      %v245 = vunpack.c.h.b16 %v229
      %v246 = vunpack.c.l.b16 %v230
      %v247 = vunpack.c.h.b16 %v230
      %v248 = vunpack.c.l.b16 %v231
      %v249 = vunpack.c.h.b16 %v231
      %v250 = vunpack.c.l.b16 %v232
      %v251 = vunpack.c.h.b16 %v232
      %v252 = vunpack.c.l.b16 %v233
      %v253 = vpack.c.b16 %v244, %v244
      %v254 = vpack.c.b16 %v245, %v245
      %v255 = vpack.c.b16 %v246, %v246
      %v256 = vpack.c.b16 %v247, %v247
      %v257 = vpack.c.b16 %v248, %v248
      %v258 = vpack.c.b16 %v249, %v249
      %v259 = vpack.c.b16 %v250, %v250
      %v260 = vpack.c.b16 %v251, %v251
      %v261 = vpack.c.b16 %v252, %v252
      %v267 = vunpack.c.l.b16 %v234
      %v268 = vunpack.c.h.b16 %v234
      %v269 = vunpack.c.l.b16 %v235
      %v270 = vunpack.c.h.b16 %v235
      %v271 = vunpack.c.l.b16 %v236
      %v272 = vunpack.c.h.b16 %v236
      %v273 = vunpack.c.l.b16 %v237
      %v274 = vunpack.c.h.b16 %v237
      %v275 = vunpack.c.l.b16 %v238
      %v276 = vunpack.c.h.b16 %v238
      %v277 = vpack.c.b16 %v267, %v267
      %v278 = vpack.c.b16 %v268, %v268
      %v279 = vpack.c.b16 %v269, %v269
      %v280 = vpack.c.b16 %v270, %v270
      %v281 = vpack.c.b16 %v271, %v271
      %v282 = vpack.c.b16 %v272, %v272
      %v283 = vpack.c.b16 %v273, %v273
      %v284 = vpack.c.b16 %v274, %v274
      %v285 = vpack.c.b16 %v275, %v275
      %v286 = vpack.c.b16 %v276, %v276
      %287 = vrot.lane.b32.xlu0 %v277, 127
      %v288 = vpop.permute.xlu0 %287
      %289 = vrot.lane.b32.xlu0 %v278, 127
      %v290 = vpop.permute.xlu0 %289
      %291 = vrot.lane.b32.xlu0 %v279, 127
      %v292 = vpop.permute.xlu0 %291
      %293 = vrot.lane.b32.xlu0 %v280, 127
      %v294 = vpop.permute.xlu0 %293
      %295 = vrot.lane.b32.xlu0 %v281, 127
      %v296 = vpop.permute.xlu0 %295
      %297 = vrot.lane.b32.xlu0 %v282, 127
      %v298 = vpop.permute.xlu0 %297
      %299 = vrot.lane.b32.xlu0 %v283, 127
      %v300 = vpop.permute.xlu0 %299
      %301 = vrot.lane.b32.xlu0 %v284, 127
      %v302 = vpop.permute.xlu0 %301
      %303 = vrot.lane.b32.xlu0 %v285, 127
      %v304 = vpop.permute.xlu0 %303
      %305 = vrot.lane.b32.xlu0 %v286, 127
      %v306 = vpop.permute.xlu0 %305
      %vm307 = vcmask 1039360
      %v308 = vsel %vm307, %v288, %v290
      %v309 = vsel %vm307, %v290, %v292
      %v310 = vsel %vm307, %v292, %v294
      %v311 = vsel %vm307, %v294, %v296
      %v312 = vsel %vm307, %v296, %v298
      %v313 = vsel %vm307, %v298, %v300
      %v314 = vsel %vm307, %v300, %v302
      %v315 = vsel %vm307, %v302, %v304
      %v316 = vsel %vm307, %v304, %v306
      %317 = vrot.lane.b32.xlu0 %v277, 126
      %v318 = vpop.permute.xlu0 %317
      %319 = vrot.lane.b32.xlu0 %v278, 126
      %v320 = vpop.permute.xlu0 %319
      %321 = vrot.lane.b32.xlu0 %v279, 126
      %v322 = vpop.permute.xlu0 %321
      %323 = vrot.lane.b32.xlu0 %v280, 126
      %v324 = vpop.permute.xlu0 %323
      %325 = vrot.lane.b32.xlu0 %v281, 126
      %v326 = vpop.permute.xlu0 %325
      %327 = vrot.lane.b32.xlu0 %v282, 126
      %v328 = vpop.permute.xlu0 %327
      %329 = vrot.lane.b32.xlu0 %v283, 126
      %v330 = vpop.permute.xlu0 %329
      %331 = vrot.lane.b32.xlu0 %v284, 126
      %v332 = vpop.permute.xlu0 %331
      %333 = vrot.lane.b32.xlu0 %v285, 126
      %v334 = vpop.permute.xlu0 %333
      %335 = vrot.lane.b32.xlu0 %v286, 126
      %v336 = vpop.permute.xlu0 %335
      %vm337 = vcmask 1031168
      %v338 = vsel %vm337, %v318, %v320
      %v339 = vsel %vm337, %v320, %v322
      %v340 = vsel %vm337, %v322, %v324
      %v341 = vsel %vm337, %v324, %v326
      %v342 = vsel %vm337, %v326, %v328
      %v343 = vsel %vm337, %v328, %v330
      %v344 = vsel %vm337, %v330, %v332
      %v345 = vsel %vm337, %v332, %v334
      %v346 = vsel %vm337, %v334, %v336
      %347 = vrot.lane.b32.xlu0 %v277, 94
      %v348 = vpop.permute.xlu0 %347
      %349 = vrot.lane.b32.xlu0 %v278, 94
      %v350 = vpop.permute.xlu0 %349
      %351 = vrot.lane.b32.xlu0 %v279, 94
      %v352 = vpop.permute.xlu0 %351
      %353 = vrot.lane.b32.xlu0 %v280, 94
      %v354 = vpop.permute.xlu0 %353
      %355 = vrot.lane.b32.xlu0 %v281, 94
      %v356 = vpop.permute.xlu0 %355
      %357 = vrot.lane.b32.xlu0 %v282, 94
      %v358 = vpop.permute.xlu0 %357
      %359 = vrot.lane.b32.xlu0 %v283, 94
      %v360 = vpop.permute.xlu0 %359
      %361 = vrot.lane.b32.xlu0 %v284, 94
      %v362 = vpop.permute.xlu0 %361
      %363 = vrot.lane.b32.xlu0 %v285, 94
      %v364 = vpop.permute.xlu0 %363
      %365 = vrot.lane.b32.xlu0 %v286, 94
      %v366 = vpop.permute.xlu0 %365
      %vm367 = vcmask 769024
      %v368 = vsel %vm367, %v348, %v350
      %v369 = vsel %vm367, %v350, %v352
      %v370 = vsel %vm367, %v352, %v354
      %v371 = vsel %vm367, %v354, %v356
      %v372 = vsel %vm367, %v356, %v358
      %v373 = vsel %vm367, %v358, %v360
      %v374 = vsel %vm367, %v360, %v362
      %v375 = vsel %vm367, %v362, %v364
      %v376 = vsel %vm367, %v364, %v366
      %377 = vrot.lane.b32.xlu0 %v277, 93
      %v378 = vpop.permute.xlu0 %377
      %379 = vrot.lane.b32.xlu0 %v278, 93
      %v380 = vpop.permute.xlu0 %379
      %381 = vrot.lane.b32.xlu0 %v279, 93
      %v382 = vpop.permute.xlu0 %381
      %383 = vrot.lane.b32.xlu0 %v280, 93
      %v384 = vpop.permute.xlu0 %383
      %385 = vrot.lane.b32.xlu0 %v281, 93
      %v386 = vpop.permute.xlu0 %385
      %387 = vrot.lane.b32.xlu0 %v282, 93
      %v388 = vpop.permute.xlu0 %387
      %389 = vrot.lane.b32.xlu0 %v283, 93
      %v390 = vpop.permute.xlu0 %389
      %391 = vrot.lane.b32.xlu0 %v284, 93
      %v392 = vpop.permute.xlu0 %391
      %393 = vrot.lane.b32.xlu0 %v285, 93
      %v394 = vpop.permute.xlu0 %393
      %395 = vrot.lane.b32.xlu0 %v286, 93
      %v396 = vpop.permute.xlu0 %395
      %vm397 = vcmask 760832
      %v398 = vsel %vm397, %v378, %v380
      %v399 = vsel %vm397, %v380, %v382
      %v400 = vsel %vm397, %v382, %v384
      %v401 = vsel %vm397, %v384, %v386
      %v402 = vsel %vm397, %v386, %v388
      %v403 = vsel %vm397, %v388, %v390
      %v404 = vsel %vm397, %v390, %v392
      %v405 = vsel %vm397, %v392, %v394
      %v406 = vsel %vm397, %v394, %v396
      %407 = vrot.lane.b32.xlu0 %v277, 92
      %v408 = vpop.permute.xlu0 %407
      %409 = vrot.lane.b32.xlu0 %v278, 92
      %v410 = vpop.permute.xlu0 %409
      %411 = vrot.lane.b32.xlu0 %v279, 92
      %v412 = vpop.permute.xlu0 %411
      %413 = vrot.lane.b32.xlu0 %v280, 92
      %v414 = vpop.permute.xlu0 %413
      %415 = vrot.lane.b32.xlu0 %v281, 92
      %v416 = vpop.permute.xlu0 %415
      %417 = vrot.lane.b32.xlu0 %v282, 92
      %v418 = vpop.permute.xlu0 %417
      %419 = vrot.lane.b32.xlu0 %v283, 92
      %v420 = vpop.permute.xlu0 %419
      %421 = vrot.lane.b32.xlu0 %v284, 92
      %v422 = vpop.permute.xlu0 %421
      %423 = vrot.lane.b32.xlu0 %v285, 92
      %v424 = vpop.permute.xlu0 %423
      %425 = vrot.lane.b32.xlu0 %v286, 92
      %v426 = vpop.permute.xlu0 %425
      %vm427 = vcmask 752640
      %v428 = vsel %vm427, %v408, %v410
      %v429 = vsel %vm427, %v410, %v412
      %v430 = vsel %vm427, %v412, %v414
      %v431 = vsel %vm427, %v414, %v416
      %v432 = vsel %vm427, %v416, %v418
      %v433 = vsel %vm427, %v418, %v420
      %v434 = vsel %vm427, %v420, %v422
      %v435 = vsel %vm427, %v422, %v424
      %v436 = vsel %vm427, %v424, %v426
      %437 = vrot.lane.b32.xlu0 %v277, 60
      %v438 = vpop.permute.xlu0 %437
      %439 = vrot.lane.b32.xlu0 %v278, 60
      %v440 = vpop.permute.xlu0 %439
      %441 = vrot.lane.b32.xlu0 %v279, 60
      %v442 = vpop.permute.xlu0 %441
      %443 = vrot.lane.b32.xlu0 %v280, 60
      %v444 = vpop.permute.xlu0 %443
      %445 = vrot.lane.b32.xlu0 %v281, 60
      %v446 = vpop.permute.xlu0 %445
      %447 = vrot.lane.b32.xlu0 %v282, 60
      %v448 = vpop.permute.xlu0 %447
      %449 = vrot.lane.b32.xlu0 %v283, 60
      %v450 = vpop.permute.xlu0 %449
      %451 = vrot.lane.b32.xlu0 %v284, 60
      %v452 = vpop.permute.xlu0 %451
      %453 = vrot.lane.b32.xlu0 %v285, 60
      %v454 = vpop.permute.xlu0 %453
      %455 = vrot.lane.b32.xlu0 %v286, 60
      %v456 = vpop.permute.xlu0 %455
      %vm457 = vcmask 490496
      %v458 = vsel %vm457, %v438, %v440
      %v459 = vsel %vm457, %v440, %v442
      %v460 = vsel %vm457, %v442, %v444
      %v461 = vsel %vm457, %v444, %v446
      %v462 = vsel %vm457, %v446, %v448
      %v463 = vsel %vm457, %v448, %v450
      %v464 = vsel %vm457, %v450, %v452
      %v465 = vsel %vm457, %v452, %v454
      %v466 = vsel %vm457, %v454, %v456
      %467 = vrot.lane.b32.xlu0 %v277, 59
      %v468 = vpop.permute.xlu0 %467
      %469 = vrot.lane.b32.xlu0 %v278, 59
      %v470 = vpop.permute.xlu0 %469
      %471 = vrot.lane.b32.xlu0 %v279, 59
      %v472 = vpop.permute.xlu0 %471
      %473 = vrot.lane.b32.xlu0 %v280, 59
      %v474 = vpop.permute.xlu0 %473
      %475 = vrot.lane.b32.xlu0 %v281, 59
      %v476 = vpop.permute.xlu0 %475
      %477 = vrot.lane.b32.xlu0 %v282, 59
      %v478 = vpop.permute.xlu0 %477
      %479 = vrot.lane.b32.xlu0 %v283, 59
      %v480 = vpop.permute.xlu0 %479
      %481 = vrot.lane.b32.xlu0 %v284, 59
      %v482 = vpop.permute.xlu0 %481
      %483 = vrot.lane.b32.xlu0 %v285, 59
      %v484 = vpop.permute.xlu0 %483
      %485 = vrot.lane.b32.xlu0 %v286, 59
      %v486 = vpop.permute.xlu0 %485
      %vm487 = vcmask 482304
      %v488 = vsel %vm487, %v468, %v470
      %v489 = vsel %vm487, %v470, %v472
      %v490 = vsel %vm487, %v472, %v474
      %v491 = vsel %vm487, %v474, %v476
      %v492 = vsel %vm487, %v476, %v478
      %v493 = vsel %vm487, %v478, %v480
      %v494 = vsel %vm487, %v480, %v482
      %v495 = vsel %vm487, %v482, %v484
      %v496 = vsel %vm487, %v484, %v486
      %497 = vrot.lane.b32.xlu0 %v277, 58
      %v498 = vpop.permute.xlu0 %497
      %499 = vrot.lane.b32.xlu0 %v278, 58
      %v500 = vpop.permute.xlu0 %499
      %501 = vrot.lane.b32.xlu0 %v279, 58
      %v502 = vpop.permute.xlu0 %501
      %503 = vrot.lane.b32.xlu0 %v280, 58
      %v504 = vpop.permute.xlu0 %503
      %505 = vrot.lane.b32.xlu0 %v281, 58
      %v506 = vpop.permute.xlu0 %505
      %507 = vrot.lane.b32.xlu0 %v282, 58
      %v508 = vpop.permute.xlu0 %507
      %509 = vrot.lane.b32.xlu0 %v283, 58
      %v510 = vpop.permute.xlu0 %509
      %511 = vrot.lane.b32.xlu0 %v284, 58
      %v512 = vpop.permute.xlu0 %511
      %513 = vrot.lane.b32.xlu0 %v285, 58
      %v514 = vpop.permute.xlu0 %513
      %515 = vrot.lane.b32.xlu0 %v286, 58
      %v516 = vpop.permute.xlu0 %515
      %vm517 = vcmask 474112
      %v518 = vsel %vm517, %v498, %v500
      %v519 = vsel %vm517, %v500, %v502
      %v520 = vsel %vm517, %v502, %v504
      %v521 = vsel %vm517, %v504, %v506
      %v522 = vsel %vm517, %v506, %v508
      %v523 = vsel %vm517, %v508, %v510
      %v524 = vsel %vm517, %v510, %v512
      %v525 = vsel %vm517, %v512, %v514
      %v526 = vsel %vm517, %v514, %v516
      %vm527 = vcmask 1043456
      %v530 = vsel %vm527, %v253, %v308
      %v534 = vsel %vm527, %v254, %v309
      %v538 = vsel %vm527, %v255, %v310
      %v542 = vsel %vm527, %v256, %v311
      %v546 = vsel %vm527, %v257, %v312
      %v550 = vsel %vm527, %v258, %v313
      %v554 = vsel %vm527, %v259, %v314
      %v558 = vsel %vm527, %v260, %v315
      %v562 = vsel %vm527, %v261, %v316
      %v566 = vsel %vm527, %v338, %v368
      %v570 = vsel %vm527, %v339, %v369
      %v574 = vsel %vm527, %v340, %v370
      %v578 = vsel %vm527, %v341, %v371
      %v582 = vsel %vm527, %v342, %v372
      %v586 = vsel %vm527, %v343, %v373
      %v590 = vsel %vm527, %v344, %v374
      %v594 = vsel %vm527, %v345, %v375
      %v598 = vsel %vm527, %v346, %v376
      %v602 = vsel %vm527, %v398, %v428
      %v606 = vsel %vm527, %v399, %v429
      %v610 = vsel %vm527, %v400, %v430
      %v614 = vsel %vm527, %v401, %v431
      %v618 = vsel %vm527, %v402, %v432
      %v622 = vsel %vm527, %v403, %v433
      %v626 = vsel %vm527, %v404, %v434
      %v630 = vsel %vm527, %v405, %v435
      %v634 = vsel %vm527, %v406, %v436
      %v638 = vsel %vm527, %v458, %v488
      %v642 = vsel %vm527, %v459, %v489
      %v646 = vsel %vm527, %v460, %v490
      %v650 = vsel %vm527, %v461, %v491
      %v654 = vsel %vm527, %v462, %v492
      %v658 = vsel %vm527, %v463, %v493
      %v662 = vsel %vm527, %v464, %v494
      %v666 = vsel %vm527, %v465, %v495
      %v670 = vsel %vm527, %v466, %v496
      %v672 = vld [vmem:[%s1] sm:$0x7]
      %vm673 = vcmask 588800
      %v675 = vsel %vm673, %v672, 0
      %v678 = vsel %vm527, %v518, 0
      %v681 = vsel %vm527, %v519, 0
      %v684 = vsel %vm527, %v520, 0
      %v687 = vsel %vm527, %v521, 0
      %v690 = vsel %vm527, %v522, 0
      %v693 = vsel %vm527, %v523, 0
      %v696 = vsel %vm527, %v524, 0
      %v699 = vsel %vm527, %v525, 0
      %v702 = vsel %vm527, %v526, 0
      %704 = vmatpush.bf16.msra.mxu0 0
      %705 = vmatpush.bf16.msra.mxu0 0
      %706 = vmatpush.bf16.msra.mxu0 0
      %707 = vmatpush.bf16.msra.mxu0 %v678
      %708 = vmatpush.bf16.msra.mxu0 %v638
      %709 = vmatpush.bf16.msra.mxu0 %v602
      %710 = vmatpush.bf16.msra.mxu0 %v566
      %711 = vmatpush.bf16.msra.mxu0 %v530
      %712 = vmatmul.bf16.gmra.mxu0 %v675
      %v713 = vpop.f32.mrf.mxu0
      %v714 = vadd.f32 0.0, %v713
      %v715 = vpop.f32.mrf.mxu0
      %716 = vdwg.mxu0
      %717 = vmatpush.bf16.msra.mxu0 0
      %718 = vmatpush.bf16.msra.mxu0 0
      %719 = vmatpush.bf16.msra.mxu0 0
      %720 = vmatpush.bf16.msra.mxu0 %v681
      %721 = vmatpush.bf16.msra.mxu0 %v642
      %722 = vmatpush.bf16.msra.mxu0 %v606
      %723 = vmatpush.bf16.msra.mxu0 %v570
      %724 = vmatpush.bf16.msra.mxu0 %v534
      %725 = vmatmul.bf16.gmra.mxu0 %v675
      %v726 = vpop.f32.mrf.mxu0
      %v727 = vadd.f32 0.0, %v726
      %v728 = vpop.f32.mrf.mxu0
      %729 = vdwg.mxu0
      %730 = vmatpush.bf16.msra.mxu0 0
      %731 = vmatpush.bf16.msra.mxu0 0
      %732 = vmatpush.bf16.msra.mxu0 0
      %733 = vmatpush.bf16.msra.mxu0 %v684
      %734 = vmatpush.bf16.msra.mxu0 %v646
      %735 = vmatpush.bf16.msra.mxu0 %v610
      %736 = vmatpush.bf16.msra.mxu0 %v574
      %737 = vmatpush.bf16.msra.mxu0 %v538
      %738 = vmatmul.bf16.gmra.mxu0 %v675
      %v739 = vpop.f32.mrf.mxu0
      %v740 = vadd.f32 0.0, %v739
      %v741 = vpop.f32.mrf.mxu0
      %742 = vdwg.mxu0
      %743 = vmatpush.bf16.msra.mxu0 0
      %744 = vmatpush.bf16.msra.mxu0 0
      %745 = vmatpush.bf16.msra.mxu0 0
      %746 = vmatpush.bf16.msra.mxu0 %v687
      %747 = vmatpush.bf16.msra.mxu0 %v650
      %748 = vmatpush.bf16.msra.mxu0 %v614
      %749 = vmatpush.bf16.msra.mxu0 %v578
      %750 = vmatpush.bf16.msra.mxu0 %v542
      %751 = vmatmul.bf16.gmra.mxu0 %v675
      %v752 = vpop.f32.mrf.mxu0
      %v753 = vadd.f32 0.0, %v752
      %v754 = vpop.f32.mrf.mxu0
      %755 = vdwg.mxu0
      %756 = vmatpush.bf16.msra.mxu0 0
      %757 = vmatpush.bf16.msra.mxu0 0
      %758 = vmatpush.bf16.msra.mxu0 0
      %759 = vmatpush.bf16.msra.mxu0 %v690
      %760 = vmatpush.bf16.msra.mxu0 %v654
      %761 = vmatpush.bf16.msra.mxu0 %v618
      %762 = vmatpush.bf16.msra.mxu0 %v582
      %763 = vmatpush.bf16.msra.mxu0 %v546
      %764 = vmatmul.bf16.gmra.mxu0 %v675
      %v765 = vpop.f32.mrf.mxu0
      %v766 = vadd.f32 0.0, %v765
      %v767 = vpop.f32.mrf.mxu0
      %768 = vdwg.mxu0
      %769 = vmatpush.bf16.msra.mxu0 0
      %770 = vmatpush.bf16.msra.mxu0 0
      %771 = vmatpush.bf16.msra.mxu0 0
      %772 = vmatpush.bf16.msra.mxu0 %v693
      %773 = vmatpush.bf16.msra.mxu0 %v658
      %774 = vmatpush.bf16.msra.mxu0 %v622
      %775 = vmatpush.bf16.msra.mxu0 %v586
      %776 = vmatpush.bf16.msra.mxu0 %v550
      %777 = vmatmul.bf16.gmra.mxu0 %v675
      %v778 = vpop.f32.mrf.mxu0
      %v779 = vadd.f32 0.0, %v778
      %v780 = vpop.f32.mrf.mxu0
      %781 = vdwg.mxu0
      %782 = vmatpush.bf16.msra.mxu0 0
      %783 = vmatpush.bf16.msra.mxu0 0
      %784 = vmatpush.bf16.msra.mxu0 0
      %785 = vmatpush.bf16.msra.mxu0 %v696
      %786 = vmatpush.bf16.msra.mxu0 %v662
      %787 = vmatpush.bf16.msra.mxu0 %v626
      %788 = vmatpush.bf16.msra.mxu0 %v590
      %789 = vmatpush.bf16.msra.mxu0 %v554
      %790 = vmatmul.bf16.gmra.mxu0 %v675
      %v791 = vpop.f32.mrf.mxu0
      %v792 = vadd.f32 0.0, %v791
      %v793 = vpop.f32.mrf.mxu0
      %794 = vdwg.mxu0
      %795 = vmatpush.bf16.msra.mxu0 0
      %796 = vmatpush.bf16.msra.mxu0 0
      %797 = vmatpush.bf16.msra.mxu0 0
      %798 = vmatpush.bf16.msra.mxu0 %v699
      %799 = vmatpush.bf16.msra.mxu0 %v666
      %800 = vmatpush.bf16.msra.mxu0 %v630
      %801 = vmatpush.bf16.msra.mxu0 %v594
      %802 = vmatpush.bf16.msra.mxu0 %v558
      %803 = vmatmul.bf16.gmra.mxu0 %v675
      %v804 = vpop.f32.mrf.mxu0
      %v805 = vadd.f32 0.0, %v804
      %v806 = vpop.f32.mrf.mxu0
      %807 = vdwg.mxu0
      %808 = vmatpush.bf16.msra.mxu0 0
      %809 = vmatpush.bf16.msra.mxu0 0
      %810 = vmatpush.bf16.msra.mxu0 0
      %811 = vmatpush.bf16.msra.mxu0 %v702
      %812 = vmatpush.bf16.msra.mxu0 %v670
      %813 = vmatpush.bf16.msra.mxu0 %v634
      %814 = vmatpush.bf16.msra.mxu0 %v598
      %815 = vmatpush.bf16.msra.mxu0 %v562
      %816 = vmatmul.bf16.gmra.mxu0 %v675
      %v817 = vpop.f32.mrf.mxu0
      %v818 = vadd.f32 0.0, %v817
      %v819 = vpop.f32.mrf.mxu0
      %820 = vdwg.mxu0
      %v821 = vld [vmem:[%s2] sm:$0x3f]
      %823 = vset.pattern.permute.xlu0 0
      %824 = vperm.xlu0 %823, %v821
      %v825 = vpop.permute.xlu0 %824
      %v827 = vmul.f32 %v714, %v825
      %v828 = vmul.f32 %v727, %v825
      %v829 = vmul.f32 %v740, %v825
      %v830 = vmul.f32 %v753, %v825
      %v831 = vmul.f32 %v766, %v825
      %v832 = vmul.f32 %v779, %v825
      %v833 = vmul.f32 %v792, %v825
      %v834 = vmul.f32 %v805, %v825
      %v835 = vmul.f32 %v818, %v825
      %v836 = vld [vmem:[%s3] sm:$0x3f]
      %838 = vset.pattern.permute.xlu0 0
      %839 = vperm.xlu0 %838, %v836
      %v840 = vpop.permute.xlu0 %839
      %v842 = vadd.f32 %v827, %v840
      %v843 = vadd.f32 %v828, %v840
      %v844 = vadd.f32 %v829, %v840
      %v845 = vadd.f32 %v830, %v840
      %v846 = vadd.f32 %v831, %v840
      %v847 = vadd.f32 %v832, %v840
      %v848 = vadd.f32 %v833, %v840
      %v849 = vadd.f32 %v834, %v840
      %v850 = vadd.f32 %v835, %v840
      %v851 = vmax.f32 %v842, 0.0
      %v852 = vmax.f32 %v843, 0.0
      %v853 = vmax.f32 %v844, 0.0
      %v854 = vmax.f32 %v845, 0.0
      %v855 = vmax.f32 %v846, 0.0
      %v856 = vmax.f32 %v847, 0.0
      %v857 = vmax.f32 %v848, 0.0
      %v858 = vmax.f32 %v849, 0.0
      %v859 = vmax.f32 %v850, 0.0
      %v860 = vpack.c.bf16 %v852, %v851
      %v861 = vpack.c.bf16 %v854, %v853
      %v862 = vpack.c.bf16 %v856, %v855
      %v863 = vpack.c.bf16 %v858, %v857
      %v864 = vpack.c.bf16 %v859, %v859
      %865 = vst [vmem:[%s226] sm:$0x77] %v860
      %866 = vst [vmem:[%s226 + $0x8] sm:$0x77] %v861
      %867 = vst [vmem:[%s226 + $0x10] sm:$0x77] %v862
      %868 = vst [vmem:[%s226 + $0x18] sm:$0x77] %v863
      %869 = vst [vmem:[%s226 + $0x20] sm:$0x7] %v864
      %s870 = smul.u32 9, %s20
      %p871 = scmp.lt.s32.totalorder %s19, 1
      %s872 = scalar_select %p871, %s19, 1
      %p873 = scmp.lt.s32.totalorder %s870, 8
      %s874 = scalar_select %p873, %s870, 8
      %s875 = smul.addr %s872, 9
      %s876 = sadd.s32 %s874, %s875
      %s877 = smul.addr %s876, 4
      %s878 = scalar_lea.vmem %s4, %s877
      // Predicated region
      $region37: #{gunet_forward.5} parent=35 // pred_check
        %p879 = pneg %p138
      $region38: #{gunet_forward.5} parent=35 // pred_check_branch
        %881 = sbr.rel (%p879) target = $region40
      $region39: #{gunet_forward.5} parent=35 // pred_region
        %s882 = smul.u32 9, %s20
      $region40: #{gunet_forward.5} parent=35 // pred_fallthru
        _
    $region36: #{gunet_forward.5} parent=5 // pred_fallthru
      _
    %p883 = scmp.le.s32.totalorder 2, %s10
    // Predicated region
    $region41: #{gunet_forward.5} parent=5 // pred_check
      %p884 = pneg %p883
    $region42: #{gunet_forward.5} parent=5 // pred_check_branch
      %886 = sbr.rel (%p884) target = $region44
    $region43: #{gunet_forward.5} parent=5 // pred_region
      %s887 = ssub.s32 %s10, 2
      // Predicated region
      $region45: #{gunet_forward.5} parent=43 // pred_check
        %p888 = pneg %p144
      $region46: #{gunet_forward.5} parent=43 // pred_check_branch
        %890 = sbr.rel (%p888) target = $region48
      $region47: #{gunet_forward.5} parent=43 // pred_region
        %s891 = smul.u32 9, %s22
        %p892 = scmp.lt.s32.totalorder %s21, 1
        %s893 = scalar_select %p892, %s21, 1
        %p894 = scmp.lt.s32.totalorder %s891, 8
        %s895 = scalar_select %p894, %s891, 8
        %s896 = smul.addr %s893, 9
        %s897 = sadd.s32 %s895, %s896
        %s898 = smul.addr %s897, 4
        %s899 = scalar_lea.vmem %s4, %s898
      $region48: #{gunet_forward.5} parent=43 // pred_fallthru
        _
    $region44: #{gunet_forward.5} parent=5 // pred_fallthru
      _
  $region6: #{gunet_forward.5} parent=0 // loop_footer
    %s14 = sadd.s32 1, %s10
  $region7: #{gunet_forward.5} parent=0 // loop_footer_branch
    %9 = sbr.rel target = $region3
  $region8: #{gunet_forward.5} parent=0 // loop_exit
    _

// kernel: gunet_forward.6
$region0: #{gunet_forward.6}
  #allocation0 [shape = 'u32[]', space=smem, size = 0x4, offset = 0x4, fixed_abs, tag = 'smem constant byte address 0x4 - core index']
  #allocation1 [shape = 'u32[72,128]{1,0:T(1,128)}', space=vmem, size = 0x9000, scoped, tag = 'internal scratch']
  %s0 = inlined_call_operand.vmem [shape: bf16[2,8,1280], index: 0, kind: input, shape index: {}]
  %s1 = inlined_call_operand.vmem [shape: bf16[8,72], index: 1, kind: input, shape index: {}]
  %s2 = inlined_call_operand.vmem [shape: f32[8,1], index: 2, kind: input, shape index: {}]
  %s3 = inlined_call_operand.vmem [shape: f32[8,1], index: 3, kind: input, shape index: {}]
  %s4 = inlined_call_operand.vmem [shape: bf16[2,8,1152], index: 4, kind: output, shape index: {}]
  %s5 = sld [smem:[#allocation0]]
  $region49: #{gunet_forward.6} parent=0
    _
  %s7 = ssub.s32 1, %s5
  %s8 = scalar_select 0, %s7, %s5
  loop: start=0, step=1, limit=4
  $region2: #{gunet_forward.6} parent=0 // loop_pre_header
    _
  $region3: #{gunet_forward.6} parent=0 // loop_header
    %s10 = sphi 0, %s14
    %p11 = scmp.ge.s32.totalorder %s10, 4
    %s17 = sphi 0, %s29
    %s18 = sphi 0, %s25
    %s19 = sphi 0, %s17
    %s20 = sphi 0, %s18
    %s21 = sphi 0, %s19
    %s22 = sphi 0, %s20
    %s34 = sphi 0, %s36
    %s37 = sphi 0, %s34
    %s38 = sphi 0, %s37
    %s54 = sphi 0, %s38
    %s58 = sphi 0, %s58
    %s60 = sphi 0, %s58
    %s61 = sphi 0, %s60
    %s75 = sphi 0, %s61
    %s79 = sphi 0, %s79
    %s81 = sphi 0, %s79
    %s82 = sphi 0, %s81
    %s96 = sphi 0, %s82
    %s100 = sphi 0, %s100
    %s102 = sphi 0, %s100
    %s103 = sphi 0, %s102
    %s117 = sphi 0, %s103
    %s125 = sphi 0, %s127
    %s128 = sphi 0, %s125
    %s129 = sphi 0, %s128
    %s145 = sphi 0, %s129
  $region4: #{gunet_forward.6} parent=0 // loop_header_branch
    %13 = sbr.rel (%p11) target = $region8
  $region5: #{gunet_forward.6} parent=0 // loop_body
    %s15 = ssub.s32 %s10, 1
    %s16 = ssub.s32 %s10, 2
    %s23 = sadd.s32 1, %s18
    %p24 = scmp.ge.s32.totalorder %s23, 1
    %s25 = scalar_select %p24, 0, %s23
    %s26 = sadd.s32 1, %s17
    %s27 = scalar_select %p24, %s26, %s17
    %p28 = scmp.ge.s32.totalorder %s27, 2
    %s29 = scalar_select %p28, 0, %s27
    %s30 = sadd.s32 %s17, %s18
    %s31 = sadd.s32 %s29, %s25
    %s32 = ssub.s32 %s30, %s31
    %p33 = scmp.eq.s32.totalorder %s32, 0
    %s35 = sadd.s32 %s34, 1
    %s36 = scalar_select %p33, %s34, %s35
    %p39 = pneg %p33
    %p40 = scmp.eq.s32.totalorder %s10, 1
    %p41 = por %p39, %p40
    %p42 = scmp.ne.s32.totalorder %s34, %s37
    %p43 = scmp.eq.s32.totalorder %s10, 0
    %p44 = por %p42, %p43
    %p45 = scmp.ne.s32.totalorder %s34, %s37
    %p46 = scmp.eq.s32.totalorder %s15, 1
    %p47 = por %p45, %p46
    %p48 = scmp.ne.s32.totalorder %s37, %s38
    %p49 = scmp.eq.s32.totalorder %s15, 0
    %p50 = por %p48, %p49
    %p51 = scmp.ne.s32.totalorder %s37, %s38
    %p52 = scmp.eq.s32.totalorder %s16, 1
    %p53 = por %p51, %p52
    %p55 = scmp.ne.s32.totalorder %s38, %s54
    %p56 = scmp.eq.s32.totalorder %s16, 0
    %p57 = por %p55, %p56
    %s59 = sadd.s32 %s58, 1
    %p62 = scmp.eq.s32.totalorder %s10, 1
    %p63 = scmp.ne.s32.totalorder %s58, %s60
    %p64 = scmp.eq.s32.totalorder %s10, 0
    %p65 = por %p63, %p64
    %p66 = scmp.ne.s32.totalorder %s58, %s60
    %p67 = scmp.eq.s32.totalorder %s15, 1
    %p68 = por %p66, %p67
    %p69 = scmp.ne.s32.totalorder %s60, %s61
    %p70 = scmp.eq.s32.totalorder %s15, 0
    %p71 = por %p69, %p70
    %p72 = scmp.ne.s32.totalorder %s60, %s61
    %p73 = scmp.eq.s32.totalorder %s16, 1
    %p74 = por %p72, %p73
    %p76 = scmp.ne.s32.totalorder %s61, %s75
    %p77 = scmp.eq.s32.totalorder %s16, 0
    %p78 = por %p76, %p77
    %s80 = sadd.s32 %s79, 1
    %p83 = scmp.eq.s32.totalorder %s10, 1
    %p84 = scmp.ne.s32.totalorder %s79, %s81
    %p85 = scmp.eq.s32.totalorder %s10, 0
    %p86 = por %p84, %p85
    %p87 = scmp.ne.s32.totalorder %s79, %s81
    %p88 = scmp.eq.s32.totalorder %s15, 1
    %p89 = por %p87, %p88
    %p90 = scmp.ne.s32.totalorder %s81, %s82
    %p91 = scmp.eq.s32.totalorder %s15, 0
    %p92 = por %p90, %p91
    %p93 = scmp.ne.s32.totalorder %s81, %s82
    %p94 = scmp.eq.s32.totalorder %s16, 1
    %p95 = por %p93, %p94
    %p97 = scmp.ne.s32.totalorder %s82, %s96
    %p98 = scmp.eq.s32.totalorder %s16, 0
    %p99 = por %p97, %p98
    %s101 = sadd.s32 %s100, 1
    %p104 = scmp.eq.s32.totalorder %s10, 1
    %p105 = scmp.ne.s32.totalorder %s100, %s102
    %p106 = scmp.eq.s32.totalorder %s10, 0
    %p107 = por %p105, %p106
    %p108 = scmp.ne.s32.totalorder %s100, %s102
    %p109 = scmp.eq.s32.totalorder %s15, 1
    %p110 = por %p108, %p109
    %p111 = scmp.ne.s32.totalorder %s102, %s103
    %p112 = scmp.eq.s32.totalorder %s15, 0
    %p113 = por %p111, %p112
    %p114 = scmp.ne.s32.totalorder %s102, %s103
    %p115 = scmp.eq.s32.totalorder %s16, 1
    %p116 = por %p114, %p115
    %p118 = scmp.ne.s32.totalorder %s103, %s117
    %p119 = scmp.eq.s32.totalorder %s16, 0
    %p120 = por %p118, %p119
    %s121 = ssub.s32 %s17, %s29
    %s122 = ssub.s32 %s18, %s25
    %s123 = sor.u32 %s121, %s122
    %p124 = scmp.eq.s32.totalorder %s123, 0
    %s126 = sadd.s32 %s125, 1
    %s127 = scalar_select %p124, %s125, %s126
    %p130 = pneg %p124
    %p131 = scmp.eq.s32.totalorder %s10, 1
    %p132 = por %p130, %p131
    %p133 = scmp.ne.s32.totalorder %s125, %s128
    %p134 = scmp.eq.s32.totalorder %s10, 0
    %p135 = por %p133, %p134
    %p136 = scmp.ne.s32.totalorder %s125, %s128
    %p137 = scmp.eq.s32.totalorder %s15, 1
    %p138 = por %p136, %p137
    %p139 = scmp.ne.s32.totalorder %s128, %s129
    %p140 = scmp.eq.s32.totalorder %s15, 0
    %p141 = por %p139, %p140
    %p142 = scmp.ne.s32.totalorder %s128, %s129
    %p143 = scmp.eq.s32.totalorder %s16, 1
    %p144 = por %p142, %p143
    %p146 = scmp.ne.s32.totalorder %s129, %s145
    %p147 = scmp.eq.s32.totalorder %s16, 0
    %p148 = por %p146, %p147
    %p149 = scmp.le.s32.totalorder 1, %s10
    %p150 = scmp.lt.s32.totalorder %s10, 3
    %p151 = pnand %p149, %p150
    %p152 = pneg %p151
    // Predicated region
    $region9: #{gunet_forward.6} parent=5 // pred_check
      _
    $region10: #{gunet_forward.6} parent=5 // pred_check_branch
      %154 = sbr.rel (%p151) target = $region12
    $region11: #{gunet_forward.6} parent=5 // pred_region
      %s155 = ssub.s32 %s10, 1
      // Predicated region
      $region13: #{gunet_forward.6} parent=11 // pred_check
        %p156 = pneg %p71
      $region14: #{gunet_forward.6} parent=11 // pred_check_branch
        %158 = sbr.rel (%p156) target = $region16
      $region15: #{gunet_forward.6} parent=11 // pred_region
        _
      $region16: #{gunet_forward.6} parent=11 // pred_fallthru
        _
      // Predicated region
      $region17: #{gunet_forward.6} parent=11 // pred_check
        %p159 = pneg %p92
      $region18: #{gunet_forward.6} parent=11 // pred_check_branch
        %161 = sbr.rel (%p159) target = $region20
      $region19: #{gunet_forward.6} parent=11 // pred_region
        _
      $region20: #{gunet_forward.6} parent=11 // pred_fallthru
        _
      // Predicated region
      $region21: #{gunet_forward.6} parent=11 // pred_check
        %p162 = pneg %p113
      $region22: #{gunet_forward.6} parent=11 // pred_check_branch
        %164 = sbr.rel (%p162) target = $region24
      $region23: #{gunet_forward.6} parent=11 // pred_region
        _
      $region24: #{gunet_forward.6} parent=11 // pred_fallthru
        _
    $region12: #{gunet_forward.6} parent=5 // pred_fallthru
      _
    %p165 = scmp.lt.s32.totalorder %s10, 2
    // Predicated region
    $region25: #{gunet_forward.6} parent=5 // pred_check
      %p166 = pneg %p165
    $region26: #{gunet_forward.6} parent=5 // pred_check_branch
      %168 = sbr.rel (%p166) target = $region28
    $region27: #{gunet_forward.6} parent=5 // pred_region
      // Predicated region
      $region29: #{gunet_forward.6} parent=27 // pred_check
        %p169 = pneg %p44
      $region30: #{gunet_forward.6} parent=27 // pred_check_branch
        %171 = sbr.rel (%p169) target = $region32
      $region31: #{gunet_forward.6} parent=27 // pred_region
        %s172 = sadd.s32 %s17, %s18
        %p173 = scmp.lt.s32.totalorder %s172, 1
        %s174 = scalar_select %p173, %s172, 1
        %s175 = smul.addr %s174, 10
        %s176 = smul.addr %s175, 4
        %s177 = scalar_lea.vmem %s0, %s176
        %s178 = sadd.s32 %s17, %s18
      $region32: #{gunet_forward.6} parent=27 // pred_fallthru
        _
    $region28: #{gunet_forward.6} parent=5 // pred_fallthru
      _
    %p179 = scmp.le.s32.totalorder 1, %s10
    %p180 = scmp.lt.s32.totalorder %s10, 3
    %p181 = pnand %p179, %p180
    %p182 = pneg %p181
    // Predicated region
    $region33: #{gunet_forward.6} parent=5 // pred_check
      _
    $region34: #{gunet_forward.6} parent=5 // pred_check_branch
      %184 = sbr.rel (%p181) target = $region36
    $region35: #{gunet_forward.6} parent=5 // pred_region
      %s185 = ssub.s32 %s10, 1
      %s186 = sadd.s32 %s19, %s20
      %p187 = scmp.lt.s32.totalorder %s186, 1
      %s188 = scalar_select %p187, %s186, 1
      %s189 = smul.addr %s188, 10
      %s190 = smul.addr %s189, 4
      %s191 = scalar_lea.vmem %s0, %s190
      %p192 = pneg %p50
      %p193 = pneg %p47
      %p194 = pneg %p71
      %p195 = pneg %p68
      %p196 = pneg %p92
      %p197 = pneg %p89
      %p198 = pneg %p113
      %p199 = pneg %p110
      %p200 = pneg %p141
      %p201 = pneg %p138
      %s202 = smul.u32 9, %s20
      %p203 = scmp.lt.s32.totalorder %s19, 1
      %s204 = scalar_select %p203, %s19, 1
      %p205 = scmp.lt.s32.totalorder %s202, 8
      %s206 = scalar_select %p205, %s202, 8
      %s207 = smul.addr %s204, 9
      %s208 = sadd.s32 %s206, %s207
      %s209 = smul.addr %s208, 4
      %s210 = scalar_lea.vmem %s4, %s209
      %s211 = sadd.s32 %s19, %s20
      %p212 = scmp.lt.s32.totalorder %s211, 1
      %s213 = scalar_select %p212, %s211, 1
      %s214 = smul.addr %s213, 10
      %s215 = smul.addr %s214, 4
      %s216 = scalar_lea.vmem %s0, %s215
      %s217 = sadd.s32 %s19, %s20
      %s218 = smul.u32 9, %s20
      %p219 = scmp.lt.s32.totalorder %s19, 1
      %s220 = scalar_select %p219, %s19, 1
      %p221 = scmp.lt.s32.totalorder %s218, 8
      %s222 = scalar_select %p221, %s218, 8
      %s223 = smul.addr %s220, 9
      %s224 = sadd.s32 %s222, %s223
      %s225 = smul.addr %s224, 4
      %s226 = scalar_lea.vmem %s4, %s225
      %s227 = smul.u32 9, %s20
      %v229 = vld [vmem:[%s216] sm:$0xff]
      %v230 = vld [vmem:[%s216 + $0x8] sm:$0xff]
      %v231 = vld [vmem:[%s216 + $0x10] sm:$0xff]
      %v232 = vld [vmem:[%s216 + $0x18] sm:$0xff]
      %v233 = vld [vmem:[%s216 + $0x20] sm:$0xf]
      %v234 = vld [vmem:[%s216] sm:$0xff]
      %v235 = vld [vmem:[%s216 + $0x8] sm:$0xff]
      %v236 = vld [vmem:[%s216 + $0x10] sm:$0xff]
      %v237 = vld [vmem:[%s216 + $0x18] sm:$0xff]
      %v238 = vld [vmem:[%s216 + $0x20] sm:$0xff]
      %v244 = vunpack.c.l.b16 %v229
      %v245 = vunpack.c.h.b16 %v229
      %v246 = vunpack.c.l.b16 %v230
      %v247 = vunpack.c.h.b16 %v230
      %v248 = vunpack.c.l.b16 %v231
      %v249 = vunpack.c.h.b16 %v231
      %v250 = vunpack.c.l.b16 %v232
      %v251 = vunpack.c.h.b16 %v232
      %v252 = vunpack.c.l.b16 %v233
      %v253 = vpack.c.b16 %v244, %v244
      %v254 = vpack.c.b16 %v245, %v245
      %v255 = vpack.c.b16 %v246, %v246
      %v256 = vpack.c.b16 %v247, %v247
      %v257 = vpack.c.b16 %v248, %v248
      %v258 = vpack.c.b16 %v249, %v249
      %v259 = vpack.c.b16 %v250, %v250
      %v260 = vpack.c.b16 %v251, %v251
      %v261 = vpack.c.b16 %v252, %v252
      %v267 = vunpack.c.l.b16 %v234
      %v268 = vunpack.c.h.b16 %v234
      %v269 = vunpack.c.l.b16 %v235
      %v270 = vunpack.c.h.b16 %v235
      %v271 = vunpack.c.l.b16 %v236
      %v272 = vunpack.c.h.b16 %v236
      %v273 = vunpack.c.l.b16 %v237
      %v274 = vunpack.c.h.b16 %v237
      %v275 = vunpack.c.l.b16 %v238
      %v276 = vunpack.c.h.b16 %v238
      %v277 = vpack.c.b16 %v267, %v267
      %v278 = vpack.c.b16 %v268, %v268
      %v279 = vpack.c.b16 %v269, %v269
      %v280 = vpack.c.b16 %v270, %v270
      %v281 = vpack.c.b16 %v271, %v271
      %v282 = vpack.c.b16 %v272, %v272
      %v283 = vpack.c.b16 %v273, %v273
      %v284 = vpack.c.b16 %v274, %v274
      %v285 = vpack.c.b16 %v275, %v275
      %v286 = vpack.c.b16 %v276, %v276
      %287 = vrot.lane.b32.xlu0 %v277, 127
      %v288 = vpop.permute.xlu0 %287
      %289 = vrot.lane.b32.xlu0 %v278, 127
      %v290 = vpop.permute.xlu0 %289
      %291 = vrot.lane.b32.xlu0 %v279, 127
      %v292 = vpop.permute.xlu0 %291
      %293 = vrot.lane.b32.xlu0 %v280, 127
      %v294 = vpop.permute.xlu0 %293
      %295 = vrot.lane.b32.xlu0 %v281, 127
      %v296 = vpop.permute.xlu0 %295
      %297 = vrot.lane.b32.xlu0 %v282, 127
      %v298 = vpop.permute.xlu0 %297
      %299 = vrot.lane.b32.xlu0 %v283, 127
      %v300 = vpop.permute.xlu0 %299
      %301 = vrot.lane.b32.xlu0 %v284, 127
      %v302 = vpop.permute.xlu0 %301
      %303 = vrot.lane.b32.xlu0 %v285, 127
      %v304 = vpop.permute.xlu0 %303
      %305 = vrot.lane.b32.xlu0 %v286, 127
      %v306 = vpop.permute.xlu0 %305
      %vm307 = vcmask 1039360
      %v308 = vsel %vm307, %v288, %v290
      %v309 = vsel %vm307, %v290, %v292
      %v310 = vsel %vm307, %v292, %v294
      %v311 = vsel %vm307, %v294, %v296
      %v312 = vsel %vm307, %v296, %v298
      %v313 = vsel %vm307, %v298, %v300
      %v314 = vsel %vm307, %v300, %v302
      %v315 = vsel %vm307, %v302, %v304
      %v316 = vsel %vm307, %v304, %v306
      %317 = vrot.lane.b32.xlu0 %v277, 126
      %v318 = vpop.permute.xlu0 %317
      %319 = vrot.lane.b32.xlu0 %v278, 126
      %v320 = vpop.permute.xlu0 %319
      %321 = vrot.lane.b32.xlu0 %v279, 126
      %v322 = vpop.permute.xlu0 %321
      %323 = vrot.lane.b32.xlu0 %v280, 126
      %v324 = vpop.permute.xlu0 %323
      %325 = vrot.lane.b32.xlu0 %v281, 126
      %v326 = vpop.permute.xlu0 %325
      %327 = vrot.lane.b32.xlu0 %v282, 126
      %v328 = vpop.permute.xlu0 %327
      %329 = vrot.lane.b32.xlu0 %v283, 126
      %v330 = vpop.permute.xlu0 %329
      %331 = vrot.lane.b32.xlu0 %v284, 126
      %v332 = vpop.permute.xlu0 %331
      %333 = vrot.lane.b32.xlu0 %v285, 126
      %v334 = vpop.permute.xlu0 %333
      %335 = vrot.lane.b32.xlu0 %v286, 126
      %v336 = vpop.permute.xlu0 %335
      %vm337 = vcmask 1031168
      %v338 = vsel %vm337, %v318, %v320
      %v339 = vsel %vm337, %v320, %v322
      %v340 = vsel %vm337, %v322, %v324
      %v341 = vsel %vm337, %v324, %v326
      %v342 = vsel %vm337, %v326, %v328
      %v343 = vsel %vm337, %v328, %v330
      %v344 = vsel %vm337, %v330, %v332
      %v345 = vsel %vm337, %v332, %v334
      %v346 = vsel %vm337, %v334, %v336
      %347 = vrot.lane.b32.xlu0 %v277, 94
      %v348 = vpop.permute.xlu0 %347
      %349 = vrot.lane.b32.xlu0 %v278, 94
      %v350 = vpop.permute.xlu0 %349
      %351 = vrot.lane.b32.xlu0 %v279, 94
      %v352 = vpop.permute.xlu0 %351
      %353 = vrot.lane.b32.xlu0 %v280, 94
      %v354 = vpop.permute.xlu0 %353
      %355 = vrot.lane.b32.xlu0 %v281, 94
      %v356 = vpop.permute.xlu0 %355
      %357 = vrot.lane.b32.xlu0 %v282, 94
      %v358 = vpop.permute.xlu0 %357
      %359 = vrot.lane.b32.xlu0 %v283, 94
      %v360 = vpop.permute.xlu0 %359
      %361 = vrot.lane.b32.xlu0 %v284, 94
      %v362 = vpop.permute.xlu0 %361
      %363 = vrot.lane.b32.xlu0 %v285, 94
      %v364 = vpop.permute.xlu0 %363
      %365 = vrot.lane.b32.xlu0 %v286, 94
      %v366 = vpop.permute.xlu0 %365
      %vm367 = vcmask 769024
      %v368 = vsel %vm367, %v348, %v350
      %v369 = vsel %vm367, %v350, %v352
      %v370 = vsel %vm367, %v352, %v354
      %v371 = vsel %vm367, %v354, %v356
      %v372 = vsel %vm367, %v356, %v358
      %v373 = vsel %vm367, %v358, %v360
      %v374 = vsel %vm367, %v360, %v362
      %v375 = vsel %vm367, %v362, %v364
      %v376 = vsel %vm367, %v364, %v366
      %377 = vrot.lane.b32.xlu0 %v277, 93
      %v378 = vpop.permute.xlu0 %377
      %379 = vrot.lane.b32.xlu0 %v278, 93
      %v380 = vpop.permute.xlu0 %379
      %381 = vrot.lane.b32.xlu0 %v279, 93
      %v382 = vpop.permute.xlu0 %381
      %383 = vrot.lane.b32.xlu0 %v280, 93
      %v384 = vpop.permute.xlu0 %383
      %385 = vrot.lane.b32.xlu0 %v281, 93
      %v386 = vpop.permute.xlu0 %385
      %387 = vrot.lane.b32.xlu0 %v282, 93
      %v388 = vpop.permute.xlu0 %387
      %389 = vrot.lane.b32.xlu0 %v283, 93
      %v390 = vpop.permute.xlu0 %389
      %391 = vrot.lane.b32.xlu0 %v284, 93
      %v392 = vpop.permute.xlu0 %391
      %393 = vrot.lane.b32.xlu0 %v285, 93
      %v394 = vpop.permute.xlu0 %393
      %395 = vrot.lane.b32.xlu0 %v286, 93
      %v396 = vpop.permute.xlu0 %395
      %vm397 = vcmask 760832
      %v398 = vsel %vm397, %v378, %v380
      %v399 = vsel %vm397, %v380, %v382
      %v400 = vsel %vm397, %v382, %v384
      %v401 = vsel %vm397, %v384, %v386
      %v402 = vsel %vm397, %v386, %v388
      %v403 = vsel %vm397, %v388, %v390
      %v404 = vsel %vm397, %v390, %v392
      %v405 = vsel %vm397, %v392, %v394
      %v406 = vsel %vm397, %v394, %v396
      %407 = vrot.lane.b32.xlu0 %v277, 92
      %v408 = vpop.permute.xlu0 %407
      %409 = vrot.lane.b32.xlu0 %v278, 92
      %v410 = vpop.permute.xlu0 %409
      %411 = vrot.lane.b32.xlu0 %v279, 92
      %v412 = vpop.permute.xlu0 %411
      %413 = vrot.lane.b32.xlu0 %v280, 92
      %v414 = vpop.permute.xlu0 %413
      %415 = vrot.lane.b32.xlu0 %v281, 92
      %v416 = vpop.permute.xlu0 %415
      %417 = vrot.lane.b32.xlu0 %v282, 92
      %v418 = vpop.permute.xlu0 %417
      %419 = vrot.lane.b32.xlu0 %v283, 92
      %v420 = vpop.permute.xlu0 %419
      %421 = vrot.lane.b32.xlu0 %v284, 92
      %v422 = vpop.permute.xlu0 %421
      %423 = vrot.lane.b32.xlu0 %v285, 92
      %v424 = vpop.permute.xlu0 %423
      %425 = vrot.lane.b32.xlu0 %v286, 92
      %v426 = vpop.permute.xlu0 %425
      %vm427 = vcmask 752640
      %v428 = vsel %vm427, %v408, %v410
      %v429 = vsel %vm427, %v410, %v412
      %v430 = vsel %vm427, %v412, %v414
      %v431 = vsel %vm427, %v414, %v416
      %v432 = vsel %vm427, %v416, %v418
      %v433 = vsel %vm427, %v418, %v420
      %v434 = vsel %vm427, %v420, %v422
      %v435 = vsel %vm427, %v422, %v424
      %v436 = vsel %vm427, %v424, %v426
      %437 = vrot.lane.b32.xlu0 %v277, 60
      %v438 = vpop.permute.xlu0 %437
      %439 = vrot.lane.b32.xlu0 %v278, 60
      %v440 = vpop.permute.xlu0 %439
      %441 = vrot.lane.b32.xlu0 %v279, 60
      %v442 = vpop.permute.xlu0 %441
      %443 = vrot.lane.b32.xlu0 %v280, 60
      %v444 = vpop.permute.xlu0 %443
      %445 = vrot.lane.b32.xlu0 %v281, 60
      %v446 = vpop.permute.xlu0 %445
      %447 = vrot.lane.b32.xlu0 %v282, 60
      %v448 = vpop.permute.xlu0 %447
      %449 = vrot.lane.b32.xlu0 %v283, 60
      %v450 = vpop.permute.xlu0 %449
      %451 = vrot.lane.b32.xlu0 %v284, 60
      %v452 = vpop.permute.xlu0 %451
      %453 = vrot.lane.b32.xlu0 %v285, 60
      %v454 = vpop.permute.xlu0 %453
      %455 = vrot.lane.b32.xlu0 %v286, 60
      %v456 = vpop.permute.xlu0 %455
      %vm457 = vcmask 490496
      %v458 = vsel %vm457, %v438, %v440
      %v459 = vsel %vm457, %v440, %v442
      %v460 = vsel %vm457, %v442, %v444
      %v461 = vsel %vm457, %v444, %v446
      %v462 = vsel %vm457, %v446, %v448
      %v463 = vsel %vm457, %v448, %v450
      %v464 = vsel %vm457, %v450, %v452
      %v465 = vsel %vm457, %v452, %v454
      %v466 = vsel %vm457, %v454, %v456
      %467 = vrot.lane.b32.xlu0 %v277, 59
      %v468 = vpop.permute.xlu0 %467
      %469 = vrot.lane.b32.xlu0 %v278, 59
      %v470 = vpop.permute.xlu0 %469
      %471 = vrot.lane.b32.xlu0 %v279, 59
      %v472 = vpop.permute.xlu0 %471
      %473 = vrot.lane.b32.xlu0 %v280, 59
      %v474 = vpop.permute.xlu0 %473
      %475 = vrot.lane.b32.xlu0 %v281, 59
      %v476 = vpop.permute.xlu0 %475
      %477 = vrot.lane.b32.xlu0 %v282, 59
      %v478 = vpop.permute.xlu0 %477
      %479 = vrot.lane.b32.xlu0 %v283, 59
      %v480 = vpop.permute.xlu0 %479
      %481 = vrot.lane.b32.xlu0 %v284, 59
      %v482 = vpop.permute.xlu0 %481
      %483 = vrot.lane.b32.xlu0 %v285, 59
      %v484 = vpop.permute.xlu0 %483
      %485 = vrot.lane.b32.xlu0 %v286, 59
      %v486 = vpop.permute.xlu0 %485
      %vm487 = vcmask 482304
      %v488 = vsel %vm487, %v468, %v470
      %v489 = vsel %vm487, %v470, %v472
      %v490 = vsel %vm487, %v472, %v474
      %v491 = vsel %vm487, %v474, %v476
      %v492 = vsel %vm487, %v476, %v478
      %v493 = vsel %vm487, %v478, %v480
      %v494 = vsel %vm487, %v480, %v482
      %v495 = vsel %vm487, %v482, %v484
      %v496 = vsel %vm487, %v484, %v486
      %497 = vrot.lane.b32.xlu0 %v277, 58
      %v498 = vpop.permute.xlu0 %497
      %499 = vrot.lane.b32.xlu0 %v278, 58
      %v500 = vpop.permute.xlu0 %499
      %501 = vrot.lane.b32.xlu0 %v279, 58
      %v502 = vpop.permute.xlu0 %501
      %503 = vrot.lane.b32.xlu0 %v280, 58
      %v504 = vpop.permute.xlu0 %503
      %505 = vrot.lane.b32.xlu0 %v281, 58
      %v506 = vpop.permute.xlu0 %505
      %507 = vrot.lane.b32.xlu0 %v282, 58
      %v508 = vpop.permute.xlu0 %507
      %509 = vrot.lane.b32.xlu0 %v283, 58
      %v510 = vpop.permute.xlu0 %509
      %511 = vrot.lane.b32.xlu0 %v284, 58
      %v512 = vpop.permute.xlu0 %511
      %513 = vrot.lane.b32.xlu0 %v285, 58
      %v514 = vpop.permute.xlu0 %513
      %515 = vrot.lane.b32.xlu0 %v286, 58
      %v516 = vpop.permute.xlu0 %515
      %vm517 = vcmask 474112
      %v518 = vsel %vm517, %v498, %v500
      %v519 = vsel %vm517, %v500, %v502
      %v520 = vsel %vm517, %v502, %v504
      %v521 = vsel %vm517, %v504, %v506
      %v522 = vsel %vm517, %v506, %v508
      %v523 = vsel %vm517, %v508, %v510
      %v524 = vsel %vm517, %v510, %v512
      %v525 = vsel %vm517, %v512, %v514
      %v526 = vsel %vm517, %v514, %v516
      %vm527 = vcmask 1043456
      %v530 = vsel %vm527, %v253, %v308
      %v534 = vsel %vm527, %v254, %v309
      %v538 = vsel %vm527, %v255, %v310
      %v542 = vsel %vm527, %v256, %v311
      %v546 = vsel %vm527, %v257, %v312
      %v550 = vsel %vm527, %v258, %v313
      %v554 = vsel %vm527, %v259, %v314
      %v558 = vsel %vm527, %v260, %v315
      %v562 = vsel %vm527, %v261, %v316
      %v566 = vsel %vm527, %v338, %v368
      %v570 = vsel %vm527, %v339, %v369
      %v574 = vsel %vm527, %v340, %v370
      %v578 = vsel %vm527, %v341, %v371
      %v582 = vsel %vm527, %v342, %v372
      %v586 = vsel %vm527, %v343, %v373
      %v590 = vsel %vm527, %v344, %v374
      %v594 = vsel %vm527, %v345, %v375
      %v598 = vsel %vm527, %v346, %v376
      %v602 = vsel %vm527, %v398, %v428
      %v606 = vsel %vm527, %v399, %v429
      %v610 = vsel %vm527, %v400, %v430
      %v614 = vsel %vm527, %v401, %v431
      %v618 = vsel %vm527, %v402, %v432
      %v622 = vsel %vm527, %v403, %v433
      %v626 = vsel %vm527, %v404, %v434
      %v630 = vsel %vm527, %v405, %v435
      %v634 = vsel %vm527, %v406, %v436
      %v638 = vsel %vm527, %v458, %v488
      %v642 = vsel %vm527, %v459, %v489
      %v646 = vsel %vm527, %v460, %v490
      %v650 = vsel %vm527, %v461, %v491
      %v654 = vsel %vm527, %v462, %v492
      %v658 = vsel %vm527, %v463, %v493
      %v662 = vsel %vm527, %v464, %v494
      %v666 = vsel %vm527, %v465, %v495
      %v670 = vsel %vm527, %v466, %v496
      %v672 = vld [vmem:[%s1] sm:$0xf]
      %vm673 = vcmask 588800
      %v675 = vsel %vm673, %v672, 0
      %v678 = vsel %vm527, %v518, 0
      %v681 = vsel %vm527, %v519, 0
      %v684 = vsel %vm527, %v520, 0
      %v687 = vsel %vm527, %v521, 0
      %v690 = vsel %vm527, %v522, 0
      %v693 = vsel %vm527, %v523, 0
      %v696 = vsel %vm527, %v524, 0
      %v699 = vsel %vm527, %v525, 0
      %v702 = vsel %vm527, %v526, 0
      %704 = vmatpush.bf16.msra.mxu0 0
      %705 = vmatpush.bf16.msra.mxu0 0
      %706 = vmatpush.bf16.msra.mxu0 0
      %707 = vmatpush.bf16.msra.mxu0 %v678
      %708 = vmatpush.bf16.msra.mxu0 %v638
      %709 = vmatpush.bf16.msra.mxu0 %v602
      %710 = vmatpush.bf16.msra.mxu0 %v566
      %711 = vmatpush.bf16.msra.mxu0 %v530
      %712 = vmatmul.bf16.gmra.mxu0 %v675
      %v713 = vpop.f32.mrf.mxu0
      %v714 = vadd.f32 0.0, %v713
      %v715 = vpop.f32.mrf.mxu0
      %716 = vdwg.mxu0
      %717 = vmatpush.bf16.msra.mxu0 0
      %718 = vmatpush.bf16.msra.mxu0 0
      %719 = vmatpush.bf16.msra.mxu0 0
      %720 = vmatpush.bf16.msra.mxu0 %v681
      %721 = vmatpush.bf16.msra.mxu0 %v642
      %722 = vmatpush.bf16.msra.mxu0 %v606
      %723 = vmatpush.bf16.msra.mxu0 %v570
      %724 = vmatpush.bf16.msra.mxu0 %v534
      %725 = vmatmul.bf16.gmra.mxu0 %v675
      %v726 = vpop.f32.mrf.mxu0
      %v727 = vadd.f32 0.0, %v726
      %v728 = vpop.f32.mrf.mxu0
      %729 = vdwg.mxu0
      %730 = vmatpush.bf16.msra.mxu0 0
      %731 = vmatpush.bf16.msra.mxu0 0
      %732 = vmatpush.bf16.msra.mxu0 0
      %733 = vmatpush.bf16.msra.mxu0 %v684
      %734 = vmatpush.bf16.msra.mxu0 %v646
      %735 = vmatpush.bf16.msra.mxu0 %v610
      %736 = vmatpush.bf16.msra.mxu0 %v574
      %737 = vmatpush.bf16.msra.mxu0 %v538
      %738 = vmatmul.bf16.gmra.mxu0 %v675
      %v739 = vpop.f32.mrf.mxu0
      %v740 = vadd.f32 0.0, %v739
      %v741 = vpop.f32.mrf.mxu0
      %742 = vdwg.mxu0
      %743 = vmatpush.bf16.msra.mxu0 0
      %744 = vmatpush.bf16.msra.mxu0 0
      %745 = vmatpush.bf16.msra.mxu0 0
      %746 = vmatpush.bf16.msra.mxu0 %v687
      %747 = vmatpush.bf16.msra.mxu0 %v650
      %748 = vmatpush.bf16.msra.mxu0 %v614
      %749 = vmatpush.bf16.msra.mxu0 %v578
      %750 = vmatpush.bf16.msra.mxu0 %v542
      %751 = vmatmul.bf16.gmra.mxu0 %v675
      %v752 = vpop.f32.mrf.mxu0
      %v753 = vadd.f32 0.0, %v752
      %v754 = vpop.f32.mrf.mxu0
      %755 = vdwg.mxu0
      %756 = vmatpush.bf16.msra.mxu0 0
      %757 = vmatpush.bf16.msra.mxu0 0
      %758 = vmatpush.bf16.msra.mxu0 0
      %759 = vmatpush.bf16.msra.mxu0 %v690
      %760 = vmatpush.bf16.msra.mxu0 %v654
      %761 = vmatpush.bf16.msra.mxu0 %v618
      %762 = vmatpush.bf16.msra.mxu0 %v582
      %763 = vmatpush.bf16.msra.mxu0 %v546
      %764 = vmatmul.bf16.gmra.mxu0 %v675
      %v765 = vpop.f32.mrf.mxu0
      %v766 = vadd.f32 0.0, %v765
      %v767 = vpop.f32.mrf.mxu0
      %768 = vdwg.mxu0
      %769 = vmatpush.bf16.msra.mxu0 0
      %770 = vmatpush.bf16.msra.mxu0 0
      %771 = vmatpush.bf16.msra.mxu0 0
      %772 = vmatpush.bf16.msra.mxu0 %v693
      %773 = vmatpush.bf16.msra.mxu0 %v658
      %774 = vmatpush.bf16.msra.mxu0 %v622
      %775 = vmatpush.bf16.msra.mxu0 %v586
      %776 = vmatpush.bf16.msra.mxu0 %v550
      %777 = vmatmul.bf16.gmra.mxu0 %v675
      %v778 = vpop.f32.mrf.mxu0
      %v779 = vadd.f32 0.0, %v778
      %v780 = vpop.f32.mrf.mxu0
      %781 = vdwg.mxu0
      %782 = vmatpush.bf16.msra.mxu0 0
      %783 = vmatpush.bf16.msra.mxu0 0
      %784 = vmatpush.bf16.msra.mxu0 0
      %785 = vmatpush.bf16.msra.mxu0 %v696
      %786 = vmatpush.bf16.msra.mxu0 %v662
      %787 = vmatpush.bf16.msra.mxu0 %v626
      %788 = vmatpush.bf16.msra.mxu0 %v590
      %789 = vmatpush.bf16.msra.mxu0 %v554
      %790 = vmatmul.bf16.gmra.mxu0 %v675
      %v791 = vpop.f32.mrf.mxu0
      %v792 = vadd.f32 0.0, %v791
      %v793 = vpop.f32.mrf.mxu0
      %794 = vdwg.mxu0
      %795 = vmatpush.bf16.msra.mxu0 0
      %796 = vmatpush.bf16.msra.mxu0 0
      %797 = vmatpush.bf16.msra.mxu0 0
      %798 = vmatpush.bf16.msra.mxu0 %v699
      %799 = vmatpush.bf16.msra.mxu0 %v666
      %800 = vmatpush.bf16.msra.mxu0 %v630
      %801 = vmatpush.bf16.msra.mxu0 %v594
      %802 = vmatpush.bf16.msra.mxu0 %v558
      %803 = vmatmul.bf16.gmra.mxu0 %v675
      %v804 = vpop.f32.mrf.mxu0
      %v805 = vadd.f32 0.0, %v804
      %v806 = vpop.f32.mrf.mxu0
      %807 = vdwg.mxu0
      %808 = vmatpush.bf16.msra.mxu0 0
      %809 = vmatpush.bf16.msra.mxu0 0
      %810 = vmatpush.bf16.msra.mxu0 0
      %811 = vmatpush.bf16.msra.mxu0 %v702
      %812 = vmatpush.bf16.msra.mxu0 %v670
      %813 = vmatpush.bf16.msra.mxu0 %v634
      %814 = vmatpush.bf16.msra.mxu0 %v598
      %815 = vmatpush.bf16.msra.mxu0 %v562
      %816 = vmatmul.bf16.gmra.mxu0 %v675
      %v817 = vpop.f32.mrf.mxu0
      %v818 = vadd.f32 0.0, %v817
      %v819 = vpop.f32.mrf.mxu0
      %820 = vdwg.mxu0
      %v821 = vld [vmem:[%s2] sm:$0xff]
      %823 = vset.pattern.permute.xlu0 0
      %824 = vperm.xlu0 %823, %v821
      %v825 = vpop.permute.xlu0 %824
      %v827 = vmul.f32 %v714, %v825
      %v828 = vmul.f32 %v727, %v825
      %v829 = vmul.f32 %v740, %v825
      %v830 = vmul.f32 %v753, %v825
      %v831 = vmul.f32 %v766, %v825
      %v832 = vmul.f32 %v779, %v825
      %v833 = vmul.f32 %v792, %v825
      %v834 = vmul.f32 %v805, %v825
      %v835 = vmul.f32 %v818, %v825
      %v836 = vld [vmem:[%s3] sm:$0xff]
      %838 = vset.pattern.permute.xlu0 0
      %839 = vperm.xlu0 %838, %v836
      %v840 = vpop.permute.xlu0 %839
      %v842 = vadd.f32 %v827, %v840
      %v843 = vadd.f32 %v828, %v840
      %v844 = vadd.f32 %v829, %v840
      %v845 = vadd.f32 %v830, %v840
      %v846 = vadd.f32 %v831, %v840
      %v847 = vadd.f32 %v832, %v840
      %v848 = vadd.f32 %v833, %v840
      %v849 = vadd.f32 %v834, %v840
      %v850 = vadd.f32 %v835, %v840
      %v851 = vmax.f32 %v842, 0.0
      %v852 = vmax.f32 %v843, 0.0
      %v853 = vmax.f32 %v844, 0.0
      %v854 = vmax.f32 %v845, 0.0
      %v855 = vmax.f32 %v846, 0.0
      %v856 = vmax.f32 %v847, 0.0
      %v857 = vmax.f32 %v848, 0.0
      %v858 = vmax.f32 %v849, 0.0
      %v859 = vmax.f32 %v850, 0.0
      %v860 = vpack.c.bf16 %v852, %v851
      %v861 = vpack.c.bf16 %v854, %v853
      %v862 = vpack.c.bf16 %v856, %v855
      %v863 = vpack.c.bf16 %v858, %v857
      %v864 = vpack.c.bf16 %v859, %v859
      %865 = vst [vmem:[%s226] sm:$0xff] %v860
      %866 = vst [vmem:[%s226 + $0x8] sm:$0xff] %v861
      %867 = vst [vmem:[%s226 + $0x10] sm:$0xff] %v862
      %868 = vst [vmem:[%s226 + $0x18] sm:$0xff] %v863
      %869 = vst [vmem:[%s226 + $0x20] sm:$0xf] %v864
      %s870 = smul.u32 9, %s20
      %p871 = scmp.lt.s32.totalorder %s19, 1
      %s872 = scalar_select %p871, %s19, 1
      %p873 = scmp.lt.s32.totalorder %s870, 8
      %s874 = scalar_select %p873, %s870, 8
      %s875 = smul.addr %s872, 9
      %s876 = sadd.s32 %s874, %s875
      %s877 = smul.addr %s876, 4
      %s878 = scalar_lea.vmem %s4, %s877
      // Predicated region
      $region37: #{gunet_forward.6} parent=35 // pred_check
        %p879 = pneg %p138
      $region38: #{gunet_forward.6} parent=35 // pred_check_branch
        %881 = sbr.rel (%p879) target = $region40
      $region39: #{gunet_forward.6} parent=35 // pred_region
        %s882 = smul.u32 9, %s20
      $region40: #{gunet_forward.6} parent=35 // pred_fallthru
        _
    $region36: #{gunet_forward.6} parent=5 // pred_fallthru
      _
    %p883 = scmp.le.s32.totalorder 2, %s10
    // Predicated region
    $region41: #{gunet_forward.6} parent=5 // pred_check
      %p884 = pneg %p883
    $region42: #{gunet_forward.6} parent=5 // pred_check_branch
      %886 = sbr.rel (%p884) target = $region44
    $region43: #{gunet_forward.6} parent=5 // pred_region
      %s887 = ssub.s32 %s10, 2
      // Predicated region
      $region45: #{gunet_forward.6} parent=43 // pred_check
        %p888 = pneg %p144
      $region46: #{gunet_forward.6} parent=43 // pred_check_branch
        %890 = sbr.rel (%p888) target = $region48
      $region47: #{gunet_forward.6} parent=43 // pred_region
        %s891 = smul.u32 9, %s22
        %p892 = scmp.lt.s32.totalorder %s21, 1
        %s893 = scalar_select %p892, %s21, 1
        %p894 = scmp.lt.s32.totalorder %s891, 8
        %s895 = scalar_select %p894, %s891, 8
        %s896 = smul.addr %s893, 9
        %s897 = sadd.s32 %s895, %s896
        %s898 = smul.addr %s897, 4
        %s899 = scalar_lea.vmem %s4, %s898
      $region48: #{gunet_forward.6} parent=43 // pred_fallthru
        _
    $region44: #{gunet_forward.6} parent=5 // pred_fallthru
      _
  $region6: #{gunet_forward.6} parent=0 // loop_footer
    %s14 = sadd.s32 1, %s10
  $region7: #{gunet_forward.6} parent=0 // loop_footer_branch
    %9 = sbr.rel target = $region3
  $region8: #{gunet_forward.6} parent=0 // loop_exit
    _

// kernel: gunet_forward.7
$region0: #{gunet_forward.7}
  #allocation0 [shape = 'u32[]', space=smem, size = 0x4, offset = 0x4, fixed_abs, tag = 'smem constant byte address 0x4 - core index']
  #allocation1 [shape = 'u32[72,128]{1,0:T(1,128)}', space=vmem, size = 0x9000, scoped, tag = 'internal scratch']
  %s0 = inlined_call_operand.vmem [shape: bf16[2,8,512], index: 0, kind: input, shape index: {}]
  %s1 = inlined_call_operand.vmem [shape: bf16[16,72], index: 1, kind: input, shape index: {}]
  %s2 = inlined_call_operand.vmem [shape: f32[16,1], index: 2, kind: input, shape index: {}]
  %s3 = inlined_call_operand.vmem [shape: f32[16,1], index: 3, kind: input, shape index: {}]
  %s4 = inlined_call_operand.vmem [shape: bf16[2,16,384], index: 4, kind: output, shape index: {}]
  %s5 = sld [smem:[#allocation0]]
  $region49: #{gunet_forward.7} parent=0
    _
  %s7 = ssub.s32 1, %s5
  %s8 = scalar_select 0, %s7, %s5
  loop: start=0, step=1, limit=4
  $region2: #{gunet_forward.7} parent=0 // loop_pre_header
    _
  $region3: #{gunet_forward.7} parent=0 // loop_header
    %s10 = sphi 0, %s14
    %p11 = scmp.ge.s32.totalorder %s10, 4
    %s17 = sphi 0, %s29
    %s18 = sphi 0, %s25
    %s19 = sphi 0, %s17
    %s20 = sphi 0, %s18
    %s21 = sphi 0, %s19
    %s22 = sphi 0, %s20
    %s34 = sphi 0, %s36
    %s37 = sphi 0, %s34
    %s38 = sphi 0, %s37
    %s54 = sphi 0, %s38
    %s58 = sphi 0, %s58
    %s60 = sphi 0, %s58
    %s61 = sphi 0, %s60
    %s75 = sphi 0, %s61
    %s79 = sphi 0, %s79
    %s81 = sphi 0, %s79
    %s82 = sphi 0, %s81
    %s96 = sphi 0, %s82
    %s100 = sphi 0, %s100
    %s102 = sphi 0, %s100
    %s103 = sphi 0, %s102
    %s117 = sphi 0, %s103
    %s125 = sphi 0, %s127
    %s128 = sphi 0, %s125
    %s129 = sphi 0, %s128
    %s145 = sphi 0, %s129
  $region4: #{gunet_forward.7} parent=0 // loop_header_branch
    %13 = sbr.rel (%p11) target = $region8
  $region5: #{gunet_forward.7} parent=0 // loop_body
    %s15 = ssub.s32 %s10, 1
    %s16 = ssub.s32 %s10, 2
    %s23 = sadd.s32 1, %s18
    %p24 = scmp.ge.s32.totalorder %s23, 1
    %s25 = scalar_select %p24, 0, %s23
    %s26 = sadd.s32 1, %s17
    %s27 = scalar_select %p24, %s26, %s17
    %p28 = scmp.ge.s32.totalorder %s27, 2
    %s29 = scalar_select %p28, 0, %s27
    %s30 = sadd.s32 %s17, %s18
    %s31 = sadd.s32 %s29, %s25
    %s32 = ssub.s32 %s30, %s31
    %p33 = scmp.eq.s32.totalorder %s32, 0
    %s35 = sadd.s32 %s34, 1
    %s36 = scalar_select %p33, %s34, %s35
    %p39 = pneg %p33
    %p40 = scmp.eq.s32.totalorder %s10, 1
    %p41 = por %p39, %p40
    %p42 = scmp.ne.s32.totalorder %s34, %s37
    %p43 = scmp.eq.s32.totalorder %s10, 0
    %p44 = por %p42, %p43
    %p45 = scmp.ne.s32.totalorder %s34, %s37
    %p46 = scmp.eq.s32.totalorder %s15, 1
    %p47 = por %p45, %p46
    %p48 = scmp.ne.s32.totalorder %s37, %s38
    %p49 = scmp.eq.s32.totalorder %s15, 0
    %p50 = por %p48, %p49
    %p51 = scmp.ne.s32.totalorder %s37, %s38
    %p52 = scmp.eq.s32.totalorder %s16, 1
    %p53 = por %p51, %p52
    %p55 = scmp.ne.s32.totalorder %s38, %s54
    %p56 = scmp.eq.s32.totalorder %s16, 0
    %p57 = por %p55, %p56
    %s59 = sadd.s32 %s58, 1
    %p62 = scmp.eq.s32.totalorder %s10, 1
    %p63 = scmp.ne.s32.totalorder %s58, %s60
    %p64 = scmp.eq.s32.totalorder %s10, 0
    %p65 = por %p63, %p64
    %p66 = scmp.ne.s32.totalorder %s58, %s60
    %p67 = scmp.eq.s32.totalorder %s15, 1
    %p68 = por %p66, %p67
    %p69 = scmp.ne.s32.totalorder %s60, %s61
    %p70 = scmp.eq.s32.totalorder %s15, 0
    %p71 = por %p69, %p70
    %p72 = scmp.ne.s32.totalorder %s60, %s61
    %p73 = scmp.eq.s32.totalorder %s16, 1
    %p74 = por %p72, %p73
    %p76 = scmp.ne.s32.totalorder %s61, %s75
    %p77 = scmp.eq.s32.totalorder %s16, 0
    %p78 = por %p76, %p77
    %s80 = sadd.s32 %s79, 1
    %p83 = scmp.eq.s32.totalorder %s10, 1
    %p84 = scmp.ne.s32.totalorder %s79, %s81
    %p85 = scmp.eq.s32.totalorder %s10, 0
    %p86 = por %p84, %p85
    %p87 = scmp.ne.s32.totalorder %s79, %s81
    %p88 = scmp.eq.s32.totalorder %s15, 1
    %p89 = por %p87, %p88
    %p90 = scmp.ne.s32.totalorder %s81, %s82
    %p91 = scmp.eq.s32.totalorder %s15, 0
    %p92 = por %p90, %p91
    %p93 = scmp.ne.s32.totalorder %s81, %s82
    %p94 = scmp.eq.s32.totalorder %s16, 1
    %p95 = por %p93, %p94
    %p97 = scmp.ne.s32.totalorder %s82, %s96
    %p98 = scmp.eq.s32.totalorder %s16, 0
    %p99 = por %p97, %p98
    %s101 = sadd.s32 %s100, 1
    %p104 = scmp.eq.s32.totalorder %s10, 1
    %p105 = scmp.ne.s32.totalorder %s100, %s102
    %p106 = scmp.eq.s32.totalorder %s10, 0
    %p107 = por %p105, %p106
    %p108 = scmp.ne.s32.totalorder %s100, %s102
    %p109 = scmp.eq.s32.totalorder %s15, 1
    %p110 = por %p108, %p109
    %p111 = scmp.ne.s32.totalorder %s102, %s103
    %p112 = scmp.eq.s32.totalorder %s15, 0
    %p113 = por %p111, %p112
    %p114 = scmp.ne.s32.totalorder %s102, %s103
    %p115 = scmp.eq.s32.totalorder %s16, 1
    %p116 = por %p114, %p115
    %p118 = scmp.ne.s32.totalorder %s103, %s117
    %p119 = scmp.eq.s32.totalorder %s16, 0
    %p120 = por %p118, %p119
    %s121 = ssub.s32 %s17, %s29
    %s122 = ssub.s32 %s18, %s25
    %s123 = sor.u32 %s121, %s122
    %p124 = scmp.eq.s32.totalorder %s123, 0
    %s126 = sadd.s32 %s125, 1
    %s127 = scalar_select %p124, %s125, %s126
    %p130 = pneg %p124
    %p131 = scmp.eq.s32.totalorder %s10, 1
    %p132 = por %p130, %p131
    %p133 = scmp.ne.s32.totalorder %s125, %s128
    %p134 = scmp.eq.s32.totalorder %s10, 0
    %p135 = por %p133, %p134
    %p136 = scmp.ne.s32.totalorder %s125, %s128
    %p137 = scmp.eq.s32.totalorder %s15, 1
    %p138 = por %p136, %p137
    %p139 = scmp.ne.s32.totalorder %s128, %s129
    %p140 = scmp.eq.s32.totalorder %s15, 0
    %p141 = por %p139, %p140
    %p142 = scmp.ne.s32.totalorder %s128, %s129
    %p143 = scmp.eq.s32.totalorder %s16, 1
    %p144 = por %p142, %p143
    %p146 = scmp.ne.s32.totalorder %s129, %s145
    %p147 = scmp.eq.s32.totalorder %s16, 0
    %p148 = por %p146, %p147
    %p149 = scmp.le.s32.totalorder 1, %s10
    %p150 = scmp.lt.s32.totalorder %s10, 3
    %p151 = pnand %p149, %p150
    %p152 = pneg %p151
    // Predicated region
    $region9: #{gunet_forward.7} parent=5 // pred_check
      _
    $region10: #{gunet_forward.7} parent=5 // pred_check_branch
      %154 = sbr.rel (%p151) target = $region12
    $region11: #{gunet_forward.7} parent=5 // pred_region
      %s155 = ssub.s32 %s10, 1
      // Predicated region
      $region13: #{gunet_forward.7} parent=11 // pred_check
        %p156 = pneg %p71
      $region14: #{gunet_forward.7} parent=11 // pred_check_branch
        %158 = sbr.rel (%p156) target = $region16
      $region15: #{gunet_forward.7} parent=11 // pred_region
        _
      $region16: #{gunet_forward.7} parent=11 // pred_fallthru
        _
      // Predicated region
      $region17: #{gunet_forward.7} parent=11 // pred_check
        %p159 = pneg %p92
      $region18: #{gunet_forward.7} parent=11 // pred_check_branch
        %161 = sbr.rel (%p159) target = $region20
      $region19: #{gunet_forward.7} parent=11 // pred_region
        _
      $region20: #{gunet_forward.7} parent=11 // pred_fallthru
        _
      // Predicated region
      $region21: #{gunet_forward.7} parent=11 // pred_check
        %p162 = pneg %p113
      $region22: #{gunet_forward.7} parent=11 // pred_check_branch
        %164 = sbr.rel (%p162) target = $region24
      $region23: #{gunet_forward.7} parent=11 // pred_region
        _
      $region24: #{gunet_forward.7} parent=11 // pred_fallthru
        _
    $region12: #{gunet_forward.7} parent=5 // pred_fallthru
      _
    %p165 = scmp.lt.s32.totalorder %s10, 2
    // Predicated region
    $region25: #{gunet_forward.7} parent=5 // pred_check
      %p166 = pneg %p165
    $region26: #{gunet_forward.7} parent=5 // pred_check_branch
      %168 = sbr.rel (%p166) target = $region28
    $region27: #{gunet_forward.7} parent=5 // pred_region
      // Predicated region
      $region29: #{gunet_forward.7} parent=27 // pred_check
        %p169 = pneg %p44
      $region30: #{gunet_forward.7} parent=27 // pred_check_branch
        %171 = sbr.rel (%p169) target = $region32
      $region31: #{gunet_forward.7} parent=27 // pred_region
        %s172 = sadd.s32 %s17, %s18
        %p173 = scmp.lt.s32.totalorder %s172, 1
        %s174 = scalar_select %p173, %s172, 1
        %s175 = smul.addr %s174, 4
        %s176 = smul.addr %s175, 4
        %s177 = scalar_lea.vmem %s0, %s176
        %s178 = sadd.s32 %s17, %s18
      $region32: #{gunet_forward.7} parent=27 // pred_fallthru
        _
    $region28: #{gunet_forward.7} parent=5 // pred_fallthru
      _
    %p179 = scmp.le.s32.totalorder 1, %s10
    %p180 = scmp.lt.s32.totalorder %s10, 3
    %p181 = pnand %p179, %p180
    %p182 = pneg %p181
    // Predicated region
    $region33: #{gunet_forward.7} parent=5 // pred_check
      _
    $region34: #{gunet_forward.7} parent=5 // pred_check_branch
      %184 = sbr.rel (%p181) target = $region36
    $region35: #{gunet_forward.7} parent=5 // pred_region
      %s185 = ssub.s32 %s10, 1
      %s186 = sadd.s32 %s19, %s20
      %p187 = scmp.lt.s32.totalorder %s186, 1
      %s188 = scalar_select %p187, %s186, 1
      %s189 = smul.addr %s188, 4
      %s190 = smul.addr %s189, 4
      %s191 = scalar_lea.vmem %s0, %s190
      %p192 = pneg %p50
      %p193 = pneg %p47
      %p194 = pneg %p71
      %p195 = pneg %p68
      %p196 = pneg %p92
      %p197 = pneg %p89
      %p198 = pneg %p113
      %p199 = pneg %p110
      %p200 = pneg %p141
      %p201 = pneg %p138
      %s202 = smul.u32 3, %s20
      %p203 = scmp.lt.s32.totalorder %s19, 1
      %s204 = scalar_select %p203, %s19, 1
      %p205 = scmp.lt.s32.totalorder %s202, 2
      %s206 = scalar_select %p205, %s202, 2
      %s207 = smul.addr %s204, 6
      %s208 = sadd.s32 %s206, %s207
      %s209 = smul.addr %s208, 4
      %s210 = scalar_lea.vmem %s4, %s209
      %s211 = sadd.s32 %s19, %s20
      %p212 = scmp.lt.s32.totalorder %s211, 1
      %s213 = scalar_select %p212, %s211, 1
      %s214 = smul.addr %s213, 4
      %s215 = smul.addr %s214, 4
      %s216 = scalar_lea.vmem %s0, %s215
      %s217 = sadd.s32 %s19, %s20
      %s218 = smul.u32 3, %s20
      %p219 = scmp.lt.s32.totalorder %s19, 1
      %s220 = scalar_select %p219, %s19, 1
      %p221 = scmp.lt.s32.totalorder %s218, 2
      %s222 = scalar_select %p221, %s218, 2
      %s223 = smul.addr %s220, 6
      %s224 = sadd.s32 %s222, %s223
      %s225 = smul.addr %s224, 4
      %s226 = scalar_lea.vmem %s4, %s225
      %s227 = smul.u32 3, %s20
      %v229 = vld [vmem:[%s216] sm:$0xff]
      %v230 = vld [vmem:[%s216 + $0x8] sm:$0xf]
      %v231 = vld [vmem:[%s216] sm:$0xff]
      %v232 = vld [vmem:[%s216 + $0x8] sm:$0xff]
      %v235 = vunpack.c.l.b16 %v229
      %v236 = vunpack.c.h.b16 %v229
      %v237 = vunpack.c.l.b16 %v230
      %v238 = vpack.c.b16 %v235, %v235
      %v239 = vpack.c.b16 %v236, %v236
      %v240 = vpack.c.b16 %v237, %v237
      %v243 = vunpack.c.l.b16 %v231
      %v244 = vunpack.c.h.b16 %v231
      %v245 = vunpack.c.l.b16 %v232
      %v246 = vunpack.c.h.b16 %v232
      %v247 = vpack.c.b16 %v243, %v243
      %v248 = vpack.c.b16 %v244, %v244
      %v249 = vpack.c.b16 %v245, %v245
      %v250 = vpack.c.b16 %v246, %v246
      %251 = vrot.lane.b32.xlu0 %v247, 127
      %v252 = vpop.permute.xlu0 %251
      %253 = vrot.lane.b32.xlu0 %v248, 127
      %v254 = vpop.permute.xlu0 %253
      %255 = vrot.lane.b32.xlu0 %v249, 127
      %v256 = vpop.permute.xlu0 %255
      %257 = vrot.lane.b32.xlu0 %v250, 127
      %v258 = vpop.permute.xlu0 %257
      %vm259 = vcmask 1039360
      %v260 = vsel %vm259, %v252, %v254
      %v261 = vsel %vm259, %v254, %v256
      %v262 = vsel %vm259, %v256, %v258
      %263 = vrot.lane.b32.xlu0 %v247, 126
      %v264 = vpop.permute.xlu0 %263
      %265 = vrot.lane.b32.xlu0 %v248, 126
      %v266 = vpop.permute.xlu0 %265
      %267 = vrot.lane.b32.xlu0 %v249, 126
      %v268 = vpop.permute.xlu0 %267
      %269 = vrot.lane.b32.xlu0 %v250, 126
      %v270 = vpop.permute.xlu0 %269
      %vm271 = vcmask 1031168
      %v272 = vsel %vm271, %v264, %v266
      %v273 = vsel %vm271, %v266, %v268
      %v274 = vsel %vm271, %v268, %v270
      %275 = vrot.lane.b32.xlu0 %v247, 110
      %v276 = vpop.permute.xlu0 %275
      %277 = vrot.lane.b32.xlu0 %v248, 110
      %v278 = vpop.permute.xlu0 %277
      %279 = vrot.lane.b32.xlu0 %v249, 110
      %v280 = vpop.permute.xlu0 %279
      %281 = vrot.lane.b32.xlu0 %v250, 110
      %v282 = vpop.permute.xlu0 %281
      %vm283 = vcmask 900096
      %v284 = vsel %vm283, %v276, %v278
      %v285 = vsel %vm283, %v278, %v280
      %v286 = vsel %vm283, %v280, %v282
      %287 = vrot.lane.b32.xlu0 %v247, 109
      %v288 = vpop.permute.xlu0 %287
      %289 = vrot.lane.b32.xlu0 %v248, 109
      %v290 = vpop.permute.xlu0 %289
      %291 = vrot.lane.b32.xlu0 %v249, 109
      %v292 = vpop.permute.xlu0 %291
      %293 = vrot.lane.b32.xlu0 %v250, 109
      %v294 = vpop.permute.xlu0 %293
      %vm295 = vcmask 891904
      %v296 = vsel %vm295, %v288, %v290
      %v297 = vsel %vm295, %v290, %v292
      %v298 = vsel %vm295, %v292, %v294
      %299 = vrot.lane.b32.xlu0 %v247, 108
      %v300 = vpop.permute.xlu0 %299
      %301 = vrot.lane.b32.xlu0 %v248, 108
      %v302 = vpop.permute.xlu0 %301
      %303 = vrot.lane.b32.xlu0 %v249, 108
      %v304 = vpop.permute.xlu0 %303
      %305 = vrot.lane.b32.xlu0 %v250, 108
      %v306 = vpop.permute.xlu0 %305
      %vm307 = vcmask 883712
      %v308 = vsel %vm307, %v300, %v302
      %v309 = vsel %vm307, %v302, %v304
      %v310 = vsel %vm307, %v304, %v306
      %311 = vrot.lane.b32.xlu0 %v247, 92
      %v312 = vpop.permute.xlu0 %311
      %313 = vrot.lane.b32.xlu0 %v248, 92
      %v314 = vpop.permute.xlu0 %313
      %315 = vrot.lane.b32.xlu0 %v249, 92
      %v316 = vpop.permute.xlu0 %315
      %317 = vrot.lane.b32.xlu0 %v250, 92
      %v318 = vpop.permute.xlu0 %317
      %vm319 = vcmask 752640
      %v320 = vsel %vm319, %v312, %v314
      %v321 = vsel %vm319, %v314, %v316
      %v322 = vsel %vm319, %v316, %v318
      %323 = vrot.lane.b32.xlu0 %v247, 91
      %v324 = vpop.permute.xlu0 %323
      %325 = vrot.lane.b32.xlu0 %v248, 91
      %v326 = vpop.permute.xlu0 %325
      %327 = vrot.lane.b32.xlu0 %v249, 91
      %v328 = vpop.permute.xlu0 %327
      %329 = vrot.lane.b32.xlu0 %v250, 91
      %v330 = vpop.permute.xlu0 %329
      %vm331 = vcmask 744448
      %v332 = vsel %vm331, %v324, %v326
      %v333 = vsel %vm331, %v326, %v328
      %v334 = vsel %vm331, %v328, %v330
      %335 = vrot.lane.b32.xlu0 %v247, 90
      %v336 = vpop.permute.xlu0 %335
      %337 = vrot.lane.b32.xlu0 %v248, 90
      %v338 = vpop.permute.xlu0 %337
      %339 = vrot.lane.b32.xlu0 %v249, 90
      %v340 = vpop.permute.xlu0 %339
      %341 = vrot.lane.b32.xlu0 %v250, 90
      %v342 = vpop.permute.xlu0 %341
      %vm343 = vcmask 736256
      %v344 = vsel %vm343, %v336, %v338
      %v345 = vsel %vm343, %v338, %v340
      %v346 = vsel %vm343, %v340, %v342
      %vm347 = vcmask 1043456
      %v350 = vsel %vm347, %v238, %v260
      %v354 = vsel %vm347, %v239, %v261
      %v358 = vsel %vm347, %v240, %v262
      %v362 = vsel %vm347, %v272, %v284
      %v366 = vsel %vm347, %v273, %v285
      %v370 = vsel %vm347, %v274, %v286
      %v374 = vsel %vm347, %v296, %v308
      %v378 = vsel %vm347, %v297, %v309
      %v382 = vsel %vm347, %v298, %v310
      %v386 = vsel %vm347, %v320, %v332
      %v390 = vsel %vm347, %v321, %v333
      %v394 = vsel %vm347, %v322, %v334
      %v396 = vld [vmem:[%s1] sm:$0xf]
      %v397 = vld [vmem:[%s1 + $0x4] sm:$0xf]
      %v400 = vunpack.c.l.b16 %v396
      %v401 = vunpack.c.l.b16 %v397
      %v402 = vpack.c.b16 %v401, %v400
      %vm403 = vcmask 588800
      %v405 = vsel %vm403, %v402, 0
      %v408 = vsel %vm347, %v344, 0
      %v411 = vsel %vm347, %v345, 0
      %v414 = vsel %vm347, %v346, 0
      %416 = vmatpush.bf16.msra.mxu0 0
      %417 = vmatpush.bf16.msra.mxu0 0
      %418 = vmatpush.bf16.msra.mxu0 0
      %419 = vmatpush.bf16.msra.mxu0 %v408
      %420 = vmatpush.bf16.msra.mxu0 %v386
      %421 = vmatpush.bf16.msra.mxu0 %v374
      %422 = vmatpush.bf16.msra.mxu0 %v362
      %423 = vmatpush.bf16.msra.mxu0 %v350
      %424 = vmatmul.bf16.gmra.mxu0 %v405
      %v425 = vpop.f32.mrf.mxu0
      %v426 = vadd.f32 0.0, %v425
      %v427 = vpop.f32.mrf.mxu0
      %v428 = vadd.f32 0.0, %v427
      %429 = vdwg.mxu0
      %430 = vmatpush.bf16.msra.mxu0 0
      %431 = vmatpush.bf16.msra.mxu0 0
      %432 = vmatpush.bf16.msra.mxu0 0
      %433 = vmatpush.bf16.msra.mxu0 %v411
      %434 = vmatpush.bf16.msra.mxu0 %v390
      %435 = vmatpush.bf16.msra.mxu0 %v378
      %436 = vmatpush.bf16.msra.mxu0 %v366
      %437 = vmatpush.bf16.msra.mxu0 %v354
      %438 = vmatmul.bf16.gmra.mxu0 %v405
      %v439 = vpop.f32.mrf.mxu0
      %v440 = vadd.f32 0.0, %v439
      %v441 = vpop.f32.mrf.mxu0
      %v442 = vadd.f32 0.0, %v441
      %443 = vdwg.mxu0
      %444 = vmatpush.bf16.msra.mxu0 0
      %445 = vmatpush.bf16.msra.mxu0 0
      %446 = vmatpush.bf16.msra.mxu0 0
      %447 = vmatpush.bf16.msra.mxu0 %v414
      %448 = vmatpush.bf16.msra.mxu0 %v394
      %449 = vmatpush.bf16.msra.mxu0 %v382
      %450 = vmatpush.bf16.msra.mxu0 %v370
      %451 = vmatpush.bf16.msra.mxu0 %v358
      %452 = vmatmul.bf16.gmra.mxu0 %v405
      %v453 = vpop.f32.mrf.mxu0
      %v454 = vadd.f32 0.0, %v453
      %v455 = vpop.f32.mrf.mxu0
      %v456 = vadd.f32 0.0, %v455
      %457 = vdwg.mxu0
      %v458 = vld [vmem:[%s2] sm:$0xff]
      %v459 = vld [vmem:[%s2 + $0x8] sm:$0xff]
      %461 = vset.pattern.permute.xlu0 0
      %462 = vperm.xlu0 %461, %v458
      %v463 = vpop.permute.xlu0 %462
      %466 = vset.pattern.permute.xlu0 0
      %467 = vperm.xlu0 %466, %v459
      %v468 = vpop.permute.xlu0 %467
      %v470 = vmul.f32 %v426, %v463
      %v471 = vmul.f32 %v440, %v463
      %v472 = vmul.f32 %v454, %v463
      %v473 = vmul.f32 %v428, %v468
      %v474 = vmul.f32 %v442, %v468
      %v475 = vmul.f32 %v456, %v468
      %v476 = vld [vmem:[%s3] sm:$0xff]
      %v477 = vld [vmem:[%s3 + $0x8] sm:$0xff]
      %479 = vset.pattern.permute.xlu0 0
      %480 = vperm.xlu0 %479, %v476
      %v481 = vpop.permute.xlu0 %480
      %484 = vset.pattern.permute.xlu0 0
      %485 = vperm.xlu0 %484, %v477
      %v486 = vpop.permute.xlu0 %485
      %v488 = vadd.f32 %v470, %v481
      %v489 = vadd.f32 %v471, %v481
      %v490 = vadd.f32 %v472, %v481
      %v491 = vadd.f32 %v473, %v486
      %v492 = vadd.f32 %v474, %v486
      %v493 = vadd.f32 %v475, %v486
      %v494 = vmax.f32 %v488, 0.0
      %v495 = vmax.f32 %v489, 0.0
      %v496 = vmax.f32 %v490, 0.0
      %v497 = vmax.f32 %v491, 0.0
      %v498 = vmax.f32 %v492, 0.0
      %v499 = vmax.f32 %v493, 0.0
      %v500 = vpack.c.bf16 %v495, %v494
      %v501 = vpack.c.bf16 %v496, %v496
      %v502 = vpack.c.bf16 %v498, %v497
      %v503 = vpack.c.bf16 %v499, %v499
      %504 = vst [vmem:[%s226] sm:$0xff] %v500
      %505 = vst [vmem:[%s226 + $0x8] sm:$0xf] %v501
      %506 = vst [vmem:[%s226 + $0xc] sm:$0xff] %v502
      %507 = vst [vmem:[%s226 + $0x14] sm:$0xf] %v503
      %s508 = smul.u32 3, %s20
      %p509 = scmp.lt.s32.totalorder %s19, 1
      %s510 = scalar_select %p509, %s19, 1
      %p511 = scmp.lt.s32.totalorder %s508, 2
      %s512 = scalar_select %p511, %s508, 2
      %s513 = smul.addr %s510, 6
      %s514 = sadd.s32 %s512, %s513
      %s515 = smul.addr %s514, 4
      %s516 = scalar_lea.vmem %s4, %s515
      // Predicated region
      $region37: #{gunet_forward.7} parent=35 // pred_check
        %p517 = pneg %p138
      $region38: #{gunet_forward.7} parent=35 // pred_check_branch
        %519 = sbr.rel (%p517) target = $region40
      $region39: #{gunet_forward.7} parent=35 // pred_region
        %s520 = smul.u32 3, %s20
      $region40: #{gunet_forward.7} parent=35 // pred_fallthru
        _
    $region36: #{gunet_forward.7} parent=5 // pred_fallthru
      _
    %p521 = scmp.le.s32.totalorder 2, %s10
    // Predicated region
    $region41: #{gunet_forward.7} parent=5 // pred_check
      %p522 = pneg %p521
    $region42: #{gunet_forward.7} parent=5 // pred_check_branch
      %524 = sbr.rel (%p522) target = $region44
    $region43: #{gunet_forward.7} parent=5 // pred_region
      %s525 = ssub.s32 %s10, 2
      // Predicated region
      $region45: #{gunet_forward.7} parent=43 // pred_check
        %p526 = pneg %p144
      $region46: #{gunet_forward.7} parent=43 // pred_check_branch
        %528 = sbr.rel (%p526) target = $region48
      $region47: #{gunet_forward.7} parent=43 // pred_region
        %s529 = smul.u32 3, %s22
        %p530 = scmp.lt.s32.totalorder %s21, 1
        %s531 = scalar_select %p530, %s21, 1
        %p532 = scmp.lt.s32.totalorder %s529, 2
        %s533 = scalar_select %p532, %s529, 2
        %s534 = smul.addr %s531, 6
        %s535 = sadd.s32 %s533, %s534
        %s536 = smul.addr %s535, 4
        %s537 = scalar_lea.vmem %s4, %s536
      $region48: #{gunet_forward.7} parent=43 // pred_fallthru
        _
    $region44: #{gunet_forward.7} parent=5 // pred_fallthru
      _
  $region6: #{gunet_forward.7} parent=0 // loop_footer
    %s14 = sadd.s32 1, %s10
  $region7: #{gunet_forward.7} parent=0 // loop_footer_branch
    %9 = sbr.rel target = $region3
  $region8: #{gunet_forward.7} parent=0 // loop_exit
    _

// kernel: reverse
$region0: #{reverse}
  #allocation0 [shape = 's32[1]{0}', space=sflag, size = 0x4, scoped, tag = 'scoped memory for reverse']
  %s0 = inlined_call_operand.vmem [shape: bf16[64,64,3,3], index: 0, kind: input, shape index: {}]
  %s1 = inlined_call_operand.vmem [shape: bf16[64,64,3,3], index: 1, kind: output, shape index: {}]
  %s2 = scalar_lea.vmem %s0, 256
  %v3 = vld [vmem:[%s2] sm:$0xf]
  %v4 = vunpack.c.l.bf16 %v3
  %v5 = vunpack.c.h.bf16 %v3
  %v6 = vpack.c.bf16 0.0, %v4
  %7 = vst [vmem:[%s1] sm:$0xf] %v6
  %s8 = scalar_lea.vmem %s0, 160
  %v9 = vld [vmem:[%s8] sm:$0xf]
  %v10 = vunpack.c.l.bf16 %v9
  %v11 = vunpack.c.h.bf16 %v9
  %s12 = scalar_lea.vmem %s1, 96
  %v13 = vpack.c.bf16 0.0, %v10
  %14 = vst [vmem:[%s12] sm:$0xf] %v13
  %s15 = scalar_lea.vmem %s0, 64
  %v16 = vld [vmem:[%s15] sm:$0xf]
  %v17 = vunpack.c.l.bf16 %v16
  %v18 = vunpack.c.h.bf16 %v16
  %s19 = scalar_lea.vmem %s1, 192
  %v20 = vpack.c.bf16 0.0, %v17
  %21 = vst [vmem:[%s19] sm:$0xf] %v20
  %s22 = scalar_lea.vmem %s0, 224
  %v23 = vld [vmem:[%s22] sm:$0xf]
  %v24 = vunpack.c.l.bf16 %v23
  %v25 = vunpack.c.h.bf16 %v23
  %s26 = scalar_lea.vmem %s1, 32
  %v27 = vpack.c.bf16 0.0, %v24
  %28 = vst [vmem:[%s26] sm:$0xf] %v27
  %s29 = scalar_lea.vmem %s0, 128
  %v30 = vld [vmem:[%s29] sm:$0xf]
  %v31 = vunpack.c.l.bf16 %v30
  %v32 = vunpack.c.h.bf16 %v30
  %s33 = scalar_lea.vmem %s1, 128
  %v34 = vpack.c.bf16 0.0, %v31
  %35 = vst [vmem:[%s33] sm:$0xf] %v34
  %s36 = scalar_lea.vmem %s0, 32
  %v37 = vld [vmem:[%s36] sm:$0xf]
  %v38 = vunpack.c.l.bf16 %v37
  %v39 = vunpack.c.h.bf16 %v37
  %s40 = scalar_lea.vmem %s1, 224
  %v41 = vpack.c.bf16 0.0, %v38
  %42 = vst [vmem:[%s40] sm:$0xf] %v41
  %s43 = scalar_lea.vmem %s0, 192
  %v44 = vld [vmem:[%s43] sm:$0xf]
  %v45 = vunpack.c.l.bf16 %v44
  %v46 = vunpack.c.h.bf16 %v44
  %s47 = scalar_lea.vmem %s1, 64
  %v48 = vpack.c.bf16 0.0, %v45
  %49 = vst [vmem:[%s47] sm:$0xf] %v48
  %s50 = scalar_lea.vmem %s0, 96
  %v51 = vld [vmem:[%s50] sm:$0xf]
  %v52 = vunpack.c.l.bf16 %v51
  %v53 = vunpack.c.h.bf16 %v51
  %s54 = scalar_lea.vmem %s1, 160
  %v55 = vpack.c.bf16 0.0, %v52
  %56 = vst [vmem:[%s54] sm:$0xf] %v55
  %v57 = vld [vmem:[%s0] sm:$0xf]
  %v58 = vunpack.c.l.bf16 %v57
  %v59 = vunpack.c.h.bf16 %v57
  %s60 = scalar_lea.vmem %s1, 256
  %v61 = vpack.c.bf16 0.0, %v58
  %62 = vst [vmem:[%s60] sm:$0xf] %v61
  %s63 = scalar_lea.vmem %s0, 260
  %v64 = vld [vmem:[%s63] sm:$0xf]
  %v65 = vunpack.c.l.bf16 %v64
  %v66 = vunpack.c.h.bf16 %v64
  %s67 = scalar_lea.vmem %s1, 4
  %v68 = vpack.c.bf16 0.0, %v65
  %69 = vst [vmem:[%s67] sm:$0xf] %v68
  %s70 = scalar_lea.vmem %s0, 164
  %v71 = vld [vmem:[%s70] sm:$0xf]
  %v72 = vunpack.c.l.bf16 %v71
  %v73 = vunpack.c.h.bf16 %v71
  %s74 = scalar_lea.vmem %s1, 100
  %v75 = vpack.c.bf16 0.0, %v72
  %76 = vst [vmem:[%s74] sm:$0xf] %v75
  %s77 = scalar_lea.vmem %s0, 68
  %v78 = vld [vmem:[%s77] sm:$0xf]
  %v79 = vunpack.c.l.bf16 %v78
  %v80 = vunpack.c.h.bf16 %v78
  %s81 = scalar_lea.vmem %s1, 196
  %v82 = vpack.c.bf16 0.0, %v79
  %83 = vst [vmem:[%s81] sm:$0xf] %v82
  %s84 = scalar_lea.vmem %s0, 228
  %v85 = vld [vmem:[%s84] sm:$0xf]
  %v86 = vunpack.c.l.bf16 %v85
  %v87 = vunpack.c.h.bf16 %v85
  %s88 = scalar_lea.vmem %s1, 36
  %v89 = vpack.c.bf16 0.0, %v86
  %90 = vst [vmem:[%s88] sm:$0xf] %v89
  %s91 = scalar_lea.vmem %s0, 132
  %v92 = vld [vmem:[%s91] sm:$0xf]
  %v93 = vunpack.c.l.bf16 %v92
  %v94 = vunpack.c.h.bf16 %v92
  %s95 = scalar_lea.vmem %s1, 132
  %v96 = vpack.c.bf16 0.0, %v93
  %97 = vst [vmem:[%s95] sm:$0xf] %v96
  %s98 = scalar_lea.vmem %s0, 36
  %v99 = vld [vmem:[%s98] sm:$0xf]
  %v100 = vunpack.c.l.bf16 %v99
  %v101 = vunpack.c.h.bf16 %v99
  %s102 = scalar_lea.vmem %s1, 228
  %v103 = vpack.c.bf16 0.0, %v100
  %104 = vst [vmem:[%s102] sm:$0xf] %v103
  %s105 = scalar_lea.vmem %s0, 196
  %v106 = vld [vmem:[%s105] sm:$0xf]
  %v107 = vunpack.c.l.bf16 %v106
  %v108 = vunpack.c.h.bf16 %v106
  %s109 = scalar_lea.vmem %s1, 68
  %v110 = vpack.c.bf16 0.0, %v107
  %111 = vst [vmem:[%s109] sm:$0xf] %v110
  %s112 = scalar_lea.vmem %s0, 100
  %v113 = vld [vmem:[%s112] sm:$0xf]
  %v114 = vunpack.c.l.bf16 %v113
  %v115 = vunpack.c.h.bf16 %v113
  %s116 = scalar_lea.vmem %s1, 164
  %v117 = vpack.c.bf16 0.0, %v114
  %118 = vst [vmem:[%s116] sm:$0xf] %v117
  %s119 = scalar_lea.vmem %s0, 4
  %v120 = vld [vmem:[%s119] sm:$0xf]
  %v121 = vunpack.c.l.bf16 %v120
  %v122 = vunpack.c.h.bf16 %v120
  %s123 = scalar_lea.vmem %s1, 260
  %v124 = vpack.c.bf16 0.0, %v121
  %125 = vst [vmem:[%s123] sm:$0xf] %v124
  %s126 = scalar_lea.vmem %s0, 264
  %v127 = vld [vmem:[%s126] sm:$0xf]
  %v128 = vunpack.c.l.bf16 %v127
  %v129 = vunpack.c.h.bf16 %v127
  %s130 = scalar_lea.vmem %s1, 8
  %v131 = vpack.c.bf16 0.0, %v128
  %132 = vst [vmem:[%s130] sm:$0xf] %v131
  %s133 = scalar_lea.vmem %s0, 168
  %v134 = vld [vmem:[%s133] sm:$0xf]
  %v135 = vunpack.c.l.bf16 %v134
  %v136 = vunpack.c.h.bf16 %v134
  %s137 = scalar_lea.vmem %s1, 104
  %v138 = vpack.c.bf16 0.0, %v135
  %139 = vst [vmem:[%s137] sm:$0xf] %v138
  %s140 = scalar_lea.vmem %s0, 72
  %v141 = vld [vmem:[%s140] sm:$0xf]
  %v142 = vunpack.c.l.bf16 %v141
  %v143 = vunpack.c.h.bf16 %v141
  %s144 = scalar_lea.vmem %s1, 200
  %v145 = vpack.c.bf16 0.0, %v142
  %146 = vst [vmem:[%s144] sm:$0xf] %v145
  %s147 = scalar_lea.vmem %s0, 232
  %v148 = vld [vmem:[%s147] sm:$0xf]
  %v149 = vunpack.c.l.bf16 %v148
  %v150 = vunpack.c.h.bf16 %v148
  %s151 = scalar_lea.vmem %s1, 40
  %v152 = vpack.c.bf16 0.0, %v149
  %153 = vst [vmem:[%s151] sm:$0xf] %v152
  %s154 = scalar_lea.vmem %s0, 136
  %v155 = vld [vmem:[%s154] sm:$0xf]
  %v156 = vunpack.c.l.bf16 %v155
  %v157 = vunpack.c.h.bf16 %v155
  %s158 = scalar_lea.vmem %s1, 136
  %v159 = vpack.c.bf16 0.0, %v156
  %160 = vst [vmem:[%s158] sm:$0xf] %v159
  %s161 = scalar_lea.vmem %s0, 40
  %v162 = vld [vmem:[%s161] sm:$0xf]
  %v163 = vunpack.c.l.bf16 %v162
  %v164 = vunpack.c.h.bf16 %v162
  %s165 = scalar_lea.vmem %s1, 232
  %v166 = vpack.c.bf16 0.0, %v163
  %167 = vst [vmem:[%s165] sm:$0xf] %v166
  %s168 = scalar_lea.vmem %s0, 200
  %v169 = vld [vmem:[%s168] sm:$0xf]
  %v170 = vunpack.c.l.bf16 %v169
  %v171 = vunpack.c.h.bf16 %v169
  %s172 = scalar_lea.vmem %s1, 72
  %v173 = vpack.c.bf16 0.0, %v170
  %174 = vst [vmem:[%s172] sm:$0xf] %v173
  %s175 = scalar_lea.vmem %s0, 104
  %v176 = vld [vmem:[%s175] sm:$0xf]
  %v177 = vunpack.c.l.bf16 %v176
  %v178 = vunpack.c.h.bf16 %v176
  %s179 = scalar_lea.vmem %s1, 168
  %v180 = vpack.c.bf16 0.0, %v177
  %181 = vst [vmem:[%s179] sm:$0xf] %v180
  %s182 = scalar_lea.vmem %s0, 8
  %v183 = vld [vmem:[%s182] sm:$0xf]
  %v184 = vunpack.c.l.bf16 %v183
  %v185 = vunpack.c.h.bf16 %v183
  %s186 = scalar_lea.vmem %s1, 264
  %v187 = vpack.c.bf16 0.0, %v184
  %188 = vst [vmem:[%s186] sm:$0xf] %v187
  %s189 = scalar_lea.vmem %s0, 268
  %v190 = vld [vmem:[%s189] sm:$0xf]
  %v191 = vunpack.c.l.bf16 %v190
  %v192 = vunpack.c.h.bf16 %v190
  %s193 = scalar_lea.vmem %s1, 12
  %v194 = vpack.c.bf16 0.0, %v191
  %195 = vst [vmem:[%s193] sm:$0xf] %v194
  %s196 = scalar_lea.vmem %s0, 172
  %v197 = vld [vmem:[%s196] sm:$0xf]
  %v198 = vunpack.c.l.bf16 %v197
  %v199 = vunpack.c.h.bf16 %v197
  %s200 = scalar_lea.vmem %s1, 108
  %v201 = vpack.c.bf16 0.0, %v198
  %202 = vst [vmem:[%s200] sm:$0xf] %v201
  %s203 = scalar_lea.vmem %s0, 76
  %v204 = vld [vmem:[%s203] sm:$0xf]
  %v205 = vunpack.c.l.bf16 %v204
  %v206 = vunpack.c.h.bf16 %v204
  %s207 = scalar_lea.vmem %s1, 204
  %v208 = vpack.c.bf16 0.0, %v205
  %209 = vst [vmem:[%s207] sm:$0xf] %v208
  %s210 = scalar_lea.vmem %s0, 236
  %v211 = vld [vmem:[%s210] sm:$0xf]
  %v212 = vunpack.c.l.bf16 %v211
  %v213 = vunpack.c.h.bf16 %v211
  %s214 = scalar_lea.vmem %s1, 44
  %v215 = vpack.c.bf16 0.0, %v212
  %216 = vst [vmem:[%s214] sm:$0xf] %v215
  %s217 = scalar_lea.vmem %s0, 140
  %v218 = vld [vmem:[%s217] sm:$0xf]
  %v219 = vunpack.c.l.bf16 %v218
  %v220 = vunpack.c.h.bf16 %v218
  %s221 = scalar_lea.vmem %s1, 140
  %v222 = vpack.c.bf16 0.0, %v219
  %223 = vst [vmem:[%s221] sm:$0xf] %v222
  %s224 = scalar_lea.vmem %s0, 44
  %v225 = vld [vmem:[%s224] sm:$0xf]
  %v226 = vunpack.c.l.bf16 %v225
  %v227 = vunpack.c.h.bf16 %v225
  %s228 = scalar_lea.vmem %s1, 236
  %v229 = vpack.c.bf16 0.0, %v226
  %230 = vst [vmem:[%s228] sm:$0xf] %v229
  %s231 = scalar_lea.vmem %s0, 204
  %v232 = vld [vmem:[%s231] sm:$0xf]
  %v233 = vunpack.c.l.bf16 %v232
  %v234 = vunpack.c.h.bf16 %v232
  %s235 = scalar_lea.vmem %s1, 76
  %v236 = vpack.c.bf16 0.0, %v233
  %237 = vst [vmem:[%s235] sm:$0xf] %v236
  %s238 = scalar_lea.vmem %s0, 108
  %v239 = vld [vmem:[%s238] sm:$0xf]
  %v240 = vunpack.c.l.bf16 %v239
  %v241 = vunpack.c.h.bf16 %v239
  %s242 = scalar_lea.vmem %s1, 172
  %v243 = vpack.c.bf16 0.0, %v240
  %244 = vst [vmem:[%s242] sm:$0xf] %v243
  %s245 = scalar_lea.vmem %s0, 12
  %v246 = vld [vmem:[%s245] sm:$0xf]
  %v247 = vunpack.c.l.bf16 %v246
  %v248 = vunpack.c.h.bf16 %v246
  %s249 = scalar_lea.vmem %s1, 268
  %v250 = vpack.c.bf16 0.0, %v247
  %251 = vst [vmem:[%s249] sm:$0xf] %v250
  %s252 = scalar_lea.vmem %s0, 272
  %v253 = vld [vmem:[%s252] sm:$0xf]
  %v254 = vunpack.c.l.bf16 %v253
  %v255 = vunpack.c.h.bf16 %v253
  %s256 = scalar_lea.vmem %s1, 16
  %v257 = vpack.c.bf16 0.0, %v254
  %258 = vst [vmem:[%s256] sm:$0xf] %v257
  %s259 = scalar_lea.vmem %s0, 176
  %v260 = vld [vmem:[%s259] sm:$0xf]
  %v261 = vunpack.c.l.bf16 %v260
  %v262 = vunpack.c.h.bf16 %v260
  %s263 = scalar_lea.vmem %s1, 112
  %v264 = vpack.c.bf16 0.0, %v261
  %265 = vst [vmem:[%s263] sm:$0xf] %v264
  %s266 = scalar_lea.vmem %s0, 80
  %v267 = vld [vmem:[%s266] sm:$0xf]
  %v268 = vunpack.c.l.bf16 %v267
  %v269 = vunpack.c.h.bf16 %v267
  %s270 = scalar_lea.vmem %s1, 208
  %v271 = vpack.c.bf16 0.0, %v268
  %272 = vst [vmem:[%s270] sm:$0xf] %v271
  %s273 = scalar_lea.vmem %s0, 240
  %v274 = vld [vmem:[%s273] sm:$0xf]
  %v275 = vunpack.c.l.bf16 %v274
  %v276 = vunpack.c.h.bf16 %v274
  %s277 = scalar_lea.vmem %s1, 48
  %v278 = vpack.c.bf16 0.0, %v275
  %279 = vst [vmem:[%s277] sm:$0xf] %v278
  %s280 = scalar_lea.vmem %s0, 144
  %v281 = vld [vmem:[%s280] sm:$0xf]
  %v282 = vunpack.c.l.bf16 %v281
  %v283 = vunpack.c.h.bf16 %v281
  %s284 = scalar_lea.vmem %s1, 144
  %v285 = vpack.c.bf16 0.0, %v282
  %286 = vst [vmem:[%s284] sm:$0xf] %v285
  %s287 = scalar_lea.vmem %s0, 48
  %v288 = vld [vmem:[%s287] sm:$0xf]
  %v289 = vunpack.c.l.bf16 %v288
  %v290 = vunpack.c.h.bf16 %v288
  %s291 = scalar_lea.vmem %s1, 240
  %v292 = vpack.c.bf16 0.0, %v289
  %293 = vst [vmem:[%s291] sm:$0xf] %v292
  %s294 = scalar_lea.vmem %s0, 208
  %v295 = vld [vmem:[%s294] sm:$0xf]
  %v296 = vunpack.c.l.bf16 %v295
  %v297 = vunpack.c.h.bf16 %v295
  %s298 = scalar_lea.vmem %s1, 80
  %v299 = vpack.c.bf16 0.0, %v296
  %300 = vst [vmem:[%s298] sm:$0xf] %v299
  %s301 = scalar_lea.vmem %s0, 112
  %v302 = vld [vmem:[%s301] sm:$0xf]
  %v303 = vunpack.c.l.bf16 %v302
  %v304 = vunpack.c.h.bf16 %v302
  %s305 = scalar_lea.vmem %s1, 176
  %v306 = vpack.c.bf16 0.0, %v303
  %307 = vst [vmem:[%s305] sm:$0xf] %v306
  %s308 = scalar_lea.vmem %s0, 16
  %v309 = vld [vmem:[%s308] sm:$0xf]
  %v310 = vunpack.c.l.bf16 %v309
  %v311 = vunpack.c.h.bf16 %v309
  %s312 = scalar_lea.vmem %s1, 272
  %v313 = vpack.c.bf16 0.0, %v310
  %314 = vst [vmem:[%s312] sm:$0xf] %v313
  %s315 = scalar_lea.vmem %s0, 276
  %v316 = vld [vmem:[%s315] sm:$0xf]
  %v317 = vunpack.c.l.bf16 %v316
  %v318 = vunpack.c.h.bf16 %v316
  %s319 = scalar_lea.vmem %s1, 20
  %v320 = vpack.c.bf16 0.0, %v317
  %321 = vst [vmem:[%s319] sm:$0xf] %v320
  %s322 = scalar_lea.vmem %s0, 180
  %v323 = vld [vmem:[%s322] sm:$0xf]
  %v324 = vunpack.c.l.bf16 %v323
  %v325 = vunpack.c.h.bf16 %v323
  %s326 = scalar_lea.vmem %s1, 116
  %v327 = vpack.c.bf16 0.0, %v324
  %328 = vst [vmem:[%s326] sm:$0xf] %v327
  %s329 = scalar_lea.vmem %s0, 84
  %v330 = vld [vmem:[%s329] sm:$0xf]
  %v331 = vunpack.c.l.bf16 %v330
  %v332 = vunpack.c.h.bf16 %v330
  %s333 = scalar_lea.vmem %s1, 212
  %v334 = vpack.c.bf16 0.0, %v331
  %335 = vst [vmem:[%s333] sm:$0xf] %v334
  %s336 = scalar_lea.vmem %s0, 244
  %v337 = vld [vmem:[%s336] sm:$0xf]
  %v338 = vunpack.c.l.bf16 %v337
  %v339 = vunpack.c.h.bf16 %v337
  %s340 = scalar_lea.vmem %s1, 52
  %v341 = vpack.c.bf16 0.0, %v338
  %342 = vst [vmem:[%s340] sm:$0xf] %v341
  %s343 = scalar_lea.vmem %s0, 148
  %v344 = vld [vmem:[%s343] sm:$0xf]
  %v345 = vunpack.c.l.bf16 %v344
  %v346 = vunpack.c.h.bf16 %v344
  %s347 = scalar_lea.vmem %s1, 148
  %v348 = vpack.c.bf16 0.0, %v345
  %349 = vst [vmem:[%s347] sm:$0xf] %v348
  %s350 = scalar_lea.vmem %s0, 52
  %v351 = vld [vmem:[%s350] sm:$0xf]
  %v352 = vunpack.c.l.bf16 %v351
  %v353 = vunpack.c.h.bf16 %v351
  %s354 = scalar_lea.vmem %s1, 244
  %v355 = vpack.c.bf16 0.0, %v352
  %356 = vst [vmem:[%s354] sm:$0xf] %v355
  %s357 = scalar_lea.vmem %s0, 212
  %v358 = vld [vmem:[%s357] sm:$0xf]
  %v359 = vunpack.c.l.bf16 %v358
  %v360 = vunpack.c.h.bf16 %v358
  %s361 = scalar_lea.vmem %s1, 84
  %v362 = vpack.c.bf16 0.0, %v359
  %363 = vst [vmem:[%s361] sm:$0xf] %v362
  %s364 = scalar_lea.vmem %s0, 116
  %v365 = vld [vmem:[%s364] sm:$0xf]
  %v366 = vunpack.c.l.bf16 %v365
  %v367 = vunpack.c.h.bf16 %v365
  %s368 = scalar_lea.vmem %s1, 180
  %v369 = vpack.c.bf16 0.0, %v366
  %370 = vst [vmem:[%s368] sm:$0xf] %v369
  %s371 = scalar_lea.vmem %s0, 20
  %v372 = vld [vmem:[%s371] sm:$0xf]
  %v373 = vunpack.c.l.bf16 %v372
  %v374 = vunpack.c.h.bf16 %v372
  %s375 = scalar_lea.vmem %s1, 276
  %v376 = vpack.c.bf16 0.0, %v373
  %377 = vst [vmem:[%s375] sm:$0xf] %v376
  %s378 = scalar_lea.vmem %s0, 280
  %v379 = vld [vmem:[%s378] sm:$0xf]
  %v380 = vunpack.c.l.bf16 %v379
  %v381 = vunpack.c.h.bf16 %v379
  %s382 = scalar_lea.vmem %s1, 24
  %v383 = vpack.c.bf16 0.0, %v380
  %384 = vst [vmem:[%s382] sm:$0xf] %v383
  %s385 = scalar_lea.vmem %s0, 184
  %v386 = vld [vmem:[%s385] sm:$0xf]
  %v387 = vunpack.c.l.bf16 %v386
  %v388 = vunpack.c.h.bf16 %v386
  %s389 = scalar_lea.vmem %s1, 120
  %v390 = vpack.c.bf16 0.0, %v387
  %391 = vst [vmem:[%s389] sm:$0xf] %v390
  %s392 = scalar_lea.vmem %s0, 88
  %v393 = vld [vmem:[%s392] sm:$0xf]
  %v394 = vunpack.c.l.bf16 %v393
  %v395 = vunpack.c.h.bf16 %v393
  %s396 = scalar_lea.vmem %s1, 216
  %v397 = vpack.c.bf16 0.0, %v394
  %398 = vst [vmem:[%s396] sm:$0xf] %v397
  %s399 = scalar_lea.vmem %s0, 248
  %v400 = vld [vmem:[%s399] sm:$0xf]
  %v401 = vunpack.c.l.bf16 %v400
  %v402 = vunpack.c.h.bf16 %v400
  %s403 = scalar_lea.vmem %s1, 56
  %v404 = vpack.c.bf16 0.0, %v401
  %405 = vst [vmem:[%s403] sm:$0xf] %v404
  %s406 = scalar_lea.vmem %s0, 152
  %v407 = vld [vmem:[%s406] sm:$0xf]
  %v408 = vunpack.c.l.bf16 %v407
  %v409 = vunpack.c.h.bf16 %v407
  %s410 = scalar_lea.vmem %s1, 152
  %v411 = vpack.c.bf16 0.0, %v408
  %412 = vst [vmem:[%s410] sm:$0xf] %v411
  %s413 = scalar_lea.vmem %s0, 56
  %v414 = vld [vmem:[%s413] sm:$0xf]
  %v415 = vunpack.c.l.bf16 %v414
  %v416 = vunpack.c.h.bf16 %v414
  %s417 = scalar_lea.vmem %s1, 248
  %v418 = vpack.c.bf16 0.0, %v415
  %419 = vst [vmem:[%s417] sm:$0xf] %v418
  %s420 = scalar_lea.vmem %s0, 216
  %v421 = vld [vmem:[%s420] sm:$0xf]
  %v422 = vunpack.c.l.bf16 %v421
  %v423 = vunpack.c.h.bf16 %v421
  %s424 = scalar_lea.vmem %s1, 88
  %v425 = vpack.c.bf16 0.0, %v422
  %426 = vst [vmem:[%s424] sm:$0xf] %v425
  %s427 = scalar_lea.vmem %s0, 120
  %v428 = vld [vmem:[%s427] sm:$0xf]
  %v429 = vunpack.c.l.bf16 %v428
  %v430 = vunpack.c.h.bf16 %v428
  %s431 = scalar_lea.vmem %s1, 184
  %v432 = vpack.c.bf16 0.0, %v429
  %433 = vst [vmem:[%s431] sm:$0xf] %v432
  %s434 = scalar_lea.vmem %s0, 24
  %v435 = vld [vmem:[%s434] sm:$0xf]
  %v436 = vunpack.c.l.bf16 %v435
  %v437 = vunpack.c.h.bf16 %v435
  %s438 = scalar_lea.vmem %s1, 280
  %v439 = vpack.c.bf16 0.0, %v436
  %440 = vst [vmem:[%s438] sm:$0xf] %v439
  %s441 = scalar_lea.vmem %s0, 284
  %v442 = vld [vmem:[%s441] sm:$0xf]
  %v443 = vunpack.c.l.bf16 %v442
  %v444 = vunpack.c.h.bf16 %v442
  %s445 = scalar_lea.vmem %s1, 28
  %v446 = vpack.c.bf16 0.0, %v443
  %447 = vst [vmem:[%s445] sm:$0xf] %v446
  %s448 = scalar_lea.vmem %s0, 188
  %v449 = vld [vmem:[%s448] sm:$0xf]
  %v450 = vunpack.c.l.bf16 %v449
  %v451 = vunpack.c.h.bf16 %v449
  %s452 = scalar_lea.vmem %s1, 124
  %v453 = vpack.c.bf16 0.0, %v450
  %454 = vst [vmem:[%s452] sm:$0xf] %v453
  %s455 = scalar_lea.vmem %s0, 92
  %v456 = vld [vmem:[%s455] sm:$0xf]
  %v457 = vunpack.c.l.bf16 %v456
  %v458 = vunpack.c.h.bf16 %v456
  %s459 = scalar_lea.vmem %s1, 220
  %v460 = vpack.c.bf16 0.0, %v457
  %461 = vst [vmem:[%s459] sm:$0xf] %v460
  %s462 = scalar_lea.vmem %s0, 252
  %v463 = vld [vmem:[%s462] sm:$0xf]
  %v464 = vunpack.c.l.bf16 %v463
  %v465 = vunpack.c.h.bf16 %v463
  %s466 = scalar_lea.vmem %s1, 60
  %v467 = vpack.c.bf16 0.0, %v464
  %468 = vst [vmem:[%s466] sm:$0xf] %v467
  %s469 = scalar_lea.vmem %s0, 156
  %v470 = vld [vmem:[%s469] sm:$0xf]
  %v471 = vunpack.c.l.bf16 %v470
  %v472 = vunpack.c.h.bf16 %v470
  %s473 = scalar_lea.vmem %s1, 156
  %v474 = vpack.c.bf16 0.0, %v471
  %475 = vst [vmem:[%s473] sm:$0xf] %v474
  %s476 = scalar_lea.vmem %s0, 60
  %v477 = vld [vmem:[%s476] sm:$0xf]
  %v478 = vunpack.c.l.bf16 %v477
  %v479 = vunpack.c.h.bf16 %v477
  %s480 = scalar_lea.vmem %s1, 252
  %v481 = vpack.c.bf16 0.0, %v478
  %482 = vst [vmem:[%s480] sm:$0xf] %v481
  %s483 = scalar_lea.vmem %s0, 220
  %v484 = vld [vmem:[%s483] sm:$0xf]
  %v485 = vunpack.c.l.bf16 %v484
  %v486 = vunpack.c.h.bf16 %v484
  %s487 = scalar_lea.vmem %s1, 92
  %v488 = vpack.c.bf16 0.0, %v485
  %489 = vst [vmem:[%s487] sm:$0xf] %v488
  %s490 = scalar_lea.vmem %s0, 124
  %v491 = vld [vmem:[%s490] sm:$0xf]
  %v492 = vunpack.c.l.bf16 %v491
  %v493 = vunpack.c.h.bf16 %v491
  %s494 = scalar_lea.vmem %s1, 188
  %v495 = vpack.c.bf16 0.0, %v492
  %496 = vst [vmem:[%s494] sm:$0xf] %v495
  %s497 = scalar_lea.vmem %s0, 28
  %v498 = vld [vmem:[%s497] sm:$0xf]
  %v499 = vunpack.c.l.bf16 %v498
  %v500 = vunpack.c.h.bf16 %v498
  %s501 = scalar_lea.vmem %s1, 284
  %v502 = vpack.c.bf16 0.0, %v499
  %503 = vst [vmem:[%s501] sm:$0xf] %v502

// kernel: reverse.1
$region0: #{reverse.1}
  #allocation0 [shape = 's32[1]{0}', space=sflag, size = 0x4, scoped, tag = 'scoped memory for reverse.1']
  %s0 = inlined_call_operand.vmem [shape: bf16[64,64,3,3], index: 0, kind: input, shape index: {}]
  %s1 = inlined_call_operand.vmem [shape: bf16[64,64,3,3], index: 1, kind: output, shape index: {}]
  %s2 = scalar_lea.vmem %s0, 192
  %v3 = vld [vmem:[%s2] sm:$0xf]
  %v4 = vunpack.c.l.bf16 %v3
  %v5 = vunpack.c.h.bf16 %v3
  %v6 = vpack.c.bf16 0.0, %v4
  %7 = vst [vmem:[%s1] sm:$0xf] %v6
  %s8 = scalar_lea.vmem %s0, 96
  %v9 = vld [vmem:[%s8] sm:$0xf]
  %v10 = vunpack.c.l.bf16 %v9
  %v11 = vunpack.c.h.bf16 %v9
  %s12 = scalar_lea.vmem %s1, 96
  %v13 = vpack.c.bf16 0.0, %v10
  %14 = vst [vmem:[%s12] sm:$0xf] %v13
  %v15 = vld [vmem:[%s0] sm:$0xf]
  %v16 = vunpack.c.l.bf16 %v15
  %v17 = vunpack.c.h.bf16 %v15
  %s18 = scalar_lea.vmem %s1, 192
  %v19 = vpack.c.bf16 0.0, %v16
  %20 = vst [vmem:[%s18] sm:$0xf] %v19
  %s21 = scalar_lea.vmem %s0, 224
  %v22 = vld [vmem:[%s21] sm:$0xf]
  %v23 = vunpack.c.l.bf16 %v22
  %v24 = vunpack.c.h.bf16 %v22
  %s25 = scalar_lea.vmem %s1, 32
  %v26 = vpack.c.bf16 0.0, %v23
  %27 = vst [vmem:[%s25] sm:$0xf] %v26
  %s28 = scalar_lea.vmem %s0, 128
  %v29 = vld [vmem:[%s28] sm:$0xf]
  %v30 = vunpack.c.l.bf16 %v29
  %v31 = vunpack.c.h.bf16 %v29
  %s32 = scalar_lea.vmem %s1, 128
  %v33 = vpack.c.bf16 0.0, %v30
  %34 = vst [vmem:[%s32] sm:$0xf] %v33
  %s35 = scalar_lea.vmem %s0, 32
  %v36 = vld [vmem:[%s35] sm:$0xf]
  %v37 = vunpack.c.l.bf16 %v36
  %v38 = vunpack.c.h.bf16 %v36
  %s39 = scalar_lea.vmem %s1, 224
  %v40 = vpack.c.bf16 0.0, %v37
  %41 = vst [vmem:[%s39] sm:$0xf] %v40
  %s42 = scalar_lea.vmem %s0, 256
  %v43 = vld [vmem:[%s42] sm:$0xf]
  %v44 = vunpack.c.l.bf16 %v43
  %v45 = vunpack.c.h.bf16 %v43
  %s46 = scalar_lea.vmem %s1, 64
  %v47 = vpack.c.bf16 0.0, %v44
  %48 = vst [vmem:[%s46] sm:$0xf] %v47
  %s49 = scalar_lea.vmem %s0, 160
  %v50 = vld [vmem:[%s49] sm:$0xf]
  %v51 = vunpack.c.l.bf16 %v50
  %v52 = vunpack.c.h.bf16 %v50
  %s53 = scalar_lea.vmem %s1, 160
  %v54 = vpack.c.bf16 0.0, %v51
  %55 = vst [vmem:[%s53] sm:$0xf] %v54
  %s56 = scalar_lea.vmem %s0, 64
  %v57 = vld [vmem:[%s56] sm:$0xf]
  %v58 = vunpack.c.l.bf16 %v57
  %v59 = vunpack.c.h.bf16 %v57
  %s60 = scalar_lea.vmem %s1, 256
  %v61 = vpack.c.bf16 0.0, %v58
  %62 = vst [vmem:[%s60] sm:$0xf] %v61
  %s63 = scalar_lea.vmem %s0, 196
  %v64 = vld [vmem:[%s63] sm:$0xf]
  %v65 = vunpack.c.l.bf16 %v64
  %v66 = vunpack.c.h.bf16 %v64
  %s67 = scalar_lea.vmem %s1, 4
  %v68 = vpack.c.bf16 0.0, %v65
  %69 = vst [vmem:[%s67] sm:$0xf] %v68
  %s70 = scalar_lea.vmem %s0, 100
  %v71 = vld [vmem:[%s70] sm:$0xf]
  %v72 = vunpack.c.l.bf16 %v71
  %v73 = vunpack.c.h.bf16 %v71
  %s74 = scalar_lea.vmem %s1, 100
  %v75 = vpack.c.bf16 0.0, %v72
  %76 = vst [vmem:[%s74] sm:$0xf] %v75
  %s77 = scalar_lea.vmem %s0, 4
  %v78 = vld [vmem:[%s77] sm:$0xf]
  %v79 = vunpack.c.l.bf16 %v78
  %v80 = vunpack.c.h.bf16 %v78
  %s81 = scalar_lea.vmem %s1, 196
  %v82 = vpack.c.bf16 0.0, %v79
  %83 = vst [vmem:[%s81] sm:$0xf] %v82
  %s84 = scalar_lea.vmem %s0, 228
  %v85 = vld [vmem:[%s84] sm:$0xf]
  %v86 = vunpack.c.l.bf16 %v85
  %v87 = vunpack.c.h.bf16 %v85
  %s88 = scalar_lea.vmem %s1, 36
  %v89 = vpack.c.bf16 0.0, %v86
  %90 = vst [vmem:[%s88] sm:$0xf] %v89
  %s91 = scalar_lea.vmem %s0, 132
  %v92 = vld [vmem:[%s91] sm:$0xf]
  %v93 = vunpack.c.l.bf16 %v92
  %v94 = vunpack.c.h.bf16 %v92
  %s95 = scalar_lea.vmem %s1, 132
  %v96 = vpack.c.bf16 0.0, %v93
  %97 = vst [vmem:[%s95] sm:$0xf] %v96
  %s98 = scalar_lea.vmem %s0, 36
  %v99 = vld [vmem:[%s98] sm:$0xf]
  %v100 = vunpack.c.l.bf16 %v99
  %v101 = vunpack.c.h.bf16 %v99
  %s102 = scalar_lea.vmem %s1, 228
  %v103 = vpack.c.bf16 0.0, %v100
  %104 = vst [vmem:[%s102] sm:$0xf] %v103
  %s105 = scalar_lea.vmem %s0, 260
  %v106 = vld [vmem:[%s105] sm:$0xf]
  %v107 = vunpack.c.l.bf16 %v106
  %v108 = vunpack.c.h.bf16 %v106
  %s109 = scalar_lea.vmem %s1, 68
  %v110 = vpack.c.bf16 0.0, %v107
  %111 = vst [vmem:[%s109] sm:$0xf] %v110
  %s112 = scalar_lea.vmem %s0, 164
  %v113 = vld [vmem:[%s112] sm:$0xf]
  %v114 = vunpack.c.l.bf16 %v113
  %v115 = vunpack.c.h.bf16 %v113
  %s116 = scalar_lea.vmem %s1, 164
  %v117 = vpack.c.bf16 0.0, %v114
  %118 = vst [vmem:[%s116] sm:$0xf] %v117
  %s119 = scalar_lea.vmem %s0, 68
  %v120 = vld [vmem:[%s119] sm:$0xf]
  %v121 = vunpack.c.l.bf16 %v120
  %v122 = vunpack.c.h.bf16 %v120
  %s123 = scalar_lea.vmem %s1, 260
  %v124 = vpack.c.bf16 0.0, %v121
  %125 = vst [vmem:[%s123] sm:$0xf] %v124
  %s126 = scalar_lea.vmem %s0, 200
  %v127 = vld [vmem:[%s126] sm:$0xf]
  %v128 = vunpack.c.l.bf16 %v127
  %v129 = vunpack.c.h.bf16 %v127
  %s130 = scalar_lea.vmem %s1, 8
  %v131 = vpack.c.bf16 0.0, %v128
  %132 = vst [vmem:[%s130] sm:$0xf] %v131
  %s133 = scalar_lea.vmem %s0, 104
  %v134 = vld [vmem:[%s133] sm:$0xf]
  %v135 = vunpack.c.l.bf16 %v134
  %v136 = vunpack.c.h.bf16 %v134
  %s137 = scalar_lea.vmem %s1, 104
  %v138 = vpack.c.bf16 0.0, %v135
  %139 = vst [vmem:[%s137] sm:$0xf] %v138
  %s140 = scalar_lea.vmem %s0, 8
  %v141 = vld [vmem:[%s140] sm:$0xf]
  %v142 = vunpack.c.l.bf16 %v141
  %v143 = vunpack.c.h.bf16 %v141
  %s144 = scalar_lea.vmem %s1, 200
  %v145 = vpack.c.bf16 0.0, %v142
  %146 = vst [vmem:[%s144] sm:$0xf] %v145
  %s147 = scalar_lea.vmem %s0, 232
  %v148 = vld [vmem:[%s147] sm:$0xf]
  %v149 = vunpack.c.l.bf16 %v148
  %v150 = vunpack.c.h.bf16 %v148
  %s151 = scalar_lea.vmem %s1, 40
  %v152 = vpack.c.bf16 0.0, %v149
  %153 = vst [vmem:[%s151] sm:$0xf] %v152
  %s154 = scalar_lea.vmem %s0, 136
  %v155 = vld [vmem:[%s154] sm:$0xf]
  %v156 = vunpack.c.l.bf16 %v155
  %v157 = vunpack.c.h.bf16 %v155
  %s158 = scalar_lea.vmem %s1, 136
  %v159 = vpack.c.bf16 0.0, %v156
  %160 = vst [vmem:[%s158] sm:$0xf] %v159
  %s161 = scalar_lea.vmem %s0, 40
  %v162 = vld [vmem:[%s161] sm:$0xf]
  %v163 = vunpack.c.l.bf16 %v162
  %v164 = vunpack.c.h.bf16 %v162
  %s165 = scalar_lea.vmem %s1, 232
  %v166 = vpack.c.bf16 0.0, %v163
  %167 = vst [vmem:[%s165] sm:$0xf] %v166
  %s168 = scalar_lea.vmem %s0, 264
  %v169 = vld [vmem:[%s168] sm:$0xf]
  %v170 = vunpack.c.l.bf16 %v169
  %v171 = vunpack.c.h.bf16 %v169
  %s172 = scalar_lea.vmem %s1, 72
  %v173 = vpack.c.bf16 0.0, %v170
  %174 = vst [vmem:[%s172] sm:$0xf] %v173
  %s175 = scalar_lea.vmem %s0, 168
  %v176 = vld [vmem:[%s175] sm:$0xf]
  %v177 = vunpack.c.l.bf16 %v176
  %v178 = vunpack.c.h.bf16 %v176
  %s179 = scalar_lea.vmem %s1, 168
  %v180 = vpack.c.bf16 0.0, %v177
  %181 = vst [vmem:[%s179] sm:$0xf] %v180
  %s182 = scalar_lea.vmem %s0, 72
  %v183 = vld [vmem:[%s182] sm:$0xf]
  %v184 = vunpack.c.l.bf16 %v183
  %v185 = vunpack.c.h.bf16 %v183
  %s186 = scalar_lea.vmem %s1, 264
  %v187 = vpack.c.bf16 0.0, %v184
  %188 = vst [vmem:[%s186] sm:$0xf] %v187
  %s189 = scalar_lea.vmem %s0, 204
  %v190 = vld [vmem:[%s189] sm:$0xf]
  %v191 = vunpack.c.l.bf16 %v190
  %v192 = vunpack.c.h.bf16 %v190
  %s193 = scalar_lea.vmem %s1, 12
  %v194 = vpack.c.bf16 0.0, %v191
  %195 = vst [vmem:[%s193] sm:$0xf] %v194
  %s196 = scalar_lea.vmem %s0, 108
  %v197 = vld [vmem:[%s196] sm:$0xf]
  %v198 = vunpack.c.l.bf16 %v197
  %v199 = vunpack.c.h.bf16 %v197
  %s200 = scalar_lea.vmem %s1, 108
  %v201 = vpack.c.bf16 0.0, %v198
  %202 = vst [vmem:[%s200] sm:$0xf] %v201
  %s203 = scalar_lea.vmem %s0, 12
  %v204 = vld [vmem:[%s203] sm:$0xf]
  %v205 = vunpack.c.l.bf16 %v204
  %v206 = vunpack.c.h.bf16 %v204
  %s207 = scalar_lea.vmem %s1, 204
  %v208 = vpack.c.bf16 0.0, %v205
  %209 = vst [vmem:[%s207] sm:$0xf] %v208
  %s210 = scalar_lea.vmem %s0, 236
  %v211 = vld [vmem:[%s210] sm:$0xf]
  %v212 = vunpack.c.l.bf16 %v211
  %v213 = vunpack.c.h.bf16 %v211
  %s214 = scalar_lea.vmem %s1, 44
  %v215 = vpack.c.bf16 0.0, %v212
  %216 = vst [vmem:[%s214] sm:$0xf] %v215
  %s217 = scalar_lea.vmem %s0, 140
  %v218 = vld [vmem:[%s217] sm:$0xf]
  %v219 = vunpack.c.l.bf16 %v218
  %v220 = vunpack.c.h.bf16 %v218
  %s221 = scalar_lea.vmem %s1, 140
  %v222 = vpack.c.bf16 0.0, %v219
  %223 = vst [vmem:[%s221] sm:$0xf] %v222
  %s224 = scalar_lea.vmem %s0, 44
  %v225 = vld [vmem:[%s224] sm:$0xf]
  %v226 = vunpack.c.l.bf16 %v225
  %v227 = vunpack.c.h.bf16 %v225
  %s228 = scalar_lea.vmem %s1, 236
  %v229 = vpack.c.bf16 0.0, %v226
  %230 = vst [vmem:[%s228] sm:$0xf] %v229
  %s231 = scalar_lea.vmem %s0, 268
  %v232 = vld [vmem:[%s231] sm:$0xf]
  %v233 = vunpack.c.l.bf16 %v232
  %v234 = vunpack.c.h.bf16 %v232
  %s235 = scalar_lea.vmem %s1, 76
  %v236 = vpack.c.bf16 0.0, %v233
  %237 = vst [vmem:[%s235] sm:$0xf] %v236
  %s238 = scalar_lea.vmem %s0, 172
  %v239 = vld [vmem:[%s238] sm:$0xf]
  %v240 = vunpack.c.l.bf16 %v239
  %v241 = vunpack.c.h.bf16 %v239
  %s242 = scalar_lea.vmem %s1, 172
  %v243 = vpack.c.bf16 0.0, %v240
  %244 = vst [vmem:[%s242] sm:$0xf] %v243
  %s245 = scalar_lea.vmem %s0, 76
  %v246 = vld [vmem:[%s245] sm:$0xf]
  %v247 = vunpack.c.l.bf16 %v246
  %v248 = vunpack.c.h.bf16 %v246
  %s249 = scalar_lea.vmem %s1, 268
  %v250 = vpack.c.bf16 0.0, %v247
  %251 = vst [vmem:[%s249] sm:$0xf] %v250
  %s252 = scalar_lea.vmem %s0, 208
  %v253 = vld [vmem:[%s252] sm:$0xf]
  %v254 = vunpack.c.l.bf16 %v253
  %v255 = vunpack.c.h.bf16 %v253
  %s256 = scalar_lea.vmem %s1, 16
  %v257 = vpack.c.bf16 0.0, %v254
  %258 = vst [vmem:[%s256] sm:$0xf] %v257
  %s259 = scalar_lea.vmem %s0, 112
  %v260 = vld [vmem:[%s259] sm:$0xf]
  %v261 = vunpack.c.l.bf16 %v260
  %v262 = vunpack.c.h.bf16 %v260
  %s263 = scalar_lea.vmem %s1, 112
  %v264 = vpack.c.bf16 0.0, %v261
  %265 = vst [vmem:[%s263] sm:$0xf] %v264
  %s266 = scalar_lea.vmem %s0, 16
  %v267 = vld [vmem:[%s266] sm:$0xf]
  %v268 = vunpack.c.l.bf16 %v267
  %v269 = vunpack.c.h.bf16 %v267
  %s270 = scalar_lea.vmem %s1, 208
  %v271 = vpack.c.bf16 0.0, %v268
  %272 = vst [vmem:[%s270] sm:$0xf] %v271
  %s273 = scalar_lea.vmem %s0, 240
  %v274 = vld [vmem:[%s273] sm:$0xf]
  %v275 = vunpack.c.l.bf16 %v274
  %v276 = vunpack.c.h.bf16 %v274
  %s277 = scalar_lea.vmem %s1, 48
  %v278 = vpack.c.bf16 0.0, %v275
  %279 = vst [vmem:[%s277] sm:$0xf] %v278
  %s280 = scalar_lea.vmem %s0, 144
  %v281 = vld [vmem:[%s280] sm:$0xf]
  %v282 = vunpack.c.l.bf16 %v281
  %v283 = vunpack.c.h.bf16 %v281
  %s284 = scalar_lea.vmem %s1, 144
  %v285 = vpack.c.bf16 0.0, %v282
  %286 = vst [vmem:[%s284] sm:$0xf] %v285
  %s287 = scalar_lea.vmem %s0, 48
  %v288 = vld [vmem:[%s287] sm:$0xf]
  %v289 = vunpack.c.l.bf16 %v288
  %v290 = vunpack.c.h.bf16 %v288
  %s291 = scalar_lea.vmem %s1, 240
  %v292 = vpack.c.bf16 0.0, %v289
  %293 = vst [vmem:[%s291] sm:$0xf] %v292
  %s294 = scalar_lea.vmem %s0, 272
  %v295 = vld [vmem:[%s294] sm:$0xf]
  %v296 = vunpack.c.l.bf16 %v295
  %v297 = vunpack.c.h.bf16 %v295
  %s298 = scalar_lea.vmem %s1, 80
  %v299 = vpack.c.bf16 0.0, %v296
  %300 = vst [vmem:[%s298] sm:$0xf] %v299
  %s301 = scalar_lea.vmem %s0, 176
  %v302 = vld [vmem:[%s301] sm:$0xf]
  %v303 = vunpack.c.l.bf16 %v302
  %v304 = vunpack.c.h.bf16 %v302
  %s305 = scalar_lea.vmem %s1, 176
  %v306 = vpack.c.bf16 0.0, %v303
  %307 = vst [vmem:[%s305] sm:$0xf] %v306
  %s308 = scalar_lea.vmem %s0, 80
  %v309 = vld [vmem:[%s308] sm:$0xf]
  %v310 = vunpack.c.l.bf16 %v309
  %v311 = vunpack.c.h.bf16 %v309
  %s312 = scalar_lea.vmem %s1, 272
  %v313 = vpack.c.bf16 0.0, %v310
  %314 = vst [vmem:[%s312] sm:$0xf] %v313
  %s315 = scalar_lea.vmem %s0, 212
  %v316 = vld [vmem:[%s315] sm:$0xf]
  %v317 = vunpack.c.l.bf16 %v316
  %v318 = vunpack.c.h.bf16 %v316
  %s319 = scalar_lea.vmem %s1, 20
  %v320 = vpack.c.bf16 0.0, %v317
  %321 = vst [vmem:[%s319] sm:$0xf] %v320
  %s322 = scalar_lea.vmem %s0, 116
  %v323 = vld [vmem:[%s322] sm:$0xf]
  %v324 = vunpack.c.l.bf16 %v323
  %v325 = vunpack.c.h.bf16 %v323
  %s326 = scalar_lea.vmem %s1, 116
  %v327 = vpack.c.bf16 0.0, %v324
  %328 = vst [vmem:[%s326] sm:$0xf] %v327
  %s329 = scalar_lea.vmem %s0, 20
  %v330 = vld [vmem:[%s329] sm:$0xf]
  %v331 = vunpack.c.l.bf16 %v330
  %v332 = vunpack.c.h.bf16 %v330
  %s333 = scalar_lea.vmem %s1, 212
  %v334 = vpack.c.bf16 0.0, %v331
  %335 = vst [vmem:[%s333] sm:$0xf] %v334
  %s336 = scalar_lea.vmem %s0, 244
  %v337 = vld [vmem:[%s336] sm:$0xf]
  %v338 = vunpack.c.l.bf16 %v337
  %v339 = vunpack.c.h.bf16 %v337
  %s340 = scalar_lea.vmem %s1, 52
  %v341 = vpack.c.bf16 0.0, %v338
  %342 = vst [vmem:[%s340] sm:$0xf] %v341
  %s343 = scalar_lea.vmem %s0, 148
  %v344 = vld [vmem:[%s343] sm:$0xf]
  %v345 = vunpack.c.l.bf16 %v344
  %v346 = vunpack.c.h.bf16 %v344
  %s347 = scalar_lea.vmem %s1, 148
  %v348 = vpack.c.bf16 0.0, %v345
  %349 = vst [vmem:[%s347] sm:$0xf] %v348
  %s350 = scalar_lea.vmem %s0, 52
  %v351 = vld [vmem:[%s350] sm:$0xf]
  %v352 = vunpack.c.l.bf16 %v351
  %v353 = vunpack.c.h.bf16 %v351
  %s354 = scalar_lea.vmem %s1, 244
  %v355 = vpack.c.bf16 0.0, %v352
  %356 = vst [vmem:[%s354] sm:$0xf] %v355
  %s357 = scalar_lea.vmem %s0, 276
  %v358 = vld [vmem:[%s357] sm:$0xf]
  %v359 = vunpack.c.l.bf16 %v358
  %v360 = vunpack.c.h.bf16 %v358
  %s361 = scalar_lea.vmem %s1, 84
  %v362 = vpack.c.bf16 0.0, %v359
  %363 = vst [vmem:[%s361] sm:$0xf] %v362
  %s364 = scalar_lea.vmem %s0, 180
  %v365 = vld [vmem:[%s364] sm:$0xf]
  %v366 = vunpack.c.l.bf16 %v365
  %v367 = vunpack.c.h.bf16 %v365
  %s368 = scalar_lea.vmem %s1, 180
  %v369 = vpack.c.bf16 0.0, %v366
  %370 = vst [vmem:[%s368] sm:$0xf] %v369
  %s371 = scalar_lea.vmem %s0, 84
  %v372 = vld [vmem:[%s371] sm:$0xf]
  %v373 = vunpack.c.l.bf16 %v372
  %v374 = vunpack.c.h.bf16 %v372
  %s375 = scalar_lea.vmem %s1, 276
  %v376 = vpack.c.bf16 0.0, %v373
  %377 = vst [vmem:[%s375] sm:$0xf] %v376
  %s378 = scalar_lea.vmem %s0, 216
  %v379 = vld [vmem:[%s378] sm:$0xf]
  %v380 = vunpack.c.l.bf16 %v379
  %v381 = vunpack.c.h.bf16 %v379
  %s382 = scalar_lea.vmem %s1, 24
  %v383 = vpack.c.bf16 0.0, %v380
  %384 = vst [vmem:[%s382] sm:$0xf] %v383
  %s385 = scalar_lea.vmem %s0, 120
  %v386 = vld [vmem:[%s385] sm:$0xf]
  %v387 = vunpack.c.l.bf16 %v386
  %v388 = vunpack.c.h.bf16 %v386
  %s389 = scalar_lea.vmem %s1, 120
  %v390 = vpack.c.bf16 0.0, %v387
  %391 = vst [vmem:[%s389] sm:$0xf] %v390
  %s392 = scalar_lea.vmem %s0, 24
  %v393 = vld [vmem:[%s392] sm:$0xf]
  %v394 = vunpack.c.l.bf16 %v393
  %v395 = vunpack.c.h.bf16 %v393
  %s396 = scalar_lea.vmem %s1, 216
  %v397 = vpack.c.bf16 0.0, %v394
  %398 = vst [vmem:[%s396] sm:$0xf] %v397
  %s399 = scalar_lea.vmem %s0, 248
  %v400 = vld [vmem:[%s399] sm:$0xf]
  %v401 = vunpack.c.l.bf16 %v400
  %v402 = vunpack.c.h.bf16 %v400
  %s403 = scalar_lea.vmem %s1, 56
  %v404 = vpack.c.bf16 0.0, %v401
  %405 = vst [vmem:[%s403] sm:$0xf] %v404
  %s406 = scalar_lea.vmem %s0, 152
  %v407 = vld [vmem:[%s406] sm:$0xf]
  %v408 = vunpack.c.l.bf16 %v407
  %v409 = vunpack.c.h.bf16 %v407
  %s410 = scalar_lea.vmem %s1, 152
  %v411 = vpack.c.bf16 0.0, %v408
  %412 = vst [vmem:[%s410] sm:$0xf] %v411
  %s413 = scalar_lea.vmem %s0, 56
  %v414 = vld [vmem:[%s413] sm:$0xf]
  %v415 = vunpack.c.l.bf16 %v414
  %v416 = vunpack.c.h.bf16 %v414
  %s417 = scalar_lea.vmem %s1, 248
  %v418 = vpack.c.bf16 0.0, %v415
  %419 = vst [vmem:[%s417] sm:$0xf] %v418
  %s420 = scalar_lea.vmem %s0, 280
  %v421 = vld [vmem:[%s420] sm:$0xf]
  %v422 = vunpack.c.l.bf16 %v421
  %v423 = vunpack.c.h.bf16 %v421
  %s424 = scalar_lea.vmem %s1, 88
  %v425 = vpack.c.bf16 0.0, %v422
  %426 = vst [vmem:[%s424] sm:$0xf] %v425
  %s427 = scalar_lea.vmem %s0, 184
  %v428 = vld [vmem:[%s427] sm:$0xf]
  %v429 = vunpack.c.l.bf16 %v428
  %v430 = vunpack.c.h.bf16 %v428
  %s431 = scalar_lea.vmem %s1, 184
  %v432 = vpack.c.bf16 0.0, %v429
  %433 = vst [vmem:[%s431] sm:$0xf] %v432
  %s434 = scalar_lea.vmem %s0, 88
  %v435 = vld [vmem:[%s434] sm:$0xf]
  %v436 = vunpack.c.l.bf16 %v435
  %v437 = vunpack.c.h.bf16 %v435
  %s438 = scalar_lea.vmem %s1, 280
  %v439 = vpack.c.bf16 0.0, %v436
  %440 = vst [vmem:[%s438] sm:$0xf] %v439
  %s441 = scalar_lea.vmem %s0, 220
  %v442 = vld [vmem:[%s441] sm:$0xf]
  %v443 = vunpack.c.l.bf16 %v442
  %v444 = vunpack.c.h.bf16 %v442
  %s445 = scalar_lea.vmem %s1, 28
  %v446 = vpack.c.bf16 0.0, %v443
  %447 = vst [vmem:[%s445] sm:$0xf] %v446
  %s448 = scalar_lea.vmem %s0, 124
  %v449 = vld [vmem:[%s448] sm:$0xf]
  %v450 = vunpack.c.l.bf16 %v449
  %v451 = vunpack.c.h.bf16 %v449
  %s452 = scalar_lea.vmem %s1, 124
  %v453 = vpack.c.bf16 0.0, %v450
  %454 = vst [vmem:[%s452] sm:$0xf] %v453
  %s455 = scalar_lea.vmem %s0, 28
  %v456 = vld [vmem:[%s455] sm:$0xf]
  %v457 = vunpack.c.l.bf16 %v456
  %v458 = vunpack.c.h.bf16 %v456
  %s459 = scalar_lea.vmem %s1, 220
  %v460 = vpack.c.bf16 0.0, %v457
  %461 = vst [vmem:[%s459] sm:$0xf] %v460
  %s462 = scalar_lea.vmem %s0, 252
  %v463 = vld [vmem:[%s462] sm:$0xf]
  %v464 = vunpack.c.l.bf16 %v463
  %v465 = vunpack.c.h.bf16 %v463
  %s466 = scalar_lea.vmem %s1, 60
  %v467 = vpack.c.bf16 0.0, %v464
  %468 = vst [vmem:[%s466] sm:$0xf] %v467
  %s469 = scalar_lea.vmem %s0, 156
  %v470 = vld [vmem:[%s469] sm:$0xf]
  %v471 = vunpack.c.l.bf16 %v470
  %v472 = vunpack.c.h.bf16 %v470
  %s473 = scalar_lea.vmem %s1, 156
  %v474 = vpack.c.bf16 0.0, %v471
  %475 = vst [vmem:[%s473] sm:$0xf] %v474
  %s476 = scalar_lea.vmem %s0, 60
  %v477 = vld [vmem:[%s476] sm:$0xf]
  %v478 = vunpack.c.l.bf16 %v477
  %v479 = vunpack.c.h.bf16 %v477
  %s480 = scalar_lea.vmem %s1, 252
  %v481 = vpack.c.bf16 0.0, %v478
  %482 = vst [vmem:[%s480] sm:$0xf] %v481
  %s483 = scalar_lea.vmem %s0, 284
  %v484 = vld [vmem:[%s483] sm:$0xf]
  %v485 = vunpack.c.l.bf16 %v484
  %v486 = vunpack.c.h.bf16 %v484
  %s487 = scalar_lea.vmem %s1, 92
  %v488 = vpack.c.bf16 0.0, %v485
  %489 = vst [vmem:[%s487] sm:$0xf] %v488
  %s490 = scalar_lea.vmem %s0, 188
  %v491 = vld [vmem:[%s490] sm:$0xf]
  %v492 = vunpack.c.l.bf16 %v491
  %v493 = vunpack.c.h.bf16 %v491
  %s494 = scalar_lea.vmem %s1, 188
  %v495 = vpack.c.bf16 0.0, %v492
  %496 = vst [vmem:[%s494] sm:$0xf] %v495
  %s497 = scalar_lea.vmem %s0, 92
  %v498 = vld [vmem:[%s497] sm:$0xf]
  %v499 = vunpack.c.l.bf16 %v498
  %v500 = vunpack.c.h.bf16 %v498
  %s501 = scalar_lea.vmem %s1, 284
  %v502 = vpack.c.bf16 0.0, %v499
  %503 = vst [vmem:[%s501] sm:$0xf] %v502

// kernel: gunet_forward.8
$region0: #{gunet_forward.8}
  #allocation0 [shape = 'u32[]', space=smem, size = 0x4, offset = 0x4, fixed_abs, tag = 'smem constant byte address 0x4 - core index']
  #allocation1 [shape = 'u32[72,128]{1,0:T(1,128)}', space=vmem, size = 0x9000, scoped, tag = 'internal scratch']
  %s0 = inlined_call_operand.vmem [shape: bf16[2,48,512], index: 0, kind: input, shape index: {}]
  %s1 = inlined_call_operand.vmem [shape: bf16[16,432], index: 1, kind: input, shape index: {}]
  %s2 = inlined_call_operand.vmem [shape: f32[16,1], index: 2, kind: input, shape index: {}]
  %s3 = inlined_call_operand.vmem [shape: f32[16,1], index: 3, kind: input, shape index: {}]
  %s4 = inlined_call_operand.vmem [shape: bf16[2,16,384], index: 4, kind: output, shape index: {}]
  %s5 = sld [smem:[#allocation0]]
  $region49: #{gunet_forward.8} parent=0
    _
  %s7 = ssub.s32 1, %s5
  %s8 = scalar_select 0, %s7, %s5
  loop: start=0, step=1, limit=4
  $region2: #{gunet_forward.8} parent=0 // loop_pre_header
    _
  $region3: #{gunet_forward.8} parent=0 // loop_header
    %s10 = sphi 0, %s14
    %p11 = scmp.ge.s32.totalorder %s10, 4
    %s17 = sphi 0, %s29
    %s18 = sphi 0, %s25
    %s19 = sphi 0, %s17
    %s20 = sphi 0, %s18
    %s21 = sphi 0, %s19
    %s22 = sphi 0, %s20
    %s34 = sphi 0, %s36
    %s37 = sphi 0, %s34
    %s38 = sphi 0, %s37
    %s54 = sphi 0, %s38
    %s58 = sphi 0, %s58
    %s60 = sphi 0, %s58
    %s61 = sphi 0, %s60
    %s75 = sphi 0, %s61
    %s79 = sphi 0, %s79
    %s81 = sphi 0, %s79
    %s82 = sphi 0, %s81
    %s96 = sphi 0, %s82
    %s100 = sphi 0, %s100
    %s102 = sphi 0, %s100
    %s103 = sphi 0, %s102
    %s117 = sphi 0, %s103
    %s125 = sphi 0, %s127
    %s128 = sphi 0, %s125
    %s129 = sphi 0, %s128
    %s145 = sphi 0, %s129
  $region4: #{gunet_forward.8} parent=0 // loop_header_branch
    %13 = sbr.rel (%p11) target = $region8
  $region5: #{gunet_forward.8} parent=0 // loop_body
    %s15 = ssub.s32 %s10, 1
    %s16 = ssub.s32 %s10, 2
    %s23 = sadd.s32 1, %s18
    %p24 = scmp.ge.s32.totalorder %s23, 1
    %s25 = scalar_select %p24, 0, %s23
    %s26 = sadd.s32 1, %s17
    %s27 = scalar_select %p24, %s26, %s17
    %p28 = scmp.ge.s32.totalorder %s27, 2
    %s29 = scalar_select %p28, 0, %s27
    %s30 = sadd.s32 %s17, %s18
    %s31 = sadd.s32 %s29, %s25
    %s32 = ssub.s32 %s30, %s31
    %p33 = scmp.eq.s32.totalorder %s32, 0
    %s35 = sadd.s32 %s34, 1
    %s36 = scalar_select %p33, %s34, %s35
    %p39 = pneg %p33
    %p40 = scmp.eq.s32.totalorder %s10, 1
    %p41 = por %p39, %p40
    %p42 = scmp.ne.s32.totalorder %s34, %s37
    %p43 = scmp.eq.s32.totalorder %s10, 0
    %p44 = por %p42, %p43
    %p45 = scmp.ne.s32.totalorder %s34, %s37
    %p46 = scmp.eq.s32.totalorder %s15, 1
    %p47 = por %p45, %p46
    %p48 = scmp.ne.s32.totalorder %s37, %s38
    %p49 = scmp.eq.s32.totalorder %s15, 0
    %p50 = por %p48, %p49
    %p51 = scmp.ne.s32.totalorder %s37, %s38
    %p52 = scmp.eq.s32.totalorder %s16, 1
    %p53 = por %p51, %p52
    %p55 = scmp.ne.s32.totalorder %s38, %s54
    %p56 = scmp.eq.s32.totalorder %s16, 0
    %p57 = por %p55, %p56
    %s59 = sadd.s32 %s58, 1
    %p62 = scmp.eq.s32.totalorder %s10, 1
    %p63 = scmp.ne.s32.totalorder %s58, %s60
    %p64 = scmp.eq.s32.totalorder %s10, 0
    %p65 = por %p63, %p64
    %p66 = scmp.ne.s32.totalorder %s58, %s60
    %p67 = scmp.eq.s32.totalorder %s15, 1
    %p68 = por %p66, %p67
    %p69 = scmp.ne.s32.totalorder %s60, %s61
    %p70 = scmp.eq.s32.totalorder %s15, 0
    %p71 = por %p69, %p70
    %p72 = scmp.ne.s32.totalorder %s60, %s61
    %p73 = scmp.eq.s32.totalorder %s16, 1
    %p74 = por %p72, %p73
    %p76 = scmp.ne.s32.totalorder %s61, %s75
    %p77 = scmp.eq.s32.totalorder %s16, 0
    %p78 = por %p76, %p77
    %s80 = sadd.s32 %s79, 1
    %p83 = scmp.eq.s32.totalorder %s10, 1
    %p84 = scmp.ne.s32.totalorder %s79, %s81
    %p85 = scmp.eq.s32.totalorder %s10, 0
    %p86 = por %p84, %p85
    %p87 = scmp.ne.s32.totalorder %s79, %s81
    %p88 = scmp.eq.s32.totalorder %s15, 1
    %p89 = por %p87, %p88
    %p90 = scmp.ne.s32.totalorder %s81, %s82
    %p91 = scmp.eq.s32.totalorder %s15, 0
    %p92 = por %p90, %p91
    %p93 = scmp.ne.s32.totalorder %s81, %s82
    %p94 = scmp.eq.s32.totalorder %s16, 1
    %p95 = por %p93, %p94
    %p97 = scmp.ne.s32.totalorder %s82, %s96
    %p98 = scmp.eq.s32.totalorder %s16, 0
    %p99 = por %p97, %p98
    %s101 = sadd.s32 %s100, 1
    %p104 = scmp.eq.s32.totalorder %s10, 1
    %p105 = scmp.ne.s32.totalorder %s100, %s102
    %p106 = scmp.eq.s32.totalorder %s10, 0
    %p107 = por %p105, %p106
    %p108 = scmp.ne.s32.totalorder %s100, %s102
    %p109 = scmp.eq.s32.totalorder %s15, 1
    %p110 = por %p108, %p109
    %p111 = scmp.ne.s32.totalorder %s102, %s103
    %p112 = scmp.eq.s32.totalorder %s15, 0
    %p113 = por %p111, %p112
    %p114 = scmp.ne.s32.totalorder %s102, %s103
    %p115 = scmp.eq.s32.totalorder %s16, 1
    %p116 = por %p114, %p115
    %p118 = scmp.ne.s32.totalorder %s103, %s117
    %p119 = scmp.eq.s32.totalorder %s16, 0
    %p120 = por %p118, %p119
    %s121 = ssub.s32 %s17, %s29
    %s122 = ssub.s32 %s18, %s25
    %s123 = sor.u32 %s121, %s122
    %p124 = scmp.eq.s32.totalorder %s123, 0
    %s126 = sadd.s32 %s125, 1
    %s127 = scalar_select %p124, %s125, %s126
    %p130 = pneg %p124
    %p131 = scmp.eq.s32.totalorder %s10, 1
    %p132 = por %p130, %p131
    %p133 = scmp.ne.s32.totalorder %s125, %s128
    %p134 = scmp.eq.s32.totalorder %s10, 0
    %p135 = por %p133, %p134
    %p136 = scmp.ne.s32.totalorder %s125, %s128
    %p137 = scmp.eq.s32.totalorder %s15, 1
    %p138 = por %p136, %p137
    %p139 = scmp.ne.s32.totalorder %s128, %s129
    %p140 = scmp.eq.s32.totalorder %s15, 0
    %p141 = por %p139, %p140
    %p142 = scmp.ne.s32.totalorder %s128, %s129
    %p143 = scmp.eq.s32.totalorder %s16, 1
    %p144 = por %p142, %p143
    %p146 = scmp.ne.s32.totalorder %s129, %s145
    %p147 = scmp.eq.s32.totalorder %s16, 0
    %p148 = por %p146, %p147
    %p149 = scmp.le.s32.totalorder 1, %s10
    %p150 = scmp.lt.s32.totalorder %s10, 3
    %p151 = pnand %p149, %p150
    %p152 = pneg %p151
    // Predicated region
    $region9: #{gunet_forward.8} parent=5 // pred_check
      _
    $region10: #{gunet_forward.8} parent=5 // pred_check_branch
      %154 = sbr.rel (%p151) target = $region12
    $region11: #{gunet_forward.8} parent=5 // pred_region
      %s155 = ssub.s32 %s10, 1
      // Predicated region
      $region13: #{gunet_forward.8} parent=11 // pred_check
        %p156 = pneg %p71
      $region14: #{gunet_forward.8} parent=11 // pred_check_branch
        %158 = sbr.rel (%p156) target = $region16
      $region15: #{gunet_forward.8} parent=11 // pred_region
        _
      $region16: #{gunet_forward.8} parent=11 // pred_fallthru
        _
      // Predicated region
      $region17: #{gunet_forward.8} parent=11 // pred_check
        %p159 = pneg %p92
      $region18: #{gunet_forward.8} parent=11 // pred_check_branch
        %161 = sbr.rel (%p159) target = $region20
      $region19: #{gunet_forward.8} parent=11 // pred_region
        _
      $region20: #{gunet_forward.8} parent=11 // pred_fallthru
        _
      // Predicated region
      $region21: #{gunet_forward.8} parent=11 // pred_check
        %p162 = pneg %p113
      $region22: #{gunet_forward.8} parent=11 // pred_check_branch
        %164 = sbr.rel (%p162) target = $region24
      $region23: #{gunet_forward.8} parent=11 // pred_region
        _
      $region24: #{gunet_forward.8} parent=11 // pred_fallthru
        _
    $region12: #{gunet_forward.8} parent=5 // pred_fallthru
      _
    %p165 = scmp.lt.s32.totalorder %s10, 2
    // Predicated region
    $region25: #{gunet_forward.8} parent=5 // pred_check
      %p166 = pneg %p165
    $region26: #{gunet_forward.8} parent=5 // pred_check_branch
      %168 = sbr.rel (%p166) target = $region28
    $region27: #{gunet_forward.8} parent=5 // pred_region
      // Predicated region
      $region29: #{gunet_forward.8} parent=27 // pred_check
        %p169 = pneg %p44
      $region30: #{gunet_forward.8} parent=27 // pred_check_branch
        %171 = sbr.rel (%p169) target = $region32
      $region31: #{gunet_forward.8} parent=27 // pred_region
        %s172 = sadd.s32 %s17, %s18
        %p173 = scmp.lt.s32.totalorder %s172, 1
        %s174 = scalar_select %p173, %s172, 1
        %s175 = smul.addr %s174, 24
        %s176 = smul.addr %s175, 4
        %s177 = scalar_lea.vmem %s0, %s176
        %s178 = sadd.s32 %s17, %s18
      $region32: #{gunet_forward.8} parent=27 // pred_fallthru
        _
    $region28: #{gunet_forward.8} parent=5 // pred_fallthru
      _
    %p179 = scmp.le.s32.totalorder 1, %s10
    %p180 = scmp.lt.s32.totalorder %s10, 3
    %p181 = pnand %p179, %p180
    %p182 = pneg %p181
    // Predicated region
    $region33: #{gunet_forward.8} parent=5 // pred_check
      _
    $region34: #{gunet_forward.8} parent=5 // pred_check_branch
      %184 = sbr.rel (%p181) target = $region36
    $region35: #{gunet_forward.8} parent=5 // pred_region
      %s185 = ssub.s32 %s10, 1
      %s186 = sadd.s32 %s19, %s20
      %p187 = scmp.lt.s32.totalorder %s186, 1
      %s188 = scalar_select %p187, %s186, 1
      %s189 = smul.addr %s188, 24
      %s190 = smul.addr %s189, 4
      %s191 = scalar_lea.vmem %s0, %s190
      %p192 = pneg %p50
      %p193 = pneg %p47
      %p194 = pneg %p71
      %p195 = pneg %p68
      %p196 = pneg %p92
      %p197 = pneg %p89
      %p198 = pneg %p113
      %p199 = pneg %p110
      %p200 = pneg %p141
      %p201 = pneg %p138
      %s202 = smul.u32 3, %s20
      %p203 = scmp.lt.s32.totalorder %s19, 1
      %s204 = scalar_select %p203, %s19, 1
      %p205 = scmp.lt.s32.totalorder %s202, 2
      %s206 = scalar_select %p205, %s202, 2
      %s207 = smul.addr %s204, 6
      %s208 = sadd.s32 %s206, %s207
      %s209 = smul.addr %s208, 4
      %s210 = scalar_lea.vmem %s4, %s209
      %s211 = sadd.s32 %s19, %s20
      %p212 = scmp.lt.s32.totalorder %s211, 1
      %s213 = scalar_select %p212, %s211, 1
      %s214 = smul.addr %s213, 24
      %s215 = smul.addr %s214, 4
      %s216 = scalar_lea.vmem %s0, %s215
      %s217 = sadd.s32 %s19, %s20
      %s218 = smul.u32 3, %s20
      %p219 = scmp.lt.s32.totalorder %s19, 1
      %s220 = scalar_select %p219, %s19, 1
      %p221 = scmp.lt.s32.totalorder %s218, 2
      %s222 = scalar_select %p221, %s218, 2
      %s223 = smul.addr %s220, 6
      %s224 = sadd.s32 %s222, %s223
      %s225 = smul.addr %s224, 4
      %s226 = scalar_lea.vmem %s4, %s225
      %s227 = smul.u32 3, %s20
      %v229 = vld [vmem:[%s216] sm:$0xff]
      %v230 = vld [vmem:[%s216 + $0x8] sm:$0xf]
      %v231 = vld [vmem:[%s216 + $0x10] sm:$0xff]
      %v232 = vld [vmem:[%s216 + $0x18] sm:$0xf]
      %v233 = vld [vmem:[%s216 + $0x20] sm:$0xff]
      %v234 = vld [vmem:[%s216 + $0x28] sm:$0xf]
      %v235 = vld [vmem:[%s216 + $0x30] sm:$0xff]
      %v236 = vld [vmem:[%s216 + $0x38] sm:$0xf]
      %v237 = vld [vmem:[%s216 + $0x40] sm:$0xff]
      %v238 = vld [vmem:[%s216 + $0x48] sm:$0xf]
      %v239 = vld [vmem:[%s216 + $0x50] sm:$0xff]
      %v240 = vld [vmem:[%s216 + $0x58] sm:$0xf]
      %v241 = vld [vmem:[%s216] sm:$0xff]
      %v242 = vld [vmem:[%s216 + $0x8] sm:$0xff]
      %v243 = vld [vmem:[%s216 + $0x10] sm:$0xff]
      %v244 = vld [vmem:[%s216 + $0x18] sm:$0xff]
      %v245 = vld [vmem:[%s216 + $0x20] sm:$0xff]
      %v246 = vld [vmem:[%s216 + $0x28] sm:$0xff]
      %v247 = vld [vmem:[%s216 + $0x30] sm:$0xff]
      %v248 = vld [vmem:[%s216 + $0x38] sm:$0xff]
      %v249 = vld [vmem:[%s216 + $0x40] sm:$0xff]
      %v250 = vld [vmem:[%s216 + $0x48] sm:$0xff]
      %v251 = vld [vmem:[%s216 + $0x50] sm:$0xff]
      %v252 = vld [vmem:[%s216 + $0x58] sm:$0xff]
      %v265 = vunpack.c.l.b16 %v229
      %v266 = vunpack.c.h.b16 %v229
      %v267 = vunpack.c.l.b16 %v230
      %v268 = vunpack.c.l.b16 %v231
      %v269 = vunpack.c.h.b16 %v231
      %v270 = vunpack.c.l.b16 %v232
      %v271 = vunpack.c.l.b16 %v233
      %v272 = vunpack.c.h.b16 %v233
      %v273 = vunpack.c.l.b16 %v234
      %v274 = vunpack.c.l.b16 %v235
      %v275 = vunpack.c.h.b16 %v235
      %v276 = vunpack.c.l.b16 %v236
      %v277 = vunpack.c.l.b16 %v237
      %v278 = vunpack.c.h.b16 %v237
      %v279 = vunpack.c.l.b16 %v238
      %v280 = vunpack.c.l.b16 %v239
      %v281 = vunpack.c.h.b16 %v239
      %v282 = vunpack.c.l.b16 %v240
      %v283 = vpack.c.b16 %v268, %v265
      %v284 = vpack.c.b16 %v269, %v266
      %v285 = vpack.c.b16 %v270, %v267
      %v286 = vpack.c.b16 %v274, %v271
      %v287 = vpack.c.b16 %v275, %v272
      %v288 = vpack.c.b16 %v276, %v273
      %v289 = vpack.c.b16 %v280, %v277
      %v290 = vpack.c.b16 %v281, %v278
      %v291 = vpack.c.b16 %v282, %v279
      %v313 = vunpack.c.l.b16 %v241
      %v314 = vunpack.c.h.b16 %v241
      %v315 = vunpack.c.l.b16 %v242
      %v316 = vunpack.c.h.b16 %v242
      %v317 = vunpack.c.l.b16 %v243
      %v318 = vunpack.c.h.b16 %v243
      %v319 = vunpack.c.l.b16 %v244
      %v320 = vunpack.c.h.b16 %v244
      %v321 = vunpack.c.l.b16 %v245
      %v322 = vunpack.c.h.b16 %v245
      %v323 = vunpack.c.l.b16 %v246
      %v324 = vunpack.c.h.b16 %v246
      %v325 = vunpack.c.l.b16 %v247
      %v326 = vunpack.c.h.b16 %v247
      %v327 = vunpack.c.l.b16 %v248
      %v328 = vunpack.c.h.b16 %v248
      %v329 = vunpack.c.l.b16 %v249
      %v330 = vunpack.c.h.b16 %v249
      %v331 = vunpack.c.l.b16 %v250
      %v332 = vunpack.c.h.b16 %v250
      %v333 = vunpack.c.l.b16 %v251
      %v334 = vunpack.c.h.b16 %v251
      %v335 = vunpack.c.l.b16 %v252
      %v336 = vunpack.c.h.b16 %v252
      %v337 = vpack.c.b16 %v317, %v313
      %v338 = vpack.c.b16 %v318, %v314
      %v339 = vpack.c.b16 %v319, %v315
      %v340 = vpack.c.b16 %v320, %v316
      %v341 = vpack.c.b16 %v325, %v321
      %v342 = vpack.c.b16 %v326, %v322
      %v343 = vpack.c.b16 %v327, %v323
      %v344 = vpack.c.b16 %v328, %v324
      %v345 = vpack.c.b16 %v333, %v329
      %v346 = vpack.c.b16 %v334, %v330
      %v347 = vpack.c.b16 %v335, %v331
      %v348 = vpack.c.b16 %v336, %v332
      %349 = vrot.lane.b32.xlu0 %v337, 127
      %v350 = vpop.permute.xlu0 %349
      %351 = vrot.lane.b32.xlu0 %v338, 127
      %v352 = vpop.permute.xlu0 %351
      %353 = vrot.lane.b32.xlu0 %v339, 127
      %v354 = vpop.permute.xlu0 %353
      %355 = vrot.lane.b32.xlu0 %v340, 127
      %v356 = vpop.permute.xlu0 %355
      %357 = vrot.lane.b32.xlu0 %v341, 127
      %v358 = vpop.permute.xlu0 %357
      %359 = vrot.lane.b32.xlu0 %v342, 127
      %v360 = vpop.permute.xlu0 %359
      %361 = vrot.lane.b32.xlu0 %v343, 127
      %v362 = vpop.permute.xlu0 %361
      %363 = vrot.lane.b32.xlu0 %v344, 127
      %v364 = vpop.permute.xlu0 %363
      %365 = vrot.lane.b32.xlu0 %v345, 127
      %v366 = vpop.permute.xlu0 %365
      %367 = vrot.lane.b32.xlu0 %v346, 127
      %v368 = vpop.permute.xlu0 %367
      %369 = vrot.lane.b32.xlu0 %v347, 127
      %v370 = vpop.permute.xlu0 %369
      %371 = vrot.lane.b32.xlu0 %v348, 127
      %v372 = vpop.permute.xlu0 %371
      %vm373 = vcmask 1039360
      %v374 = vsel %vm373, %v350, %v352
      %v375 = vsel %vm373, %v352, %v354
      %v376 = vsel %vm373, %v354, %v356
      %v377 = vsel %vm373, %v358, %v360
      %v378 = vsel %vm373, %v360, %v362
      %v379 = vsel %vm373, %v362, %v364
      %v380 = vsel %vm373, %v366, %v368
      %v381 = vsel %vm373, %v368, %v370
      %v382 = vsel %vm373, %v370, %v372
      %392 = vrot.lane.b32.xlu0 %v337, 126
      %v393 = vpop.permute.xlu0 %392
      %394 = vrot.lane.b32.xlu0 %v338, 126
      %v395 = vpop.permute.xlu0 %394
      %396 = vrot.lane.b32.xlu0 %v339, 126
      %v397 = vpop.permute.xlu0 %396
      %398 = vrot.lane.b32.xlu0 %v340, 126
      %v399 = vpop.permute.xlu0 %398
      %400 = vrot.lane.b32.xlu0 %v341, 126
      %v401 = vpop.permute.xlu0 %400
      %402 = vrot.lane.b32.xlu0 %v342, 126
      %v403 = vpop.permute.xlu0 %402
      %404 = vrot.lane.b32.xlu0 %v343, 126
      %v405 = vpop.permute.xlu0 %404
      %406 = vrot.lane.b32.xlu0 %v344, 126
      %v407 = vpop.permute.xlu0 %406
      %408 = vrot.lane.b32.xlu0 %v345, 126
      %v409 = vpop.permute.xlu0 %408
      %410 = vrot.lane.b32.xlu0 %v346, 126
      %v411 = vpop.permute.xlu0 %410
      %412 = vrot.lane.b32.xlu0 %v347, 126
      %v413 = vpop.permute.xlu0 %412
      %414 = vrot.lane.b32.xlu0 %v348, 126
      %v415 = vpop.permute.xlu0 %414
      %vm416 = vcmask 1031168
      %v417 = vsel %vm416, %v393, %v395
      %v418 = vsel %vm416, %v395, %v397
      %v419 = vsel %vm416, %v397, %v399
      %v420 = vsel %vm416, %v401, %v403
      %v421 = vsel %vm416, %v403, %v405
      %v422 = vsel %vm416, %v405, %v407
      %v423 = vsel %vm416, %v409, %v411
      %v424 = vsel %vm416, %v411, %v413
      %v425 = vsel %vm416, %v413, %v415
      %435 = vrot.lane.b32.xlu0 %v337, 110
      %v436 = vpop.permute.xlu0 %435
      %437 = vrot.lane.b32.xlu0 %v338, 110
      %v438 = vpop.permute.xlu0 %437
      %439 = vrot.lane.b32.xlu0 %v339, 110
      %v440 = vpop.permute.xlu0 %439
      %441 = vrot.lane.b32.xlu0 %v340, 110
      %v442 = vpop.permute.xlu0 %441
      %443 = vrot.lane.b32.xlu0 %v341, 110
      %v444 = vpop.permute.xlu0 %443
      %445 = vrot.lane.b32.xlu0 %v342, 110
      %v446 = vpop.permute.xlu0 %445
      %447 = vrot.lane.b32.xlu0 %v343, 110
      %v448 = vpop.permute.xlu0 %447
      %449 = vrot.lane.b32.xlu0 %v344, 110
      %v450 = vpop.permute.xlu0 %449
      %451 = vrot.lane.b32.xlu0 %v345, 110
      %v452 = vpop.permute.xlu0 %451
      %453 = vrot.lane.b32.xlu0 %v346, 110
      %v454 = vpop.permute.xlu0 %453
      %455 = vrot.lane.b32.xlu0 %v347, 110
      %v456 = vpop.permute.xlu0 %455
      %457 = vrot.lane.b32.xlu0 %v348, 110
      %v458 = vpop.permute.xlu0 %457
      %vm459 = vcmask 900096
      %v460 = vsel %vm459, %v436, %v438
      %v461 = vsel %vm459, %v438, %v440
      %v462 = vsel %vm459, %v440, %v442
      %v463 = vsel %vm459, %v444, %v446
      %v464 = vsel %vm459, %v446, %v448
      %v465 = vsel %vm459, %v448, %v450
      %v466 = vsel %vm459, %v452, %v454
      %v467 = vsel %vm459, %v454, %v456
      %v468 = vsel %vm459, %v456, %v458
      %478 = vrot.lane.b32.xlu0 %v337, 109
      %v479 = vpop.permute.xlu0 %478
      %480 = vrot.lane.b32.xlu0 %v338, 109
      %v481 = vpop.permute.xlu0 %480
      %482 = vrot.lane.b32.xlu0 %v339, 109
      %v483 = vpop.permute.xlu0 %482
      %484 = vrot.lane.b32.xlu0 %v340, 109
      %v485 = vpop.permute.xlu0 %484
      %486 = vrot.lane.b32.xlu0 %v341, 109
      %v487 = vpop.permute.xlu0 %486
      %488 = vrot.lane.b32.xlu0 %v342, 109
      %v489 = vpop.permute.xlu0 %488
      %490 = vrot.lane.b32.xlu0 %v343, 109
      %v491 = vpop.permute.xlu0 %490
      %492 = vrot.lane.b32.xlu0 %v344, 109
      %v493 = vpop.permute.xlu0 %492
      %494 = vrot.lane.b32.xlu0 %v345, 109
      %v495 = vpop.permute.xlu0 %494
      %496 = vrot.lane.b32.xlu0 %v346, 109
      %v497 = vpop.permute.xlu0 %496
      %498 = vrot.lane.b32.xlu0 %v347, 109
      %v499 = vpop.permute.xlu0 %498
      %500 = vrot.lane.b32.xlu0 %v348, 109
      %v501 = vpop.permute.xlu0 %500
      %vm502 = vcmask 891904
      %v503 = vsel %vm502, %v479, %v481
      %v504 = vsel %vm502, %v481, %v483
      %v505 = vsel %vm502, %v483, %v485
      %v506 = vsel %vm502, %v487, %v489
      %v507 = vsel %vm502, %v489, %v491
      %v508 = vsel %vm502, %v491, %v493
      %v509 = vsel %vm502, %v495, %v497
      %v510 = vsel %vm502, %v497, %v499
      %v511 = vsel %vm502, %v499, %v501
      %521 = vrot.lane.b32.xlu0 %v337, 108
      %v522 = vpop.permute.xlu0 %521
      %523 = vrot.lane.b32.xlu0 %v338, 108
      %v524 = vpop.permute.xlu0 %523
      %525 = vrot.lane.b32.xlu0 %v339, 108
      %v526 = vpop.permute.xlu0 %525
      %527 = vrot.lane.b32.xlu0 %v340, 108
      %v528 = vpop.permute.xlu0 %527
      %529 = vrot.lane.b32.xlu0 %v341, 108
      %v530 = vpop.permute.xlu0 %529
      %531 = vrot.lane.b32.xlu0 %v342, 108
      %v532 = vpop.permute.xlu0 %531
      %533 = vrot.lane.b32.xlu0 %v343, 108
      %v534 = vpop.permute.xlu0 %533
      %535 = vrot.lane.b32.xlu0 %v344, 108
      %v536 = vpop.permute.xlu0 %535
      %537 = vrot.lane.b32.xlu0 %v345, 108
      %v538 = vpop.permute.xlu0 %537
      %539 = vrot.lane.b32.xlu0 %v346, 108
      %v540 = vpop.permute.xlu0 %539
      %541 = vrot.lane.b32.xlu0 %v347, 108
      %v542 = vpop.permute.xlu0 %541
      %543 = vrot.lane.b32.xlu0 %v348, 108
      %v544 = vpop.permute.xlu0 %543
      %vm545 = vcmask 883712
      %v546 = vsel %vm545, %v522, %v524
      %v547 = vsel %vm545, %v524, %v526
      %v548 = vsel %vm545, %v526, %v528
      %v549 = vsel %vm545, %v530, %v532
      %v550 = vsel %vm545, %v532, %v534
      %v551 = vsel %vm545, %v534, %v536
      %v552 = vsel %vm545, %v538, %v540
      %v553 = vsel %vm545, %v540, %v542
      %v554 = vsel %vm545, %v542, %v544
      %564 = vrot.lane.b32.xlu0 %v337, 92
      %v565 = vpop.permute.xlu0 %564
      %566 = vrot.lane.b32.xlu0 %v338, 92
      %v567 = vpop.permute.xlu0 %566
      %568 = vrot.lane.b32.xlu0 %v339, 92
      %v569 = vpop.permute.xlu0 %568
      %570 = vrot.lane.b32.xlu0 %v340, 92
      %v571 = vpop.permute.xlu0 %570
      %572 = vrot.lane.b32.xlu0 %v341, 92
      %v573 = vpop.permute.xlu0 %572
      %574 = vrot.lane.b32.xlu0 %v342, 92
      %v575 = vpop.permute.xlu0 %574
      %576 = vrot.lane.b32.xlu0 %v343, 92
      %v577 = vpop.permute.xlu0 %576
      %578 = vrot.lane.b32.xlu0 %v344, 92
      %v579 = vpop.permute.xlu0 %578
      %580 = vrot.lane.b32.xlu0 %v345, 92
      %v581 = vpop.permute.xlu0 %580
      %582 = vrot.lane.b32.xlu0 %v346, 92
      %v583 = vpop.permute.xlu0 %582
      %584 = vrot.lane.b32.xlu0 %v347, 92
      %v585 = vpop.permute.xlu0 %584
      %586 = vrot.lane.b32.xlu0 %v348, 92
      %v587 = vpop.permute.xlu0 %586
      %vm588 = vcmask 752640
      %v589 = vsel %vm588, %v565, %v567
      %v590 = vsel %vm588, %v567, %v569
      %v591 = vsel %vm588, %v569, %v571
      %v592 = vsel %vm588, %v573, %v575
      %v593 = vsel %vm588, %v575, %v577
      %v594 = vsel %vm588, %v577, %v579
      %v595 = vsel %vm588, %v581, %v583
      %v596 = vsel %vm588, %v583, %v585
      %v597 = vsel %vm588, %v585, %v587
      %607 = vrot.lane.b32.xlu0 %v337, 91
      %v608 = vpop.permute.xlu0 %607
      %609 = vrot.lane.b32.xlu0 %v338, 91
      %v610 = vpop.permute.xlu0 %609
      %611 = vrot.lane.b32.xlu0 %v339, 91
      %v612 = vpop.permute.xlu0 %611
      %613 = vrot.lane.b32.xlu0 %v340, 91
      %v614 = vpop.permute.xlu0 %613
      %615 = vrot.lane.b32.xlu0 %v341, 91
      %v616 = vpop.permute.xlu0 %615
      %617 = vrot.lane.b32.xlu0 %v342, 91
      %v618 = vpop.permute.xlu0 %617
      %619 = vrot.lane.b32.xlu0 %v343, 91
      %v620 = vpop.permute.xlu0 %619
      %621 = vrot.lane.b32.xlu0 %v344, 91
      %v622 = vpop.permute.xlu0 %621
      %623 = vrot.lane.b32.xlu0 %v345, 91
      %v624 = vpop.permute.xlu0 %623
      %625 = vrot.lane.b32.xlu0 %v346, 91
      %v626 = vpop.permute.xlu0 %625
      %627 = vrot.lane.b32.xlu0 %v347, 91
      %v628 = vpop.permute.xlu0 %627
      %629 = vrot.lane.b32.xlu0 %v348, 91
      %v630 = vpop.permute.xlu0 %629
      %vm631 = vcmask 744448
      %v632 = vsel %vm631, %v608, %v610
      %v633 = vsel %vm631, %v610, %v612
      %v634 = vsel %vm631, %v612, %v614
      %v635 = vsel %vm631, %v616, %v618
      %v636 = vsel %vm631, %v618, %v620
      %v637 = vsel %vm631, %v620, %v622
      %v638 = vsel %vm631, %v624, %v626
      %v639 = vsel %vm631, %v626, %v628
      %v640 = vsel %vm631, %v628, %v630
      %650 = vrot.lane.b32.xlu0 %v337, 90
      %v651 = vpop.permute.xlu0 %650
      %652 = vrot.lane.b32.xlu0 %v338, 90
      %v653 = vpop.permute.xlu0 %652
      %654 = vrot.lane.b32.xlu0 %v339, 90
      %v655 = vpop.permute.xlu0 %654
      %656 = vrot.lane.b32.xlu0 %v340, 90
      %v657 = vpop.permute.xlu0 %656
      %658 = vrot.lane.b32.xlu0 %v341, 90
      %v659 = vpop.permute.xlu0 %658
      %660 = vrot.lane.b32.xlu0 %v342, 90
      %v661 = vpop.permute.xlu0 %660
      %662 = vrot.lane.b32.xlu0 %v343, 90
      %v663 = vpop.permute.xlu0 %662
      %664 = vrot.lane.b32.xlu0 %v344, 90
      %v665 = vpop.permute.xlu0 %664
      %666 = vrot.lane.b32.xlu0 %v345, 90
      %v667 = vpop.permute.xlu0 %666
      %668 = vrot.lane.b32.xlu0 %v346, 90
      %v669 = vpop.permute.xlu0 %668
      %670 = vrot.lane.b32.xlu0 %v347, 90
      %v671 = vpop.permute.xlu0 %670
      %672 = vrot.lane.b32.xlu0 %v348, 90
      %v673 = vpop.permute.xlu0 %672
      %vm674 = vcmask 736256
      %v675 = vsel %vm674, %v651, %v653
      %v676 = vsel %vm674, %v653, %v655
      %v677 = vsel %vm674, %v655, %v657
      %v678 = vsel %vm674, %v659, %v661
      %v679 = vsel %vm674, %v661, %v663
      %v680 = vsel %vm674, %v663, %v665
      %v681 = vsel %vm674, %v667, %v669
      %v682 = vsel %vm674, %v669, %v671
      %v683 = vsel %vm674, %v671, %v673
      %v693 = vld [vmem:[%s1] sm:$0xff]
      %v694 = vld [vmem:[%s1 + $0x8] sm:$0xff]
      %v695 = vld [vmem:[%s1 + $0x10] sm:$0xff]
      %v696 = vld [vmem:[%s1 + $0x18] sm:$0xff]
      %v701 = vunpack.c.l.b16 %v693
      %v702 = vunpack.c.h.b16 %v693
      %v703 = vunpack.c.l.b16 %v694
      %v704 = vunpack.c.h.b16 %v694
      %v705 = vunpack.c.l.b16 %v695
      %v706 = vunpack.c.h.b16 %v695
      %v707 = vunpack.c.l.b16 %v696
      %v708 = vunpack.c.h.b16 %v696
      %v709 = vpack.c.b16 %v705, %v701
      %v710 = vpack.c.b16 %v706, %v702
      %v711 = vpack.c.b16 %v707, %v703
      %v712 = vpack.c.b16 %v708, %v704
      %vm716 = vcmask 392192
      %v718 = vsel %vm716, %v712, 0
      %720 = vmatpush.bf16.msra.mxu0 %v420
      %721 = vmatpush.bf16.msra.mxu0 %v417
      %722 = vmatpush.bf16.msra.mxu0 %v380
      %723 = vmatpush.bf16.msra.mxu0 %v377
      %724 = vmatpush.bf16.msra.mxu0 %v374
      %725 = vmatpush.bf16.msra.mxu0 %v289
      %726 = vmatpush.bf16.msra.mxu0 %v286
      %727 = vmatpush.bf16.msra.mxu0 %v283
      %728 = vmatmul.bf16.gmra.mxu0 %v709
      %v729 = vpop.f32.mrf.mxu0
      %v730 = vadd.f32 0.0, %v729
      %v731 = vpop.f32.mrf.mxu0
      %v732 = vadd.f32 0.0, %v731
      %733 = vdwg.mxu0
      %734 = vmatpush.bf16.msra.mxu0 %v546
      %735 = vmatpush.bf16.msra.mxu0 %v509
      %736 = vmatpush.bf16.msra.mxu0 %v506
      %737 = vmatpush.bf16.msra.mxu0 %v503
      %738 = vmatpush.bf16.msra.mxu0 %v466
      %739 = vmatpush.bf16.msra.mxu0 %v463
      %740 = vmatpush.bf16.msra.mxu0 %v460
      %741 = vmatpush.bf16.msra.mxu0 %v423
      %742 = vmatmul.bf16.gmra.mxu0 %v710
      %v743 = vpop.f32.mrf.mxu0
      %v744 = vadd.f32 %v730, %v743
      %v745 = vpop.f32.mrf.mxu0
      %v746 = vadd.f32 %v732, %v745
      %747 = vdwg.mxu0
      %748 = vmatpush.bf16.msra.mxu0 %v638
      %749 = vmatpush.bf16.msra.mxu0 %v635
      %750 = vmatpush.bf16.msra.mxu0 %v632
      %751 = vmatpush.bf16.msra.mxu0 %v595
      %752 = vmatpush.bf16.msra.mxu0 %v592
      %753 = vmatpush.bf16.msra.mxu0 %v589
      %754 = vmatpush.bf16.msra.mxu0 %v552
      %755 = vmatpush.bf16.msra.mxu0 %v549
      %756 = vmatmul.bf16.gmra.mxu0 %v711
      %v757 = vpop.f32.mrf.mxu0
      %v758 = vadd.f32 %v744, %v757
      %v759 = vpop.f32.mrf.mxu0
      %v760 = vadd.f32 %v746, %v759
      %761 = vdwg.mxu0
      %762 = vmatpush.bf16.msra.mxu0 0
      %763 = vmatpush.bf16.msra.mxu0 0
      %764 = vmatpush.bf16.msra.mxu0 0
      %765 = vmatpush.bf16.msra.mxu0 0
      %766 = vmatpush.bf16.msra.mxu0 0
      %767 = vmatpush.bf16.msra.mxu0 %v681
      %768 = vmatpush.bf16.msra.mxu0 %v678
      %769 = vmatpush.bf16.msra.mxu0 %v675
      %770 = vmatmul.bf16.gmra.mxu0 %v718
      %v771 = vpop.f32.mrf.mxu0
      %v772 = vadd.f32 %v758, %v771
      %v773 = vpop.f32.mrf.mxu0
      %v774 = vadd.f32 %v760, %v773
      %775 = vdwg.mxu0
      %776 = vmatpush.bf16.msra.mxu0 %v421
      %777 = vmatpush.bf16.msra.mxu0 %v418
      %778 = vmatpush.bf16.msra.mxu0 %v381
      %779 = vmatpush.bf16.msra.mxu0 %v378
      %780 = vmatpush.bf16.msra.mxu0 %v375
      %781 = vmatpush.bf16.msra.mxu0 %v290
      %782 = vmatpush.bf16.msra.mxu0 %v287
      %783 = vmatpush.bf16.msra.mxu0 %v284
      %784 = vmatmul.bf16.gmra.mxu0 %v709
      %v785 = vpop.f32.mrf.mxu0
      %v786 = vadd.f32 0.0, %v785
      %v787 = vpop.f32.mrf.mxu0
      %v788 = vadd.f32 0.0, %v787
      %789 = vdwg.mxu0
      %790 = vmatpush.bf16.msra.mxu0 %v547
      %791 = vmatpush.bf16.msra.mxu0 %v510
      %792 = vmatpush.bf16.msra.mxu0 %v507
      %793 = vmatpush.bf16.msra.mxu0 %v504
      %794 = vmatpush.bf16.msra.mxu0 %v467
      %795 = vmatpush.bf16.msra.mxu0 %v464
      %796 = vmatpush.bf16.msra.mxu0 %v461
      %797 = vmatpush.bf16.msra.mxu0 %v424
      %798 = vmatmul.bf16.gmra.mxu0 %v710
      %v799 = vpop.f32.mrf.mxu0
      %v800 = vadd.f32 %v786, %v799
      %v801 = vpop.f32.mrf.mxu0
      %v802 = vadd.f32 %v788, %v801
      %803 = vdwg.mxu0
      %804 = vmatpush.bf16.msra.mxu0 %v639
      %805 = vmatpush.bf16.msra.mxu0 %v636
      %806 = vmatpush.bf16.msra.mxu0 %v633
      %807 = vmatpush.bf16.msra.mxu0 %v596
      %808 = vmatpush.bf16.msra.mxu0 %v593
      %809 = vmatpush.bf16.msra.mxu0 %v590
      %810 = vmatpush.bf16.msra.mxu0 %v553
      %811 = vmatpush.bf16.msra.mxu0 %v550
      %812 = vmatmul.bf16.gmra.mxu0 %v711
      %v813 = vpop.f32.mrf.mxu0
      %v814 = vadd.f32 %v800, %v813
      %v815 = vpop.f32.mrf.mxu0
      %v816 = vadd.f32 %v802, %v815
      %817 = vdwg.mxu0
      %818 = vmatpush.bf16.msra.mxu0 0
      %819 = vmatpush.bf16.msra.mxu0 0
      %820 = vmatpush.bf16.msra.mxu0 0
      %821 = vmatpush.bf16.msra.mxu0 0
      %822 = vmatpush.bf16.msra.mxu0 0
      %823 = vmatpush.bf16.msra.mxu0 %v682
      %824 = vmatpush.bf16.msra.mxu0 %v679
      %825 = vmatpush.bf16.msra.mxu0 %v676
      %826 = vmatmul.bf16.gmra.mxu0 %v718
      %v827 = vpop.f32.mrf.mxu0
      %v828 = vadd.f32 %v814, %v827
      %v829 = vpop.f32.mrf.mxu0
      %v830 = vadd.f32 %v816, %v829
      %831 = vdwg.mxu0
      %832 = vmatpush.bf16.msra.mxu0 %v422
      %833 = vmatpush.bf16.msra.mxu0 %v419
      %834 = vmatpush.bf16.msra.mxu0 %v382
      %835 = vmatpush.bf16.msra.mxu0 %v379
      %836 = vmatpush.bf16.msra.mxu0 %v376
      %837 = vmatpush.bf16.msra.mxu0 %v291
      %838 = vmatpush.bf16.msra.mxu0 %v288
      %839 = vmatpush.bf16.msra.mxu0 %v285
      %840 = vmatmul.bf16.gmra.mxu0 %v709
      %v841 = vpop.f32.mrf.mxu0
      %v842 = vadd.f32 0.0, %v841
      %v843 = vpop.f32.mrf.mxu0
      %v844 = vadd.f32 0.0, %v843
      %845 = vdwg.mxu0
      %846 = vmatpush.bf16.msra.mxu0 %v548
      %847 = vmatpush.bf16.msra.mxu0 %v511
      %848 = vmatpush.bf16.msra.mxu0 %v508
      %849 = vmatpush.bf16.msra.mxu0 %v505
      %850 = vmatpush.bf16.msra.mxu0 %v468
      %851 = vmatpush.bf16.msra.mxu0 %v465
      %852 = vmatpush.bf16.msra.mxu0 %v462
      %853 = vmatpush.bf16.msra.mxu0 %v425
      %854 = vmatmul.bf16.gmra.mxu0 %v710
      %v855 = vpop.f32.mrf.mxu0
      %v856 = vadd.f32 %v842, %v855
      %v857 = vpop.f32.mrf.mxu0
      %v858 = vadd.f32 %v844, %v857
      %859 = vdwg.mxu0
      %860 = vmatpush.bf16.msra.mxu0 %v640
      %861 = vmatpush.bf16.msra.mxu0 %v637
      %862 = vmatpush.bf16.msra.mxu0 %v634
      %863 = vmatpush.bf16.msra.mxu0 %v597
      %864 = vmatpush.bf16.msra.mxu0 %v594
      %865 = vmatpush.bf16.msra.mxu0 %v591
      %866 = vmatpush.bf16.msra.mxu0 %v554
      %867 = vmatpush.bf16.msra.mxu0 %v551
      %868 = vmatmul.bf16.gmra.mxu0 %v711
      %v869 = vpop.f32.mrf.mxu0
      %v870 = vadd.f32 %v856, %v869
      %v871 = vpop.f32.mrf.mxu0
      %v872 = vadd.f32 %v858, %v871
      %873 = vdwg.mxu0
      %874 = vmatpush.bf16.msra.mxu0 0
      %875 = vmatpush.bf16.msra.mxu0 0
      %876 = vmatpush.bf16.msra.mxu0 0
      %877 = vmatpush.bf16.msra.mxu0 0
      %878 = vmatpush.bf16.msra.mxu0 0
      %879 = vmatpush.bf16.msra.mxu0 %v683
      %880 = vmatpush.bf16.msra.mxu0 %v680
      %881 = vmatpush.bf16.msra.mxu0 %v677
      %882 = vmatmul.bf16.gmra.mxu0 %v718
      %v883 = vpop.f32.mrf.mxu0
      %v884 = vadd.f32 %v870, %v883
      %v885 = vpop.f32.mrf.mxu0
      %v886 = vadd.f32 %v872, %v885
      %887 = vdwg.mxu0
      %v888 = vld [vmem:[%s2] sm:$0xff]
      %v889 = vld [vmem:[%s2 + $0x8] sm:$0xff]
      %891 = vset.pattern.permute.xlu0 0
      %892 = vperm.xlu0 %891, %v888
      %v893 = vpop.permute.xlu0 %892
      %896 = vset.pattern.permute.xlu0 0
      %897 = vperm.xlu0 %896, %v889
      %v898 = vpop.permute.xlu0 %897
      %v900 = vmul.f32 %v772, %v893
      %v901 = vmul.f32 %v828, %v893
      %v902 = vmul.f32 %v884, %v893
      %v903 = vmul.f32 %v774, %v898
      %v904 = vmul.f32 %v830, %v898
      %v905 = vmul.f32 %v886, %v898
      %v906 = vld [vmem:[%s3] sm:$0xff]
      %v907 = vld [vmem:[%s3 + $0x8] sm:$0xff]
      %909 = vset.pattern.permute.xlu0 0
      %910 = vperm.xlu0 %909, %v906
      %v911 = vpop.permute.xlu0 %910
      %914 = vset.pattern.permute.xlu0 0
      %915 = vperm.xlu0 %914, %v907
      %v916 = vpop.permute.xlu0 %915
      %v918 = vadd.f32 %v900, %v911
      %v919 = vadd.f32 %v901, %v911
      %v920 = vadd.f32 %v902, %v911
      %v921 = vadd.f32 %v903, %v916
      %v922 = vadd.f32 %v904, %v916
      %v923 = vadd.f32 %v905, %v916
      %v924 = vmax.f32 %v918, 0.0
      %v925 = vmax.f32 %v919, 0.0
      %v926 = vmax.f32 %v920, 0.0
      %v927 = vmax.f32 %v921, 0.0
      %v928 = vmax.f32 %v922, 0.0
      %v929 = vmax.f32 %v923, 0.0
      %v930 = vpack.c.bf16 %v925, %v924
      %v931 = vpack.c.bf16 %v926, %v926
      %v932 = vpack.c.bf16 %v928, %v927
      %v933 = vpack.c.bf16 %v929, %v929
      %934 = vst [vmem:[%s226] sm:$0xff] %v930
      %935 = vst [vmem:[%s226 + $0x8] sm:$0xf] %v931
      %936 = vst [vmem:[%s226 + $0xc] sm:$0xff] %v932
      %937 = vst [vmem:[%s226 + $0x14] sm:$0xf] %v933
      %s938 = smul.u32 3, %s20
      %p939 = scmp.lt.s32.totalorder %s19, 1
      %s940 = scalar_select %p939, %s19, 1
      %p941 = scmp.lt.s32.totalorder %s938, 2
      %s942 = scalar_select %p941, %s938, 2
      %s943 = smul.addr %s940, 6
      %s944 = sadd.s32 %s942, %s943
      %s945 = smul.addr %s944, 4
      %s946 = scalar_lea.vmem %s4, %s945
      // Predicated region
      $region37: #{gunet_forward.8} parent=35 // pred_check
        %p947 = pneg %p138
      $region38: #{gunet_forward.8} parent=35 // pred_check_branch
        %949 = sbr.rel (%p947) target = $region40
      $region39: #{gunet_forward.8} parent=35 // pred_region
        %s950 = smul.u32 3, %s20
      $region40: #{gunet_forward.8} parent=35 // pred_fallthru
        _
    $region36: #{gunet_forward.8} parent=5 // pred_fallthru
      _
    %p951 = scmp.le.s32.totalorder 2, %s10
    // Predicated region
    $region41: #{gunet_forward.8} parent=5 // pred_check
      %p952 = pneg %p951
    $region42: #{gunet_forward.8} parent=5 // pred_check_branch
      %954 = sbr.rel (%p952) target = $region44
    $region43: #{gunet_forward.8} parent=5 // pred_region
      %s955 = ssub.s32 %s10, 2
      // Predicated region
      $region45: #{gunet_forward.8} parent=43 // pred_check
        %p956 = pneg %p144
      $region46: #{gunet_forward.8} parent=43 // pred_check_branch
        %958 = sbr.rel (%p956) target = $region48
      $region47: #{gunet_forward.8} parent=43 // pred_region
        %s959 = smul.u32 3, %s22
        %p960 = scmp.lt.s32.totalorder %s21, 1
        %s961 = scalar_select %p960, %s21, 1
        %p962 = scmp.lt.s32.totalorder %s959, 2
        %s963 = scalar_select %p962, %s959, 2
        %s964 = smul.addr %s961, 6
        %s965 = sadd.s32 %s963, %s964
        %s966 = smul.addr %s965, 4
        %s967 = scalar_lea.vmem %s4, %s966
      $region48: #{gunet_forward.8} parent=43 // pred_fallthru
        _
    $region44: #{gunet_forward.8} parent=5 // pred_fallthru
      _
  $region6: #{gunet_forward.8} parent=0 // loop_footer
    %s14 = sadd.s32 1, %s10
  $region7: #{gunet_forward.8} parent=0 // loop_footer_branch
    %9 = sbr.rel target = $region3
  $region8: #{gunet_forward.8} parent=0 // loop_exit
    _

// kernel: gunet_forward.9
$region0: #{gunet_forward.9}
  #allocation0 [shape = 'u32[]', space=smem, size = 0x4, offset = 0x4, fixed_abs, tag = 'smem constant byte address 0x4 - core index']
  #allocation1 [shape = 'u32[72,128]{1,0:T(1,128)}', space=vmem, size = 0x9000, scoped, tag = 'internal scratch']
  %s0 = inlined_call_operand.vmem [shape: bf16[2,24,1280], index: 0, kind: input, shape index: {}]
  %s1 = inlined_call_operand.vmem [shape: bf16[8,216], index: 1, kind: input, shape index: {}]
  %s2 = inlined_call_operand.vmem [shape: f32[8,1], index: 2, kind: input, shape index: {}]
  %s3 = inlined_call_operand.vmem [shape: f32[8,1], index: 3, kind: input, shape index: {}]
  %s4 = inlined_call_operand.vmem [shape: bf16[2,8,1152], index: 4, kind: output, shape index: {}]
  %s5 = sld [smem:[#allocation0]]
  $region49: #{gunet_forward.9} parent=0
    _
  %s7 = ssub.s32 1, %s5
  %s8 = scalar_select 0, %s7, %s5
  loop: start=0, step=1, limit=4
  $region2: #{gunet_forward.9} parent=0 // loop_pre_header
    _
  $region3: #{gunet_forward.9} parent=0 // loop_header
    %s10 = sphi 0, %s14
    %p11 = scmp.ge.s32.totalorder %s10, 4
    %s17 = sphi 0, %s29
    %s18 = sphi 0, %s25
    %s19 = sphi 0, %s17
    %s20 = sphi 0, %s18
    %s21 = sphi 0, %s19
    %s22 = sphi 0, %s20
    %s34 = sphi 0, %s36
    %s37 = sphi 0, %s34
    %s38 = sphi 0, %s37
    %s54 = sphi 0, %s38
    %s58 = sphi 0, %s58
    %s60 = sphi 0, %s58
    %s61 = sphi 0, %s60
    %s75 = sphi 0, %s61
    %s79 = sphi 0, %s79
    %s81 = sphi 0, %s79
    %s82 = sphi 0, %s81
    %s96 = sphi 0, %s82
    %s100 = sphi 0, %s100
    %s102 = sphi 0, %s100
    %s103 = sphi 0, %s102
    %s117 = sphi 0, %s103
    %s125 = sphi 0, %s127
    %s128 = sphi 0, %s125
    %s129 = sphi 0, %s128
    %s145 = sphi 0, %s129
  $region4: #{gunet_forward.9} parent=0 // loop_header_branch
    %13 = sbr.rel (%p11) target = $region8
  $region5: #{gunet_forward.9} parent=0 // loop_body
    %s15 = ssub.s32 %s10, 1
    %s16 = ssub.s32 %s10, 2
    %s23 = sadd.s32 1, %s18
    %p24 = scmp.ge.s32.totalorder %s23, 1
    %s25 = scalar_select %p24, 0, %s23
    %s26 = sadd.s32 1, %s17
    %s27 = scalar_select %p24, %s26, %s17
    %p28 = scmp.ge.s32.totalorder %s27, 2
    %s29 = scalar_select %p28, 0, %s27
    %s30 = sadd.s32 %s17, %s18
    %s31 = sadd.s32 %s29, %s25
    %s32 = ssub.s32 %s30, %s31
    %p33 = scmp.eq.s32.totalorder %s32, 0
    %s35 = sadd.s32 %s34, 1
    %s36 = scalar_select %p33, %s34, %s35
    %p39 = pneg %p33
    %p40 = scmp.eq.s32.totalorder %s10, 1
    %p41 = por %p39, %p40
    %p42 = scmp.ne.s32.totalorder %s34, %s37
    %p43 = scmp.eq.s32.totalorder %s10, 0
    %p44 = por %p42, %p43
    %p45 = scmp.ne.s32.totalorder %s34, %s37
    %p46 = scmp.eq.s32.totalorder %s15, 1
    %p47 = por %p45, %p46
    %p48 = scmp.ne.s32.totalorder %s37, %s38
    %p49 = scmp.eq.s32.totalorder %s15, 0
    %p50 = por %p48, %p49
    %p51 = scmp.ne.s32.totalorder %s37, %s38
    %p52 = scmp.eq.s32.totalorder %s16, 1
    %p53 = por %p51, %p52
    %p55 = scmp.ne.s32.totalorder %s38, %s54
    %p56 = scmp.eq.s32.totalorder %s16, 0
    %p57 = por %p55, %p56
    %s59 = sadd.s32 %s58, 1
    %p62 = scmp.eq.s32.totalorder %s10, 1
    %p63 = scmp.ne.s32.totalorder %s58, %s60
    %p64 = scmp.eq.s32.totalorder %s10, 0
    %p65 = por %p63, %p64
    %p66 = scmp.ne.s32.totalorder %s58, %s60
    %p67 = scmp.eq.s32.totalorder %s15, 1
    %p68 = por %p66, %p67
    %p69 = scmp.ne.s32.totalorder %s60, %s61
    %p70 = scmp.eq.s32.totalorder %s15, 0
    %p71 = por %p69, %p70
    %p72 = scmp.ne.s32.totalorder %s60, %s61
    %p73 = scmp.eq.s32.totalorder %s16, 1
    %p74 = por %p72, %p73
    %p76 = scmp.ne.s32.totalorder %s61, %s75
    %p77 = scmp.eq.s32.totalorder %s16, 0
    %p78 = por %p76, %p77
    %s80 = sadd.s32 %s79, 1
    %p83 = scmp.eq.s32.totalorder %s10, 1
    %p84 = scmp.ne.s32.totalorder %s79, %s81
    %p85 = scmp.eq.s32.totalorder %s10, 0
    %p86 = por %p84, %p85
    %p87 = scmp.ne.s32.totalorder %s79, %s81
    %p88 = scmp.eq.s32.totalorder %s15, 1
    %p89 = por %p87, %p88
    %p90 = scmp.ne.s32.totalorder %s81, %s82
    %p91 = scmp.eq.s32.totalorder %s15, 0
    %p92 = por %p90, %p91
    %p93 = scmp.ne.s32.totalorder %s81, %s82
    %p94 = scmp.eq.s32.totalorder %s16, 1
    %p95 = por %p93, %p94
    %p97 = scmp.ne.s32.totalorder %s82, %s96
    %p98 = scmp.eq.s32.totalorder %s16, 0
    %p99 = por %p97, %p98
    %s101 = sadd.s32 %s100, 1
    %p104 = scmp.eq.s32.totalorder %s10, 1
    %p105 = scmp.ne.s32.totalorder %s100, %s102
    %p106 = scmp.eq.s32.totalorder %s10, 0
    %p107 = por %p105, %p106
    %p108 = scmp.ne.s32.totalorder %s100, %s102
    %p109 = scmp.eq.s32.totalorder %s15, 1
    %p110 = por %p108, %p109
    %p111 = scmp.ne.s32.totalorder %s102, %s103
    %p112 = scmp.eq.s32.totalorder %s15, 0
    %p113 = por %p111, %p112
    %p114 = scmp.ne.s32.totalorder %s102, %s103
    %p115 = scmp.eq.s32.totalorder %s16, 1
    %p116 = por %p114, %p115
    %p118 = scmp.ne.s32.totalorder %s103, %s117
    %p119 = scmp.eq.s32.totalorder %s16, 0
    %p120 = por %p118, %p119
    %s121 = ssub.s32 %s17, %s29
    %s122 = ssub.s32 %s18, %s25
    %s123 = sor.u32 %s121, %s122
    %p124 = scmp.eq.s32.totalorder %s123, 0
    %s126 = sadd.s32 %s125, 1
    %s127 = scalar_select %p124, %s125, %s126
    %p130 = pneg %p124
    %p131 = scmp.eq.s32.totalorder %s10, 1
    %p132 = por %p130, %p131
    %p133 = scmp.ne.s32.totalorder %s125, %s128
    %p134 = scmp.eq.s32.totalorder %s10, 0
    %p135 = por %p133, %p134
    %p136 = scmp.ne.s32.totalorder %s125, %s128
    %p137 = scmp.eq.s32.totalorder %s15, 1
    %p138 = por %p136, %p137
    %p139 = scmp.ne.s32.totalorder %s128, %s129
    %p140 = scmp.eq.s32.totalorder %s15, 0
    %p141 = por %p139, %p140
    %p142 = scmp.ne.s32.totalorder %s128, %s129
    %p143 = scmp.eq.s32.totalorder %s16, 1
    %p144 = por %p142, %p143
    %p146 = scmp.ne.s32.totalorder %s129, %s145
    %p147 = scmp.eq.s32.totalorder %s16, 0
    %p148 = por %p146, %p147
    %p149 = scmp.le.s32.totalorder 1, %s10
    %p150 = scmp.lt.s32.totalorder %s10, 3
    %p151 = pnand %p149, %p150
    %p152 = pneg %p151
    // Predicated region
    $region9: #{gunet_forward.9} parent=5 // pred_check
      _
    $region10: #{gunet_forward.9} parent=5 // pred_check_branch
      %154 = sbr.rel (%p151) target = $region12
    $region11: #{gunet_forward.9} parent=5 // pred_region
      %s155 = ssub.s32 %s10, 1
      // Predicated region
      $region13: #{gunet_forward.9} parent=11 // pred_check
        %p156 = pneg %p71
      $region14: #{gunet_forward.9} parent=11 // pred_check_branch
        %158 = sbr.rel (%p156) target = $region16
      $region15: #{gunet_forward.9} parent=11 // pred_region
        _
      $region16: #{gunet_forward.9} parent=11 // pred_fallthru
        _
      // Predicated region
      $region17: #{gunet_forward.9} parent=11 // pred_check
        %p159 = pneg %p92
      $region18: #{gunet_forward.9} parent=11 // pred_check_branch
        %161 = sbr.rel (%p159) target = $region20
      $region19: #{gunet_forward.9} parent=11 // pred_region
        _
      $region20: #{gunet_forward.9} parent=11 // pred_fallthru
        _
      // Predicated region
      $region21: #{gunet_forward.9} parent=11 // pred_check
        %p162 = pneg %p113
      $region22: #{gunet_forward.9} parent=11 // pred_check_branch
        %164 = sbr.rel (%p162) target = $region24
      $region23: #{gunet_forward.9} parent=11 // pred_region
        _
      $region24: #{gunet_forward.9} parent=11 // pred_fallthru
        _
    $region12: #{gunet_forward.9} parent=5 // pred_fallthru
      _
    %p165 = scmp.lt.s32.totalorder %s10, 2
    // Predicated region
    $region25: #{gunet_forward.9} parent=5 // pred_check
      %p166 = pneg %p165
    $region26: #{gunet_forward.9} parent=5 // pred_check_branch
      %168 = sbr.rel (%p166) target = $region28
    $region27: #{gunet_forward.9} parent=5 // pred_region
      // Predicated region
      $region29: #{gunet_forward.9} parent=27 // pred_check
        %p169 = pneg %p44
      $region30: #{gunet_forward.9} parent=27 // pred_check_branch
        %171 = sbr.rel (%p169) target = $region32
      $region31: #{gunet_forward.9} parent=27 // pred_region
        %s172 = sadd.s32 %s17, %s18
        %p173 = scmp.lt.s32.totalorder %s172, 1
        %s174 = scalar_select %p173, %s172, 1
        %s175 = smul.addr %s174, 30
        %s176 = smul.addr %s175, 4
        %s177 = scalar_lea.vmem %s0, %s176
        %s178 = sadd.s32 %s17, %s18
      $region32: #{gunet_forward.9} parent=27 // pred_fallthru
        _
    $region28: #{gunet_forward.9} parent=5 // pred_fallthru
      _
    %p179 = scmp.le.s32.totalorder 1, %s10
    %p180 = scmp.lt.s32.totalorder %s10, 3
    %p181 = pnand %p179, %p180
    %p182 = pneg %p181
    // Predicated region
    $region33: #{gunet_forward.9} parent=5 // pred_check
      _
    $region34: #{gunet_forward.9} parent=5 // pred_check_branch
      %184 = sbr.rel (%p181) target = $region36
    $region35: #{gunet_forward.9} parent=5 // pred_region
      %s185 = ssub.s32 %s10, 1
      %s186 = sadd.s32 %s19, %s20
      %p187 = scmp.lt.s32.totalorder %s186, 1
      %s188 = scalar_select %p187, %s186, 1
      %s189 = smul.addr %s188, 30
      %s190 = smul.addr %s189, 4
      %s191 = scalar_lea.vmem %s0, %s190
      %p192 = pneg %p50
      %p193 = pneg %p47
      %p194 = pneg %p71
      %p195 = pneg %p68
      %p196 = pneg %p92
      %p197 = pneg %p89
      %p198 = pneg %p113
      %p199 = pneg %p110
      %p200 = pneg %p141
      %p201 = pneg %p138
      %s202 = smul.u32 9, %s20
      %p203 = scmp.lt.s32.totalorder %s19, 1
      %s204 = scalar_select %p203, %s19, 1
      %p205 = scmp.lt.s32.totalorder %s202, 8
      %s206 = scalar_select %p205, %s202, 8
      %s207 = smul.addr %s204, 9
      %s208 = sadd.s32 %s206, %s207
      %s209 = smul.addr %s208, 4
      %s210 = scalar_lea.vmem %s4, %s209
      %s211 = sadd.s32 %s19, %s20
      %p212 = scmp.lt.s32.totalorder %s211, 1
      %s213 = scalar_select %p212, %s211, 1
      %s214 = smul.addr %s213, 30
      %s215 = smul.addr %s214, 4
      %s216 = scalar_lea.vmem %s0, %s215
      %s217 = sadd.s32 %s19, %s20
      %s218 = smul.u32 9, %s20
      %p219 = scmp.lt.s32.totalorder %s19, 1
      %s220 = scalar_select %p219, %s19, 1
      %p221 = scmp.lt.s32.totalorder %s218, 8
      %s222 = scalar_select %p221, %s218, 8
      %s223 = smul.addr %s220, 9
      %s224 = sadd.s32 %s222, %s223
      %s225 = smul.addr %s224, 4
      %s226 = scalar_lea.vmem %s4, %s225
      %s227 = smul.u32 9, %s20
      %v229 = vld [vmem:[%s216] sm:$0xff]
      %v230 = vld [vmem:[%s216 + $0x8] sm:$0xff]
      %v231 = vld [vmem:[%s216 + $0x10] sm:$0xff]
      %v232 = vld [vmem:[%s216 + $0x18] sm:$0xff]
      %v233 = vld [vmem:[%s216 + $0x20] sm:$0xf]
      %v234 = vld [vmem:[%s216 + $0x28] sm:$0xff]
      %v235 = vld [vmem:[%s216 + $0x30] sm:$0xff]
      %v236 = vld [vmem:[%s216 + $0x38] sm:$0xff]
      %v237 = vld [vmem:[%s216 + $0x40] sm:$0xff]
      %v238 = vld [vmem:[%s216 + $0x48] sm:$0xf]
      %v239 = vld [vmem:[%s216 + $0x50] sm:$0xff]
      %v240 = vld [vmem:[%s216 + $0x58] sm:$0xff]
      %v241 = vld [vmem:[%s216 + $0x60] sm:$0xff]
      %v242 = vld [vmem:[%s216 + $0x68] sm:$0xff]
      %v243 = vld [vmem:[%s216 + $0x70] sm:$0xf]
      %v244 = vld [vmem:[%s216] sm:$0xff]
      %v245 = vld [vmem:[%s216 + $0x8] sm:$0xff]
      %v246 = vld [vmem:[%s216 + $0x10] sm:$0xff]
      %v247 = vld [vmem:[%s216 + $0x18] sm:$0xff]
      %v248 = vld [vmem:[%s216 + $0x20] sm:$0xff]
      %v249 = vld [vmem:[%s216 + $0x28] sm:$0xff]
      %v250 = vld [vmem:[%s216 + $0x30] sm:$0xff]
      %v251 = vld [vmem:[%s216 + $0x38] sm:$0xff]
      %v252 = vld [vmem:[%s216 + $0x40] sm:$0xff]
      %v253 = vld [vmem:[%s216 + $0x48] sm:$0xff]
      %v254 = vld [vmem:[%s216 + $0x50] sm:$0xff]
      %v255 = vld [vmem:[%s216 + $0x58] sm:$0xff]
      %v256 = vld [vmem:[%s216 + $0x60] sm:$0xff]
      %v257 = vld [vmem:[%s216 + $0x68] sm:$0xff]
      %v258 = vld [vmem:[%s216 + $0x70] sm:$0xff]
      %v274 = vunpack.c.l.b16 %v229
      %v275 = vunpack.c.h.b16 %v229
      %v276 = vunpack.c.l.b16 %v230
      %v277 = vunpack.c.h.b16 %v230
      %v278 = vunpack.c.l.b16 %v231
      %v279 = vunpack.c.h.b16 %v231
      %v280 = vunpack.c.l.b16 %v232
      %v281 = vunpack.c.h.b16 %v232
      %v282 = vunpack.c.l.b16 %v233
      %v283 = vunpack.c.l.b16 %v234
      %v284 = vunpack.c.h.b16 %v234
      %v285 = vunpack.c.l.b16 %v235
      %v286 = vunpack.c.h.b16 %v235
      %v287 = vunpack.c.l.b16 %v236
      %v288 = vunpack.c.h.b16 %v236
      %v289 = vunpack.c.l.b16 %v237
      %v290 = vunpack.c.h.b16 %v237
      %v291 = vunpack.c.l.b16 %v238
      %v292 = vunpack.c.l.b16 %v239
      %v293 = vunpack.c.h.b16 %v239
      %v294 = vunpack.c.l.b16 %v240
      %v295 = vunpack.c.h.b16 %v240
      %v296 = vunpack.c.l.b16 %v241
      %v297 = vunpack.c.h.b16 %v241
      %v298 = vunpack.c.l.b16 %v242
      %v299 = vunpack.c.h.b16 %v242
      %v300 = vunpack.c.l.b16 %v243
      %v301 = vpack.c.b16 %v283, %v274
      %v302 = vpack.c.b16 %v284, %v275
      %v303 = vpack.c.b16 %v285, %v276
      %v304 = vpack.c.b16 %v286, %v277
      %v305 = vpack.c.b16 %v287, %v278
      %v306 = vpack.c.b16 %v288, %v279
      %v307 = vpack.c.b16 %v289, %v280
      %v308 = vpack.c.b16 %v290, %v281
      %v309 = vpack.c.b16 %v291, %v282
      %v310 = vpack.c.b16 %v292, %v292
      %v311 = vpack.c.b16 %v293, %v293
      %v312 = vpack.c.b16 %v294, %v294
      %v313 = vpack.c.b16 %v295, %v295
      %v314 = vpack.c.b16 %v296, %v296
      %v315 = vpack.c.b16 %v297, %v297
      %v316 = vpack.c.b16 %v298, %v298
      %v317 = vpack.c.b16 %v299, %v299
      %v318 = vpack.c.b16 %v300, %v300
      %v343 = vunpack.c.l.b16 %v244
      %v344 = vunpack.c.h.b16 %v244
      %v345 = vunpack.c.l.b16 %v245
      %v346 = vunpack.c.h.b16 %v245
      %v347 = vunpack.c.l.b16 %v246
      %v348 = vunpack.c.h.b16 %v246
      %v349 = vunpack.c.l.b16 %v247
      %v350 = vunpack.c.h.b16 %v247
      %v351 = vunpack.c.l.b16 %v248
      %v352 = vunpack.c.h.b16 %v248
      %v353 = vunpack.c.l.b16 %v249
      %v354 = vunpack.c.h.b16 %v249
      %v355 = vunpack.c.l.b16 %v250
      %v356 = vunpack.c.h.b16 %v250
      %v357 = vunpack.c.l.b16 %v251
      %v358 = vunpack.c.h.b16 %v251
      %v359 = vunpack.c.l.b16 %v252
      %v360 = vunpack.c.h.b16 %v252
      %v361 = vunpack.c.l.b16 %v253
      %v362 = vunpack.c.h.b16 %v253
      %v363 = vunpack.c.l.b16 %v254
      %v364 = vunpack.c.h.b16 %v254
      %v365 = vunpack.c.l.b16 %v255
      %v366 = vunpack.c.h.b16 %v255
      %v367 = vunpack.c.l.b16 %v256
      %v368 = vunpack.c.h.b16 %v256
      %v369 = vunpack.c.l.b16 %v257
      %v370 = vunpack.c.h.b16 %v257
      %v371 = vunpack.c.l.b16 %v258
      %v372 = vunpack.c.h.b16 %v258
      %v373 = vpack.c.b16 %v343, %v343
      %v374 = vpack.c.b16 %v344, %v344
      %v375 = vpack.c.b16 %v345, %v345
      %v376 = vpack.c.b16 %v346, %v346
      %v377 = vpack.c.b16 %v347, %v347
      %v378 = vpack.c.b16 %v348, %v348
      %v379 = vpack.c.b16 %v349, %v349
      %v380 = vpack.c.b16 %v350, %v350
      %v381 = vpack.c.b16 %v351, %v351
      %v382 = vpack.c.b16 %v352, %v352
      %v383 = vpack.c.b16 %v363, %v353
      %v384 = vpack.c.b16 %v364, %v354
      %v385 = vpack.c.b16 %v365, %v355
      %v386 = vpack.c.b16 %v366, %v356
      %v387 = vpack.c.b16 %v367, %v357
      %v388 = vpack.c.b16 %v368, %v358
      %v389 = vpack.c.b16 %v369, %v359
      %v390 = vpack.c.b16 %v370, %v360
      %v391 = vpack.c.b16 %v371, %v361
      %v392 = vpack.c.b16 %v372, %v362
      %393 = vrot.lane.b32.xlu0 %v373, 127
      %v394 = vpop.permute.xlu0 %393
      %395 = vrot.lane.b32.xlu0 %v374, 127
      %v396 = vpop.permute.xlu0 %395
      %397 = vrot.lane.b32.xlu0 %v375, 127
      %v398 = vpop.permute.xlu0 %397
      %399 = vrot.lane.b32.xlu0 %v376, 127
      %v400 = vpop.permute.xlu0 %399
      %401 = vrot.lane.b32.xlu0 %v377, 127
      %v402 = vpop.permute.xlu0 %401
      %403 = vrot.lane.b32.xlu0 %v378, 127
      %v404 = vpop.permute.xlu0 %403
      %405 = vrot.lane.b32.xlu0 %v379, 127
      %v406 = vpop.permute.xlu0 %405
      %407 = vrot.lane.b32.xlu0 %v380, 127
      %v408 = vpop.permute.xlu0 %407
      %409 = vrot.lane.b32.xlu0 %v381, 127
      %v410 = vpop.permute.xlu0 %409
      %411 = vrot.lane.b32.xlu0 %v382, 127
      %v412 = vpop.permute.xlu0 %411
      %413 = vrot.lane.b32.xlu0 %v383, 127
      %v414 = vpop.permute.xlu0 %413
      %415 = vrot.lane.b32.xlu0 %v384, 127
      %v416 = vpop.permute.xlu0 %415
      %417 = vrot.lane.b32.xlu0 %v385, 127
      %v418 = vpop.permute.xlu0 %417
      %419 = vrot.lane.b32.xlu0 %v386, 127
      %v420 = vpop.permute.xlu0 %419
      %421 = vrot.lane.b32.xlu0 %v387, 127
      %v422 = vpop.permute.xlu0 %421
      %423 = vrot.lane.b32.xlu0 %v388, 127
      %v424 = vpop.permute.xlu0 %423
      %425 = vrot.lane.b32.xlu0 %v389, 127
      %v426 = vpop.permute.xlu0 %425
      %427 = vrot.lane.b32.xlu0 %v390, 127
      %v428 = vpop.permute.xlu0 %427
      %429 = vrot.lane.b32.xlu0 %v391, 127
      %v430 = vpop.permute.xlu0 %429
      %431 = vrot.lane.b32.xlu0 %v392, 127
      %v432 = vpop.permute.xlu0 %431
      %vm433 = vcmask 1039360
      %v434 = vsel %vm433, %v394, %v396
      %v435 = vsel %vm433, %v396, %v398
      %v436 = vsel %vm433, %v398, %v400
      %v437 = vsel %vm433, %v400, %v402
      %v438 = vsel %vm433, %v402, %v404
      %v439 = vsel %vm433, %v404, %v406
      %v440 = vsel %vm433, %v406, %v408
      %v441 = vsel %vm433, %v408, %v410
      %v442 = vsel %vm433, %v410, %v412
      %v443 = vsel %vm433, %v414, %v416
      %v444 = vsel %vm433, %v416, %v418
      %v445 = vsel %vm433, %v418, %v420
      %v446 = vsel %vm433, %v420, %v422
      %v447 = vsel %vm433, %v422, %v424
      %v448 = vsel %vm433, %v424, %v426
      %v449 = vsel %vm433, %v426, %v428
      %v450 = vsel %vm433, %v428, %v430
      %v451 = vsel %vm433, %v430, %v432
      %v461 = vpack.c.b16 %v353, %v343
      %v462 = vpack.c.b16 %v354, %v344
      %v463 = vpack.c.b16 %v355, %v345
      %v464 = vpack.c.b16 %v356, %v346
      %v465 = vpack.c.b16 %v357, %v347
      %v466 = vpack.c.b16 %v358, %v348
      %v467 = vpack.c.b16 %v359, %v349
      %v468 = vpack.c.b16 %v360, %v350
      %v469 = vpack.c.b16 %v361, %v351
      %v470 = vpack.c.b16 %v362, %v352
      %v471 = vpack.c.b16 %v363, %v363
      %v472 = vpack.c.b16 %v364, %v364
      %v473 = vpack.c.b16 %v365, %v365
      %v474 = vpack.c.b16 %v366, %v366
      %v475 = vpack.c.b16 %v367, %v367
      %v476 = vpack.c.b16 %v368, %v368
      %v477 = vpack.c.b16 %v369, %v369
      %v478 = vpack.c.b16 %v370, %v370
      %v479 = vpack.c.b16 %v371, %v371
      %v480 = vpack.c.b16 %v372, %v372
      %481 = vrot.lane.b32.xlu0 %v461, 126
      %v482 = vpop.permute.xlu0 %481
      %483 = vrot.lane.b32.xlu0 %v462, 126
      %v484 = vpop.permute.xlu0 %483
      %485 = vrot.lane.b32.xlu0 %v463, 126
      %v486 = vpop.permute.xlu0 %485
      %487 = vrot.lane.b32.xlu0 %v464, 126
      %v488 = vpop.permute.xlu0 %487
      %489 = vrot.lane.b32.xlu0 %v465, 126
      %v490 = vpop.permute.xlu0 %489
      %491 = vrot.lane.b32.xlu0 %v466, 126
      %v492 = vpop.permute.xlu0 %491
      %493 = vrot.lane.b32.xlu0 %v467, 126
      %v494 = vpop.permute.xlu0 %493
      %495 = vrot.lane.b32.xlu0 %v468, 126
      %v496 = vpop.permute.xlu0 %495
      %497 = vrot.lane.b32.xlu0 %v469, 126
      %v498 = vpop.permute.xlu0 %497
      %499 = vrot.lane.b32.xlu0 %v470, 126
      %v500 = vpop.permute.xlu0 %499
      %501 = vrot.lane.b32.xlu0 %v471, 126
      %v502 = vpop.permute.xlu0 %501
      %503 = vrot.lane.b32.xlu0 %v472, 126
      %v504 = vpop.permute.xlu0 %503
      %505 = vrot.lane.b32.xlu0 %v473, 126
      %v506 = vpop.permute.xlu0 %505
      %507 = vrot.lane.b32.xlu0 %v474, 126
      %v508 = vpop.permute.xlu0 %507
      %509 = vrot.lane.b32.xlu0 %v475, 126
      %v510 = vpop.permute.xlu0 %509
      %511 = vrot.lane.b32.xlu0 %v476, 126
      %v512 = vpop.permute.xlu0 %511
      %513 = vrot.lane.b32.xlu0 %v477, 126
      %v514 = vpop.permute.xlu0 %513
      %515 = vrot.lane.b32.xlu0 %v478, 126
      %v516 = vpop.permute.xlu0 %515
      %517 = vrot.lane.b32.xlu0 %v479, 126
      %v518 = vpop.permute.xlu0 %517
      %519 = vrot.lane.b32.xlu0 %v480, 126
      %v520 = vpop.permute.xlu0 %519
      %vm521 = vcmask 1031168
      %v522 = vsel %vm521, %v482, %v484
      %v523 = vsel %vm521, %v484, %v486
      %v524 = vsel %vm521, %v486, %v488
      %v525 = vsel %vm521, %v488, %v490
      %v526 = vsel %vm521, %v490, %v492
      %v527 = vsel %vm521, %v492, %v494
      %v528 = vsel %vm521, %v494, %v496
      %v529 = vsel %vm521, %v496, %v498
      %v530 = vsel %vm521, %v498, %v500
      %v531 = vsel %vm521, %v502, %v504
      %v532 = vsel %vm521, %v504, %v506
      %v533 = vsel %vm521, %v506, %v508
      %v534 = vsel %vm521, %v508, %v510
      %v535 = vsel %vm521, %v510, %v512
      %v536 = vsel %vm521, %v512, %v514
      %v537 = vsel %vm521, %v514, %v516
      %v538 = vsel %vm521, %v516, %v518
      %v539 = vsel %vm521, %v518, %v520
      %549 = vrot.lane.b32.xlu0 %v373, 94
      %v550 = vpop.permute.xlu0 %549
      %551 = vrot.lane.b32.xlu0 %v374, 94
      %v552 = vpop.permute.xlu0 %551
      %553 = vrot.lane.b32.xlu0 %v375, 94
      %v554 = vpop.permute.xlu0 %553
      %555 = vrot.lane.b32.xlu0 %v376, 94
      %v556 = vpop.permute.xlu0 %555
      %557 = vrot.lane.b32.xlu0 %v377, 94
      %v558 = vpop.permute.xlu0 %557
      %559 = vrot.lane.b32.xlu0 %v378, 94
      %v560 = vpop.permute.xlu0 %559
      %561 = vrot.lane.b32.xlu0 %v379, 94
      %v562 = vpop.permute.xlu0 %561
      %563 = vrot.lane.b32.xlu0 %v380, 94
      %v564 = vpop.permute.xlu0 %563
      %565 = vrot.lane.b32.xlu0 %v381, 94
      %v566 = vpop.permute.xlu0 %565
      %567 = vrot.lane.b32.xlu0 %v382, 94
      %v568 = vpop.permute.xlu0 %567
      %569 = vrot.lane.b32.xlu0 %v383, 94
      %v570 = vpop.permute.xlu0 %569
      %571 = vrot.lane.b32.xlu0 %v384, 94
      %v572 = vpop.permute.xlu0 %571
      %573 = vrot.lane.b32.xlu0 %v385, 94
      %v574 = vpop.permute.xlu0 %573
      %575 = vrot.lane.b32.xlu0 %v386, 94
      %v576 = vpop.permute.xlu0 %575
      %577 = vrot.lane.b32.xlu0 %v387, 94
      %v578 = vpop.permute.xlu0 %577
      %579 = vrot.lane.b32.xlu0 %v388, 94
      %v580 = vpop.permute.xlu0 %579
      %581 = vrot.lane.b32.xlu0 %v389, 94
      %v582 = vpop.permute.xlu0 %581
      %583 = vrot.lane.b32.xlu0 %v390, 94
      %v584 = vpop.permute.xlu0 %583
      %585 = vrot.lane.b32.xlu0 %v391, 94
      %v586 = vpop.permute.xlu0 %585
      %587 = vrot.lane.b32.xlu0 %v392, 94
      %v588 = vpop.permute.xlu0 %587
      %vm589 = vcmask 769024
      %v590 = vsel %vm589, %v550, %v552
      %v591 = vsel %vm589, %v552, %v554
      %v592 = vsel %vm589, %v554, %v556
      %v593 = vsel %vm589, %v556, %v558
      %v594 = vsel %vm589, %v558, %v560
      %v595 = vsel %vm589, %v560, %v562
      %v596 = vsel %vm589, %v562, %v564
      %v597 = vsel %vm589, %v564, %v566
      %v598 = vsel %vm589, %v566, %v568
      %v599 = vsel %vm589, %v570, %v572
      %v600 = vsel %vm589, %v572, %v574
      %v601 = vsel %vm589, %v574, %v576
      %v602 = vsel %vm589, %v576, %v578
      %v603 = vsel %vm589, %v578, %v580
      %v604 = vsel %vm589, %v580, %v582
      %v605 = vsel %vm589, %v582, %v584
      %v606 = vsel %vm589, %v584, %v586
      %v607 = vsel %vm589, %v586, %v588
      %617 = vrot.lane.b32.xlu0 %v461, 93
      %v618 = vpop.permute.xlu0 %617
      %619 = vrot.lane.b32.xlu0 %v462, 93
      %v620 = vpop.permute.xlu0 %619
      %621 = vrot.lane.b32.xlu0 %v463, 93
      %v622 = vpop.permute.xlu0 %621
      %623 = vrot.lane.b32.xlu0 %v464, 93
      %v624 = vpop.permute.xlu0 %623
      %625 = vrot.lane.b32.xlu0 %v465, 93
      %v626 = vpop.permute.xlu0 %625
      %627 = vrot.lane.b32.xlu0 %v466, 93
      %v628 = vpop.permute.xlu0 %627
      %629 = vrot.lane.b32.xlu0 %v467, 93
      %v630 = vpop.permute.xlu0 %629
      %631 = vrot.lane.b32.xlu0 %v468, 93
      %v632 = vpop.permute.xlu0 %631
      %633 = vrot.lane.b32.xlu0 %v469, 93
      %v634 = vpop.permute.xlu0 %633
      %635 = vrot.lane.b32.xlu0 %v470, 93
      %v636 = vpop.permute.xlu0 %635
      %637 = vrot.lane.b32.xlu0 %v471, 93
      %v638 = vpop.permute.xlu0 %637
      %639 = vrot.lane.b32.xlu0 %v472, 93
      %v640 = vpop.permute.xlu0 %639
      %641 = vrot.lane.b32.xlu0 %v473, 93
      %v642 = vpop.permute.xlu0 %641
      %643 = vrot.lane.b32.xlu0 %v474, 93
      %v644 = vpop.permute.xlu0 %643
      %645 = vrot.lane.b32.xlu0 %v475, 93
      %v646 = vpop.permute.xlu0 %645
      %647 = vrot.lane.b32.xlu0 %v476, 93
      %v648 = vpop.permute.xlu0 %647
      %649 = vrot.lane.b32.xlu0 %v477, 93
      %v650 = vpop.permute.xlu0 %649
      %651 = vrot.lane.b32.xlu0 %v478, 93
      %v652 = vpop.permute.xlu0 %651
      %653 = vrot.lane.b32.xlu0 %v479, 93
      %v654 = vpop.permute.xlu0 %653
      %655 = vrot.lane.b32.xlu0 %v480, 93
      %v656 = vpop.permute.xlu0 %655
      %vm657 = vcmask 760832
      %v658 = vsel %vm657, %v618, %v620
      %v659 = vsel %vm657, %v620, %v622
      %v660 = vsel %vm657, %v622, %v624
      %v661 = vsel %vm657, %v624, %v626
      %v662 = vsel %vm657, %v626, %v628
      %v663 = vsel %vm657, %v628, %v630
      %v664 = vsel %vm657, %v630, %v632
      %v665 = vsel %vm657, %v632, %v634
      %v666 = vsel %vm657, %v634, %v636
      %v667 = vsel %vm657, %v638, %v640
      %v668 = vsel %vm657, %v640, %v642
      %v669 = vsel %vm657, %v642, %v644
      %v670 = vsel %vm657, %v644, %v646
      %v671 = vsel %vm657, %v646, %v648
      %v672 = vsel %vm657, %v648, %v650
      %v673 = vsel %vm657, %v650, %v652
      %v674 = vsel %vm657, %v652, %v654
      %v675 = vsel %vm657, %v654, %v656
      %685 = vrot.lane.b32.xlu0 %v373, 92
      %v686 = vpop.permute.xlu0 %685
      %687 = vrot.lane.b32.xlu0 %v374, 92
      %v688 = vpop.permute.xlu0 %687
      %689 = vrot.lane.b32.xlu0 %v375, 92
      %v690 = vpop.permute.xlu0 %689
      %691 = vrot.lane.b32.xlu0 %v376, 92
      %v692 = vpop.permute.xlu0 %691
      %693 = vrot.lane.b32.xlu0 %v377, 92
      %v694 = vpop.permute.xlu0 %693
      %695 = vrot.lane.b32.xlu0 %v378, 92
      %v696 = vpop.permute.xlu0 %695
      %697 = vrot.lane.b32.xlu0 %v379, 92
      %v698 = vpop.permute.xlu0 %697
      %699 = vrot.lane.b32.xlu0 %v380, 92
      %v700 = vpop.permute.xlu0 %699
      %701 = vrot.lane.b32.xlu0 %v381, 92
      %v702 = vpop.permute.xlu0 %701
      %703 = vrot.lane.b32.xlu0 %v382, 92
      %v704 = vpop.permute.xlu0 %703
      %705 = vrot.lane.b32.xlu0 %v383, 92
      %v706 = vpop.permute.xlu0 %705
      %707 = vrot.lane.b32.xlu0 %v384, 92
      %v708 = vpop.permute.xlu0 %707
      %709 = vrot.lane.b32.xlu0 %v385, 92
      %v710 = vpop.permute.xlu0 %709
      %711 = vrot.lane.b32.xlu0 %v386, 92
      %v712 = vpop.permute.xlu0 %711
      %713 = vrot.lane.b32.xlu0 %v387, 92
      %v714 = vpop.permute.xlu0 %713
      %715 = vrot.lane.b32.xlu0 %v388, 92
      %v716 = vpop.permute.xlu0 %715
      %717 = vrot.lane.b32.xlu0 %v389, 92
      %v718 = vpop.permute.xlu0 %717
      %719 = vrot.lane.b32.xlu0 %v390, 92
      %v720 = vpop.permute.xlu0 %719
      %721 = vrot.lane.b32.xlu0 %v391, 92
      %v722 = vpop.permute.xlu0 %721
      %723 = vrot.lane.b32.xlu0 %v392, 92
      %v724 = vpop.permute.xlu0 %723
      %vm725 = vcmask 752640
      %v726 = vsel %vm725, %v686, %v688
      %v727 = vsel %vm725, %v688, %v690
      %v728 = vsel %vm725, %v690, %v692
      %v729 = vsel %vm725, %v692, %v694
      %v730 = vsel %vm725, %v694, %v696
      %v731 = vsel %vm725, %v696, %v698
      %v732 = vsel %vm725, %v698, %v700
      %v733 = vsel %vm725, %v700, %v702
      %v734 = vsel %vm725, %v702, %v704
      %v735 = vsel %vm725, %v706, %v708
      %v736 = vsel %vm725, %v708, %v710
      %v737 = vsel %vm725, %v710, %v712
      %v738 = vsel %vm725, %v712, %v714
      %v739 = vsel %vm725, %v714, %v716
      %v740 = vsel %vm725, %v716, %v718
      %v741 = vsel %vm725, %v718, %v720
      %v742 = vsel %vm725, %v720, %v722
      %v743 = vsel %vm725, %v722, %v724
      %753 = vrot.lane.b32.xlu0 %v461, 60
      %v754 = vpop.permute.xlu0 %753
      %755 = vrot.lane.b32.xlu0 %v462, 60
      %v756 = vpop.permute.xlu0 %755
      %757 = vrot.lane.b32.xlu0 %v463, 60
      %v758 = vpop.permute.xlu0 %757
      %759 = vrot.lane.b32.xlu0 %v464, 60
      %v760 = vpop.permute.xlu0 %759
      %761 = vrot.lane.b32.xlu0 %v465, 60
      %v762 = vpop.permute.xlu0 %761
      %763 = vrot.lane.b32.xlu0 %v466, 60
      %v764 = vpop.permute.xlu0 %763
      %765 = vrot.lane.b32.xlu0 %v467, 60
      %v766 = vpop.permute.xlu0 %765
      %767 = vrot.lane.b32.xlu0 %v468, 60
      %v768 = vpop.permute.xlu0 %767
      %769 = vrot.lane.b32.xlu0 %v469, 60
      %v770 = vpop.permute.xlu0 %769
      %771 = vrot.lane.b32.xlu0 %v470, 60
      %v772 = vpop.permute.xlu0 %771
      %773 = vrot.lane.b32.xlu0 %v471, 60
      %v774 = vpop.permute.xlu0 %773
      %775 = vrot.lane.b32.xlu0 %v472, 60
      %v776 = vpop.permute.xlu0 %775
      %777 = vrot.lane.b32.xlu0 %v473, 60
      %v778 = vpop.permute.xlu0 %777
      %779 = vrot.lane.b32.xlu0 %v474, 60
      %v780 = vpop.permute.xlu0 %779
      %781 = vrot.lane.b32.xlu0 %v475, 60
      %v782 = vpop.permute.xlu0 %781
      %783 = vrot.lane.b32.xlu0 %v476, 60
      %v784 = vpop.permute.xlu0 %783
      %785 = vrot.lane.b32.xlu0 %v477, 60
      %v786 = vpop.permute.xlu0 %785
      %787 = vrot.lane.b32.xlu0 %v478, 60
      %v788 = vpop.permute.xlu0 %787
      %789 = vrot.lane.b32.xlu0 %v479, 60
      %v790 = vpop.permute.xlu0 %789
      %791 = vrot.lane.b32.xlu0 %v480, 60
      %v792 = vpop.permute.xlu0 %791
      %vm793 = vcmask 490496
      %v794 = vsel %vm793, %v754, %v756
      %v795 = vsel %vm793, %v756, %v758
      %v796 = vsel %vm793, %v758, %v760
      %v797 = vsel %vm793, %v760, %v762
      %v798 = vsel %vm793, %v762, %v764
      %v799 = vsel %vm793, %v764, %v766
      %v800 = vsel %vm793, %v766, %v768
      %v801 = vsel %vm793, %v768, %v770
      %v802 = vsel %vm793, %v770, %v772
      %v803 = vsel %vm793, %v774, %v776
      %v804 = vsel %vm793, %v776, %v778
      %v805 = vsel %vm793, %v778, %v780
      %v806 = vsel %vm793, %v780, %v782
      %v807 = vsel %vm793, %v782, %v784
      %v808 = vsel %vm793, %v784, %v786
      %v809 = vsel %vm793, %v786, %v788
      %v810 = vsel %vm793, %v788, %v790
      %v811 = vsel %vm793, %v790, %v792
      %821 = vrot.lane.b32.xlu0 %v373, 59
      %v822 = vpop.permute.xlu0 %821
      %823 = vrot.lane.b32.xlu0 %v374, 59
      %v824 = vpop.permute.xlu0 %823
      %825 = vrot.lane.b32.xlu0 %v375, 59
      %v826 = vpop.permute.xlu0 %825
      %827 = vrot.lane.b32.xlu0 %v376, 59
      %v828 = vpop.permute.xlu0 %827
      %829 = vrot.lane.b32.xlu0 %v377, 59
      %v830 = vpop.permute.xlu0 %829
      %831 = vrot.lane.b32.xlu0 %v378, 59
      %v832 = vpop.permute.xlu0 %831
      %833 = vrot.lane.b32.xlu0 %v379, 59
      %v834 = vpop.permute.xlu0 %833
      %835 = vrot.lane.b32.xlu0 %v380, 59
      %v836 = vpop.permute.xlu0 %835
      %837 = vrot.lane.b32.xlu0 %v381, 59
      %v838 = vpop.permute.xlu0 %837
      %839 = vrot.lane.b32.xlu0 %v382, 59
      %v840 = vpop.permute.xlu0 %839
      %841 = vrot.lane.b32.xlu0 %v383, 59
      %v842 = vpop.permute.xlu0 %841
      %843 = vrot.lane.b32.xlu0 %v384, 59
      %v844 = vpop.permute.xlu0 %843
      %845 = vrot.lane.b32.xlu0 %v385, 59
      %v846 = vpop.permute.xlu0 %845
      %847 = vrot.lane.b32.xlu0 %v386, 59
      %v848 = vpop.permute.xlu0 %847
      %849 = vrot.lane.b32.xlu0 %v387, 59
      %v850 = vpop.permute.xlu0 %849
      %851 = vrot.lane.b32.xlu0 %v388, 59
      %v852 = vpop.permute.xlu0 %851
      %853 = vrot.lane.b32.xlu0 %v389, 59
      %v854 = vpop.permute.xlu0 %853
      %855 = vrot.lane.b32.xlu0 %v390, 59
      %v856 = vpop.permute.xlu0 %855
      %857 = vrot.lane.b32.xlu0 %v391, 59
      %v858 = vpop.permute.xlu0 %857
      %859 = vrot.lane.b32.xlu0 %v392, 59
      %v860 = vpop.permute.xlu0 %859
      %vm861 = vcmask 482304
      %v862 = vsel %vm861, %v822, %v824
      %v863 = vsel %vm861, %v824, %v826
      %v864 = vsel %vm861, %v826, %v828
      %v865 = vsel %vm861, %v828, %v830
      %v866 = vsel %vm861, %v830, %v832
      %v867 = vsel %vm861, %v832, %v834
      %v868 = vsel %vm861, %v834, %v836
      %v869 = vsel %vm861, %v836, %v838
      %v870 = vsel %vm861, %v838, %v840
      %v871 = vsel %vm861, %v842, %v844
      %v872 = vsel %vm861, %v844, %v846
      %v873 = vsel %vm861, %v846, %v848
      %v874 = vsel %vm861, %v848, %v850
      %v875 = vsel %vm861, %v850, %v852
      %v876 = vsel %vm861, %v852, %v854
      %v877 = vsel %vm861, %v854, %v856
      %v878 = vsel %vm861, %v856, %v858
      %v879 = vsel %vm861, %v858, %v860
      %889 = vrot.lane.b32.xlu0 %v461, 58
      %v890 = vpop.permute.xlu0 %889
      %891 = vrot.lane.b32.xlu0 %v462, 58
      %v892 = vpop.permute.xlu0 %891
      %893 = vrot.lane.b32.xlu0 %v463, 58
      %v894 = vpop.permute.xlu0 %893
      %895 = vrot.lane.b32.xlu0 %v464, 58
      %v896 = vpop.permute.xlu0 %895
      %897 = vrot.lane.b32.xlu0 %v465, 58
      %v898 = vpop.permute.xlu0 %897
      %899 = vrot.lane.b32.xlu0 %v466, 58
      %v900 = vpop.permute.xlu0 %899
      %901 = vrot.lane.b32.xlu0 %v467, 58
      %v902 = vpop.permute.xlu0 %901
      %903 = vrot.lane.b32.xlu0 %v468, 58
      %v904 = vpop.permute.xlu0 %903
      %905 = vrot.lane.b32.xlu0 %v469, 58
      %v906 = vpop.permute.xlu0 %905
      %907 = vrot.lane.b32.xlu0 %v470, 58
      %v908 = vpop.permute.xlu0 %907
      %909 = vrot.lane.b32.xlu0 %v471, 58
      %v910 = vpop.permute.xlu0 %909
      %911 = vrot.lane.b32.xlu0 %v472, 58
      %v912 = vpop.permute.xlu0 %911
      %913 = vrot.lane.b32.xlu0 %v473, 58
      %v914 = vpop.permute.xlu0 %913
      %915 = vrot.lane.b32.xlu0 %v474, 58
      %v916 = vpop.permute.xlu0 %915
      %917 = vrot.lane.b32.xlu0 %v475, 58
      %v918 = vpop.permute.xlu0 %917
      %919 = vrot.lane.b32.xlu0 %v476, 58
      %v920 = vpop.permute.xlu0 %919
      %921 = vrot.lane.b32.xlu0 %v477, 58
      %v922 = vpop.permute.xlu0 %921
      %923 = vrot.lane.b32.xlu0 %v478, 58
      %v924 = vpop.permute.xlu0 %923
      %925 = vrot.lane.b32.xlu0 %v479, 58
      %v926 = vpop.permute.xlu0 %925
      %927 = vrot.lane.b32.xlu0 %v480, 58
      %v928 = vpop.permute.xlu0 %927
      %vm929 = vcmask 474112
      %v930 = vsel %vm929, %v890, %v892
      %v931 = vsel %vm929, %v892, %v894
      %v932 = vsel %vm929, %v894, %v896
      %v933 = vsel %vm929, %v896, %v898
      %v934 = vsel %vm929, %v898, %v900
      %v935 = vsel %vm929, %v900, %v902
      %v936 = vsel %vm929, %v902, %v904
      %v937 = vsel %vm929, %v904, %v906
      %v938 = vsel %vm929, %v906, %v908
      %v939 = vsel %vm929, %v910, %v912
      %v940 = vsel %vm929, %v912, %v914
      %v941 = vsel %vm929, %v914, %v916
      %v942 = vsel %vm929, %v916, %v918
      %v943 = vsel %vm929, %v918, %v920
      %v944 = vsel %vm929, %v920, %v922
      %v945 = vsel %vm929, %v922, %v924
      %v946 = vsel %vm929, %v924, %v926
      %v947 = vsel %vm929, %v926, %v928
      %vm957 = vcmask 1043456
      %v960 = vsel %vm957, %v310, %v434
      %v964 = vsel %vm957, %v311, %v435
      %v968 = vsel %vm957, %v312, %v436
      %v972 = vsel %vm957, %v313, %v437
      %v976 = vsel %vm957, %v314, %v438
      %v980 = vsel %vm957, %v315, %v439
      %v984 = vsel %vm957, %v316, %v440
      %v988 = vsel %vm957, %v317, %v441
      %v992 = vsel %vm957, %v318, %v442
      %v996 = vsel %vm957, %v531, %v590
      %v1000 = vsel %vm957, %v532, %v591
      %v1004 = vsel %vm957, %v533, %v592
      %v1008 = vsel %vm957, %v534, %v593
      %v1012 = vsel %vm957, %v535, %v594
      %v1016 = vsel %vm957, %v536, %v595
      %v1020 = vsel %vm957, %v537, %v596
      %v1024 = vsel %vm957, %v538, %v597
      %v1028 = vsel %vm957, %v539, %v598
      %v1032 = vsel %vm957, %v667, %v726
      %v1036 = vsel %vm957, %v668, %v727
      %v1040 = vsel %vm957, %v669, %v728
      %v1044 = vsel %vm957, %v670, %v729
      %v1048 = vsel %vm957, %v671, %v730
      %v1052 = vsel %vm957, %v672, %v731
      %v1056 = vsel %vm957, %v673, %v732
      %v1060 = vsel %vm957, %v674, %v733
      %v1064 = vsel %vm957, %v675, %v734
      %v1068 = vsel %vm957, %v803, %v862
      %v1072 = vsel %vm957, %v804, %v863
      %v1076 = vsel %vm957, %v805, %v864
      %v1080 = vsel %vm957, %v806, %v865
      %v1084 = vsel %vm957, %v807, %v866
      %v1088 = vsel %vm957, %v808, %v867
      %v1092 = vsel %vm957, %v809, %v868
      %v1096 = vsel %vm957, %v810, %v869
      %v1100 = vsel %vm957, %v811, %v870
      %v1102 = vld [vmem:[%s1] sm:$0xff]
      %v1104 = vunpack.c.l.b16 %v1102
      %v1105 = vunpack.c.h.b16 %v1102
      %v1106 = vpack.c.b16 %v1104, %v1104
      %v1107 = vpack.c.b16 %v1105, %v1105
      %vm1109 = vcmask 719872
      %v1111 = vsel %vm1109, %v1107, 0
      %v1114 = vsel %vm957, %v939, 0
      %v1117 = vsel %vm957, %v940, 0
      %v1120 = vsel %vm957, %v941, 0
      %v1123 = vsel %vm957, %v942, 0
      %v1126 = vsel %vm957, %v943, 0
      %v1129 = vsel %vm957, %v944, 0
      %v1132 = vsel %vm957, %v945, 0
      %v1135 = vsel %vm957, %v946, 0
      %v1138 = vsel %vm957, %v947, 0
      %1140 = vmatpush.bf16.msra.mxu0 %v1032
      %1141 = vmatpush.bf16.msra.mxu0 %v658
      %1142 = vmatpush.bf16.msra.mxu0 %v599
      %1143 = vmatpush.bf16.msra.mxu0 %v996
      %1144 = vmatpush.bf16.msra.mxu0 %v522
      %1145 = vmatpush.bf16.msra.mxu0 %v443
      %1146 = vmatpush.bf16.msra.mxu0 %v960
      %1147 = vmatpush.bf16.msra.mxu0 %v301
      %1148 = vmatmul.bf16.gmra.mxu0 %v1106
      %v1149 = vpop.f32.mrf.mxu0
      %v1150 = vadd.f32 0.0, %v1149
      %v1151 = vpop.f32.mrf.mxu0
      %1152 = vdwg.mxu0
      %1153 = vmatpush.bf16.msra.mxu0 0
      %1154 = vmatpush.bf16.msra.mxu0 0
      %1155 = vmatpush.bf16.msra.mxu0 %v1114
      %1156 = vmatpush.bf16.msra.mxu0 %v930
      %1157 = vmatpush.bf16.msra.mxu0 %v871
      %1158 = vmatpush.bf16.msra.mxu0 %v1068
      %1159 = vmatpush.bf16.msra.mxu0 %v794
      %1160 = vmatpush.bf16.msra.mxu0 %v735
      %1161 = vmatmul.bf16.gmra.mxu0 %v1111
      %v1162 = vpop.f32.mrf.mxu0
      %v1163 = vadd.f32 %v1150, %v1162
      %v1164 = vpop.f32.mrf.mxu0
      %1165 = vdwg.mxu0
      %1166 = vmatpush.bf16.msra.mxu0 %v1036
      %1167 = vmatpush.bf16.msra.mxu0 %v659
      %1168 = vmatpush.bf16.msra.mxu0 %v600
      %1169 = vmatpush.bf16.msra.mxu0 %v1000
      %1170 = vmatpush.bf16.msra.mxu0 %v523
      %1171 = vmatpush.bf16.msra.mxu0 %v444
      %1172 = vmatpush.bf16.msra.mxu0 %v964
      %1173 = vmatpush.bf16.msra.mxu0 %v302
      %1174 = vmatmul.bf16.gmra.mxu0 %v1106
      %v1175 = vpop.f32.mrf.mxu0
      %v1176 = vadd.f32 0.0, %v1175
      %v1177 = vpop.f32.mrf.mxu0
      %1178 = vdwg.mxu0
      %1179 = vmatpush.bf16.msra.mxu0 0
      %1180 = vmatpush.bf16.msra.mxu0 0
      %1181 = vmatpush.bf16.msra.mxu0 %v1117
      %1182 = vmatpush.bf16.msra.mxu0 %v931
      %1183 = vmatpush.bf16.msra.mxu0 %v872
      %1184 = vmatpush.bf16.msra.mxu0 %v1072
      %1185 = vmatpush.bf16.msra.mxu0 %v795
      %1186 = vmatpush.bf16.msra.mxu0 %v736
      %1187 = vmatmul.bf16.gmra.mxu0 %v1111
      %v1188 = vpop.f32.mrf.mxu0
      %v1189 = vadd.f32 %v1176, %v1188
      %v1190 = vpop.f32.mrf.mxu0
      %1191 = vdwg.mxu0
      %1192 = vmatpush.bf16.msra.mxu0 %v1040
      %1193 = vmatpush.bf16.msra.mxu0 %v660
      %1194 = vmatpush.bf16.msra.mxu0 %v601
      %1195 = vmatpush.bf16.msra.mxu0 %v1004
      %1196 = vmatpush.bf16.msra.mxu0 %v524
      %1197 = vmatpush.bf16.msra.mxu0 %v445
      %1198 = vmatpush.bf16.msra.mxu0 %v968
      %1199 = vmatpush.bf16.msra.mxu0 %v303
      %1200 = vmatmul.bf16.gmra.mxu0 %v1106
      %v1201 = vpop.f32.mrf.mxu0
      %v1202 = vadd.f32 0.0, %v1201
      %v1203 = vpop.f32.mrf.mxu0
      %1204 = vdwg.mxu0
      %1205 = vmatpush.bf16.msra.mxu0 0
      %1206 = vmatpush.bf16.msra.mxu0 0
      %1207 = vmatpush.bf16.msra.mxu0 %v1120
      %1208 = vmatpush.bf16.msra.mxu0 %v932
      %1209 = vmatpush.bf16.msra.mxu0 %v873
      %1210 = vmatpush.bf16.msra.mxu0 %v1076
      %1211 = vmatpush.bf16.msra.mxu0 %v796
      %1212 = vmatpush.bf16.msra.mxu0 %v737
      %1213 = vmatmul.bf16.gmra.mxu0 %v1111
      %v1214 = vpop.f32.mrf.mxu0
      %v1215 = vadd.f32 %v1202, %v1214
      %v1216 = vpop.f32.mrf.mxu0
      %1217 = vdwg.mxu0
      %1218 = vmatpush.bf16.msra.mxu0 %v1044
      %1219 = vmatpush.bf16.msra.mxu0 %v661
      %1220 = vmatpush.bf16.msra.mxu0 %v602
      %1221 = vmatpush.bf16.msra.mxu0 %v1008
      %1222 = vmatpush.bf16.msra.mxu0 %v525
      %1223 = vmatpush.bf16.msra.mxu0 %v446
      %1224 = vmatpush.bf16.msra.mxu0 %v972
      %1225 = vmatpush.bf16.msra.mxu0 %v304
      %1226 = vmatmul.bf16.gmra.mxu0 %v1106
      %v1227 = vpop.f32.mrf.mxu0
      %v1228 = vadd.f32 0.0, %v1227
      %v1229 = vpop.f32.mrf.mxu0
      %1230 = vdwg.mxu0
      %1231 = vmatpush.bf16.msra.mxu0 0
      %1232 = vmatpush.bf16.msra.mxu0 0
      %1233 = vmatpush.bf16.msra.mxu0 %v1123
      %1234 = vmatpush.bf16.msra.mxu0 %v933
      %1235 = vmatpush.bf16.msra.mxu0 %v874
      %1236 = vmatpush.bf16.msra.mxu0 %v1080
      %1237 = vmatpush.bf16.msra.mxu0 %v797
      %1238 = vmatpush.bf16.msra.mxu0 %v738
      %1239 = vmatmul.bf16.gmra.mxu0 %v1111
      %v1240 = vpop.f32.mrf.mxu0
      %v1241 = vadd.f32 %v1228, %v1240
      %v1242 = vpop.f32.mrf.mxu0
      %1243 = vdwg.mxu0
      %1244 = vmatpush.bf16.msra.mxu0 %v1048
      %1245 = vmatpush.bf16.msra.mxu0 %v662
      %1246 = vmatpush.bf16.msra.mxu0 %v603
      %1247 = vmatpush.bf16.msra.mxu0 %v1012
      %1248 = vmatpush.bf16.msra.mxu0 %v526
      %1249 = vmatpush.bf16.msra.mxu0 %v447
      %1250 = vmatpush.bf16.msra.mxu0 %v976
      %1251 = vmatpush.bf16.msra.mxu0 %v305
      %1252 = vmatmul.bf16.gmra.mxu0 %v1106
      %v1253 = vpop.f32.mrf.mxu0
      %v1254 = vadd.f32 0.0, %v1253
      %v1255 = vpop.f32.mrf.mxu0
      %1256 = vdwg.mxu0
      %1257 = vmatpush.bf16.msra.mxu0 0
      %1258 = vmatpush.bf16.msra.mxu0 0
      %1259 = vmatpush.bf16.msra.mxu0 %v1126
      %1260 = vmatpush.bf16.msra.mxu0 %v934
      %1261 = vmatpush.bf16.msra.mxu0 %v875
      %1262 = vmatpush.bf16.msra.mxu0 %v1084
      %1263 = vmatpush.bf16.msra.mxu0 %v798
      %1264 = vmatpush.bf16.msra.mxu0 %v739
      %1265 = vmatmul.bf16.gmra.mxu0 %v1111
      %v1266 = vpop.f32.mrf.mxu0
      %v1267 = vadd.f32 %v1254, %v1266
      %v1268 = vpop.f32.mrf.mxu0
      %1269 = vdwg.mxu0
      %1270 = vmatpush.bf16.msra.mxu0 %v1052
      %1271 = vmatpush.bf16.msra.mxu0 %v663
      %1272 = vmatpush.bf16.msra.mxu0 %v604
      %1273 = vmatpush.bf16.msra.mxu0 %v1016
      %1274 = vmatpush.bf16.msra.mxu0 %v527
      %1275 = vmatpush.bf16.msra.mxu0 %v448
      %1276 = vmatpush.bf16.msra.mxu0 %v980
      %1277 = vmatpush.bf16.msra.mxu0 %v306
      %1278 = vmatmul.bf16.gmra.mxu0 %v1106
      %v1279 = vpop.f32.mrf.mxu0
      %v1280 = vadd.f32 0.0, %v1279
      %v1281 = vpop.f32.mrf.mxu0
      %1282 = vdwg.mxu0
      %1283 = vmatpush.bf16.msra.mxu0 0
      %1284 = vmatpush.bf16.msra.mxu0 0
      %1285 = vmatpush.bf16.msra.mxu0 %v1129
      %1286 = vmatpush.bf16.msra.mxu0 %v935
      %1287 = vmatpush.bf16.msra.mxu0 %v876
      %1288 = vmatpush.bf16.msra.mxu0 %v1088
      %1289 = vmatpush.bf16.msra.mxu0 %v799
      %1290 = vmatpush.bf16.msra.mxu0 %v740
      %1291 = vmatmul.bf16.gmra.mxu0 %v1111
      %v1292 = vpop.f32.mrf.mxu0
      %v1293 = vadd.f32 %v1280, %v1292
      %v1294 = vpop.f32.mrf.mxu0
      %1295 = vdwg.mxu0
      %1296 = vmatpush.bf16.msra.mxu0 %v1056
      %1297 = vmatpush.bf16.msra.mxu0 %v664
      %1298 = vmatpush.bf16.msra.mxu0 %v605
      %1299 = vmatpush.bf16.msra.mxu0 %v1020
      %1300 = vmatpush.bf16.msra.mxu0 %v528
      %1301 = vmatpush.bf16.msra.mxu0 %v449
      %1302 = vmatpush.bf16.msra.mxu0 %v984
      %1303 = vmatpush.bf16.msra.mxu0 %v307
      %1304 = vmatmul.bf16.gmra.mxu0 %v1106
      %v1305 = vpop.f32.mrf.mxu0
      %v1306 = vadd.f32 0.0, %v1305
      %v1307 = vpop.f32.mrf.mxu0
      %1308 = vdwg.mxu0
      %1309 = vmatpush.bf16.msra.mxu0 0
      %1310 = vmatpush.bf16.msra.mxu0 0
      %1311 = vmatpush.bf16.msra.mxu0 %v1132
      %1312 = vmatpush.bf16.msra.mxu0 %v936
      %1313 = vmatpush.bf16.msra.mxu0 %v877
      %1314 = vmatpush.bf16.msra.mxu0 %v1092
      %1315 = vmatpush.bf16.msra.mxu0 %v800
      %1316 = vmatpush.bf16.msra.mxu0 %v741
      %1317 = vmatmul.bf16.gmra.mxu0 %v1111
      %v1318 = vpop.f32.mrf.mxu0
      %v1319 = vadd.f32 %v1306, %v1318
      %v1320 = vpop.f32.mrf.mxu0
      %1321 = vdwg.mxu0
      %1322 = vmatpush.bf16.msra.mxu0 %v1060
      %1323 = vmatpush.bf16.msra.mxu0 %v665
      %1324 = vmatpush.bf16.msra.mxu0 %v606
      %1325 = vmatpush.bf16.msra.mxu0 %v1024
      %1326 = vmatpush.bf16.msra.mxu0 %v529
      %1327 = vmatpush.bf16.msra.mxu0 %v450
      %1328 = vmatpush.bf16.msra.mxu0 %v988
      %1329 = vmatpush.bf16.msra.mxu0 %v308
      %1330 = vmatmul.bf16.gmra.mxu0 %v1106
      %v1331 = vpop.f32.mrf.mxu0
      %v1332 = vadd.f32 0.0, %v1331
      %v1333 = vpop.f32.mrf.mxu0
      %1334 = vdwg.mxu0
      %1335 = vmatpush.bf16.msra.mxu0 0
      %1336 = vmatpush.bf16.msra.mxu0 0
      %1337 = vmatpush.bf16.msra.mxu0 %v1135
      %1338 = vmatpush.bf16.msra.mxu0 %v937
      %1339 = vmatpush.bf16.msra.mxu0 %v878
      %1340 = vmatpush.bf16.msra.mxu0 %v1096
      %1341 = vmatpush.bf16.msra.mxu0 %v801
      %1342 = vmatpush.bf16.msra.mxu0 %v742
      %1343 = vmatmul.bf16.gmra.mxu0 %v1111
      %v1344 = vpop.f32.mrf.mxu0
      %v1345 = vadd.f32 %v1332, %v1344
      %v1346 = vpop.f32.mrf.mxu0
      %1347 = vdwg.mxu0
      %1348 = vmatpush.bf16.msra.mxu0 %v1064
      %1349 = vmatpush.bf16.msra.mxu0 %v666
      %1350 = vmatpush.bf16.msra.mxu0 %v607
      %1351 = vmatpush.bf16.msra.mxu0 %v1028
      %1352 = vmatpush.bf16.msra.mxu0 %v530
      %1353 = vmatpush.bf16.msra.mxu0 %v451
      %1354 = vmatpush.bf16.msra.mxu0 %v992
      %1355 = vmatpush.bf16.msra.mxu0 %v309
      %1356 = vmatmul.bf16.gmra.mxu0 %v1106
      %v1357 = vpop.f32.mrf.mxu0
      %v1358 = vadd.f32 0.0, %v1357
      %v1359 = vpop.f32.mrf.mxu0
      %1360 = vdwg.mxu0
      %1361 = vmatpush.bf16.msra.mxu0 0
      %1362 = vmatpush.bf16.msra.mxu0 0
      %1363 = vmatpush.bf16.msra.mxu0 %v1138
      %1364 = vmatpush.bf16.msra.mxu0 %v938
      %1365 = vmatpush.bf16.msra.mxu0 %v879
      %1366 = vmatpush.bf16.msra.mxu0 %v1100
      %1367 = vmatpush.bf16.msra.mxu0 %v802
      %1368 = vmatpush.bf16.msra.mxu0 %v743
      %1369 = vmatmul.bf16.gmra.mxu0 %v1111
      %v1370 = vpop.f32.mrf.mxu0
      %v1371 = vadd.f32 %v1358, %v1370
      %v1372 = vpop.f32.mrf.mxu0
      %1373 = vdwg.mxu0
      %v1374 = vld [vmem:[%s2] sm:$0xff]
      %1376 = vset.pattern.permute.xlu0 0
      %1377 = vperm.xlu0 %1376, %v1374
      %v1378 = vpop.permute.xlu0 %1377
      %v1380 = vmul.f32 %v1163, %v1378
      %v1381 = vmul.f32 %v1189, %v1378
      %v1382 = vmul.f32 %v1215, %v1378
      %v1383 = vmul.f32 %v1241, %v1378
      %v1384 = vmul.f32 %v1267, %v1378
      %v1385 = vmul.f32 %v1293, %v1378
      %v1386 = vmul.f32 %v1319, %v1378
      %v1387 = vmul.f32 %v1345, %v1378
      %v1388 = vmul.f32 %v1371, %v1378
      %v1389 = vld [vmem:[%s3] sm:$0xff]
      %1391 = vset.pattern.permute.xlu0 0
      %1392 = vperm.xlu0 %1391, %v1389
      %v1393 = vpop.permute.xlu0 %1392
      %v1395 = vadd.f32 %v1380, %v1393
      %v1396 = vadd.f32 %v1381, %v1393
      %v1397 = vadd.f32 %v1382, %v1393
      %v1398 = vadd.f32 %v1383, %v1393
      %v1399 = vadd.f32 %v1384, %v1393
      %v1400 = vadd.f32 %v1385, %v1393
      %v1401 = vadd.f32 %v1386, %v1393
      %v1402 = vadd.f32 %v1387, %v1393
      %v1403 = vadd.f32 %v1388, %v1393
      %v1404 = vmax.f32 %v1395, 0.0
      %v1405 = vmax.f32 %v1396, 0.0
      %v1406 = vmax.f32 %v1397, 0.0
      %v1407 = vmax.f32 %v1398, 0.0
      %v1408 = vmax.f32 %v1399, 0.0
      %v1409 = vmax.f32 %v1400, 0.0
      %v1410 = vmax.f32 %v1401, 0.0
      %v1411 = vmax.f32 %v1402, 0.0
      %v1412 = vmax.f32 %v1403, 0.0
      %v1413 = vpack.c.bf16 %v1405, %v1404
      %v1414 = vpack.c.bf16 %v1407, %v1406
      %v1415 = vpack.c.bf16 %v1409, %v1408
      %v1416 = vpack.c.bf16 %v1411, %v1410
      %v1417 = vpack.c.bf16 %v1412, %v1412
      %1418 = vst [vmem:[%s226] sm:$0xff] %v1413
      %1419 = vst [vmem:[%s226 + $0x8] sm:$0xff] %v1414
      %1420 = vst [vmem:[%s226 + $0x10] sm:$0xff] %v1415
      %1421 = vst [vmem:[%s226 + $0x18] sm:$0xff] %v1416
      %1422 = vst [vmem:[%s226 + $0x20] sm:$0xf] %v1417
      %s1423 = smul.u32 9, %s20
      %p1424 = scmp.lt.s32.totalorder %s19, 1
      %s1425 = scalar_select %p1424, %s19, 1
      %p1426 = scmp.lt.s32.totalorder %s1423, 8
      %s1427 = scalar_select %p1426, %s1423, 8
      %s1428 = smul.addr %s1425, 9
      %s1429 = sadd.s32 %s1427, %s1428
      %s1430 = smul.addr %s1429, 4
      %s1431 = scalar_lea.vmem %s4, %s1430
      // Predicated region
      $region37: #{gunet_forward.9} parent=35 // pred_check
        %p1432 = pneg %p138
      $region38: #{gunet_forward.9} parent=35 // pred_check_branch
        %1434 = sbr.rel (%p1432) target = $region40
      $region39: #{gunet_forward.9} parent=35 // pred_region
        %s1435 = smul.u32 9, %s20
      $region40: #{gunet_forward.9} parent=35 // pred_fallthru
        _
    $region36: #{gunet_forward.9} parent=5 // pred_fallthru
      _
    %p1436 = scmp.le.s32.totalorder 2, %s10
    // Predicated region
    $region41: #{gunet_forward.9} parent=5 // pred_check
      %p1437 = pneg %p1436
    $region42: #{gunet_forward.9} parent=5 // pred_check_branch
      %1439 = sbr.rel (%p1437) target = $region44
    $region43: #{gunet_forward.9} parent=5 // pred_region
      %s1440 = ssub.s32 %s10, 2
      // Predicated region
      $region45: #{gunet_forward.9} parent=43 // pred_check
        %p1441 = pneg %p144
      $region46: #{gunet_forward.9} parent=43 // pred_check_branch
        %1443 = sbr.rel (%p1441) target = $region48
      $region47: #{gunet_forward.9} parent=43 // pred_region
        %s1444 = smul.u32 9, %s22
        %p1445 = scmp.lt.s32.totalorder %s21, 1
        %s1446 = scalar_select %p1445, %s21, 1
        %p1447 = scmp.lt.s32.totalorder %s1444, 8
        %s1448 = scalar_select %p1447, %s1444, 8
        %s1449 = smul.addr %s1446, 9
        %s1450 = sadd.s32 %s1448, %s1449
        %s1451 = smul.addr %s1450, 4
        %s1452 = scalar_lea.vmem %s4, %s1451
      $region48: #{gunet_forward.9} parent=43 // pred_fallthru
        _
    $region44: #{gunet_forward.9} parent=5 // pred_fallthru
      _
  $region6: #{gunet_forward.9} parent=0 // loop_footer
    %s14 = sadd.s32 1, %s10
  $region7: #{gunet_forward.9} parent=0 // loop_footer_branch
    %9 = sbr.rel target = $region3
  $region8: #{gunet_forward.9} parent=0 // loop_exit
    _

</llo_original>
